<compile_context>
chip_gen: v5e
topology: v5e:2x2
jax: 0.10.0
libtpu: 0.0.40
codegen_flags: <defaults>
</compile_context>

<pallas_src>
import math

import jax
import jax.numpy as jnp
from jax.experimental import pallas as pl
from jax.experimental.pallas import tpu as pltpu


# -----------------------------------------------------------------------------
# Kernel: angle-addition combine (no in-kernel transcendentals)
# -----------------------------------------------------------------------------

def _rope_combine_kernel(cos_a_ref, sin_a_ref, cos_b_ref, sin_b_ref,
                         cos_ref, sin_ref):
    """cos_a/sin_a : (1, 1, width)       per-tile base-angle row (grid-indexed)
       cos_b/sin_b : (tile_rows, width)  resident within-tile offset table
       cos/sin     : (tile_rows, width)  output block

       cos(a+b) = ca*cb - sa*sb ; sin(a+b) = sa*cb + ca*sb
       -> 6 VALU ops per output element; store-bound, VPU has slack.
    """
    ca = cos_a_ref[0]          # (1, width) -> sublane-broadcasts over rows
    sa = sin_a_ref[0]
    cb = cos_b_ref[...]
    sb = sin_b_ref[...]
    cos_ref[...] = (ca * cb - sa * sb).astype(cos_ref.dtype)
    sin_ref[...] = (sa * cb + ca * sb).astype(sin_ref.dtype)


# -----------------------------------------------------------------------------
# Cache builder (one pallas_call per module instance)
# -----------------------------------------------------------------------------

def _pick_tile_rows(total_rows, width, itemsize, *,
                    target_block_bytes=1_310_720,     # 1.25 MiB per output block
                    max_tile_rows=2048):
    # Footprint ~ (2 outputs x 2 buffers + 2 resident tables [+ buffers]) x block
    # <= ~8 x 1.25 MiB = 10 MiB -> safe under v5e's 16 MiB scoped default and
    # well under v7x's 64 MiB physical VMEM, while keeping blocks big enough to
    # amortize the ~0.35 us per-grid-step overhead.
    sub = max(8, 32 // itemsize)                      # f32: 8, bf16: 16, int8: 32
    rows_cap = max(sub, target_block_bytes // (width * itemsize))
    tile = min(total_rows, max_tile_rows, rows_cap)
    tile = max(sub, (tile // sub) * sub)              # dtype-aware sublane multiple
    return tile


def _semantics_candidates():
    """Prefer CORE_PARALLEL (splits the 1-D row-tile grid across v7x's two
    TensorCores); fall back to plain "parallel" if the enum is unavailable or
    the backend rejects it, so the build always compiles and runs."""
    cands = []
    core_par = getattr(pltpu, "CORE_PARALLEL", None)
    if core_par is not None:
        cands.append((core_par,))
    cands.append(("parallel",))
    return cands


def build_rope_cache(inv_freq, dim, max_pos, out_dtype=jnp.float32,
                     max_tile_rows=2048):
    """Returns (cos, sin), each (max_pos, dim) in out_dtype."""
    assert dim >= 2 and dim % 2 == 0, "RoPE head dim must be even"
    assert 1 <= max_pos <= (1 << 24), "positions carried in f32 (exact to 2^24)"
    half = dim // 2
    itemsize = jnp.dtype(out_dtype).itemsize
    inv_freq = jnp.asarray(inv_freq, jnp.float32).reshape(-1)
    assert inv_freq.shape[0] == half

    # Pack r consecutive positions per stored row so the stored last dim
    # (width = r*dim) is always a multiple of 128 -> unmasked lane-dense stores
    # for every head dim (80, 96, 32, 256, ...).
    r = 128 // math.gcd(dim, 128)
    width = r * dim

    total_rows = pl.cdiv(max_pos, r)                  # packed rows actually needed
    tile_rows = _pick_tile_rows(total_rows, width, itemsize,
                                max_tile_rows=max_tile_rows)
    num_tiles = pl.cdiv(total_rows, tile_rows)
    padded_rows = num_tiles * tile_rows               # whole tiles only (no partial blocks)

    # Per-lane frequency / position-offset pattern of one packed row.
    lane = jnp.arange(width)
    pos_off = (lane // dim).astype(jnp.float32)                   # 0..r-1
    inv_freq_row = inv_freq[(lane % dim) % half]                  # [freqs, freqs] x r

    # Angle-addition tables, built once by XLA: O(tile_rows*width + num_tiles*width)
    # transcendentals total instead of O(max_pos*dim) inside the kernel.
    t = jnp.arange(tile_rows, dtype=jnp.float32)
    b_ang = (t[:, None] * jnp.float32(r) + pos_off[None, :]) * inv_freq_row[None, :]
    cos_b = jnp.cos(b_ang)                                        # (tile_rows, width)
    sin_b = jnp.sin(b_ang)
    base = jnp.arange(num_tiles, dtype=jnp.float32) * jnp.float32(tile_rows * r)
    a_ang = base[:, None] * inv_freq_row[None, :]                 # (num_tiles, width)
    cos_a = jnp.cos(a_ang).reshape(num_tiles, 1, width)
    sin_a = jnp.sin(a_ang).reshape(num_tiles, 1, width)

    cost = pl.CostEstimate(
        flops=6 * padded_rows * width,
        transcendentals=0,
        bytes_accessed=int(2 * padded_rows * width * itemsize
                           + 2 * (tile_rows + num_tiles) * width * 4))

    out_shape = (jax.ShapeDtypeStruct((padded_rows, width), out_dtype),
                 jax.ShapeDtypeStruct((padded_rows, width), out_dtype))
    in_specs = [
        pl.BlockSpec((1, 1, width), lambda i: (i, 0, 0)),         # cos_a (per tile)
        pl.BlockSpec((1, 1, width), lambda i: (i, 0, 0)),         # sin_a (per tile)
        pl.BlockSpec((tile_rows, width), lambda i: (0, 0)),       # cos_b (resident)
        pl.BlockSpec((tile_rows, width), lambda i: (0, 0)),       # sin_b (resident)
    ]
    out_specs = (pl.BlockSpec((tile_rows, width), lambda i: (i, 0)),
                 pl.BlockSpec((tile_rows, width), lambda i: (i, 0)))

    cos_p = sin_p = None
    last_err = None
    for dim_sem in _semantics_candidates():
        try:
            cos_p, sin_p = pl.pallas_call(
                _rope_combine_kernel,
                out_shape=out_shape,
                grid=(num_tiles,),
                in_specs=in_specs,
                out_specs=out_specs,
                compiler_params=pltpu.CompilerParams(
                    dimension_semantics=dim_sem,
                    vmem_limit_bytes=32 * 1024 * 1024),
                cost_estimate=cost,
            )(cos_a, sin_a, cos_b, sin_b)
            jax.block_until_ready((cos_p, sin_p))
            break
        except Exception as e:                         # fall back to "parallel"
            last_err = e
            cos_p = sin_p = None
    if cos_p is None:
        raise last_err

    # Row k of the packed layout holds positions k*r .. k*r + r - 1 contiguously,
    # so this is a free row-major reshape; slice off the (<= one tile) padding.
    cos = cos_p.reshape(padded_rows * r, dim)[:max_pos]
    sin = sin_p.reshape(padded_rows * r, dim)[:max_pos]
    return cos, sin


# -----------------------------------------------------------------------------
# Module wrapper (matches the PyTorch RotaryEmbedding forward)
# -----------------------------------------------------------------------------

class RotaryEmbeddingPallas:
    def __init__(self, dim, max_position_embeddings=2048, base=10000,
                 theta=10000.0, cache_dtype=jnp.float32):
        self.dim = dim
        self.max_position_embeddings = max_position_embeddings
        # NOTE: like the PyTorch original, `base` is stored but unused; `theta`
        # parameterizes the frequencies.
        self.base = base
        self.theta = theta
        self.inv_freq = 1.0 / (theta ** (jnp.arange(0, dim, 2,
                                                    dtype=jnp.float32) / dim))
        # Build the full cache once (mirrors the PyTorch __init__ buffers).
        # cache_dtype=jnp.bfloat16 halves the build's HBM writeback and the
        # permanent cache footprint if downstream attention consumes bf16.
        cos, sin = build_rope_cache(self.inv_freq, dim,
                                    max_position_embeddings,
                                    out_dtype=cache_dtype)
        self.cos_cached = cos[None, None, :, :]
        self.sin_cached = sin[None, None, :, :]

    def __call__(self, x, seq_len=None):
        # x is unused for the values (matches PyTorch: only seq_len matters).
        if seq_len is None:
            seq_len = x.shape[-2]
        if seq_len > self.max_position_embeddings:
            seq_len = self.max_position_embeddings
        return (self.cos_cached[:, :, :seq_len, :],
                self.sin_cached[:, :, :seq_len, :])


# -----------------------------------------------------------------------------
# Reference + self-test
# -----------------------------------------------------------------------------

def _reference(dim, max_pos, theta, seq_len):
    inv_freq = 1.0 / (theta ** (jnp.arange(0, dim, 2, dtype=jnp.float32) / dim))
    t = jnp.arange(max_pos, dtype=jnp.float32)
    freqs = jnp.einsum("i,j->ij", t, inv_freq)
    emb = jnp.concatenate([freqs, freqs], axis=-1)
    return (jnp.cos(emb)[None, None, :seq_len, :],
            jnp.sin(emb)[None, None, :seq_len, :])


if __name__ == "__main__":
    key = jax.random.PRNGKey(0)

    # 1) Packed small-dim path, multi-tile grid: dim=32 -> r=4, width=128;
    #    16384 positions -> 4096 packed rows -> 2 row tiles of 2048.
    batch, heads, seq, dim = 2, 4, 8, 32
    max_pos = 16384
    x = jax.random.normal(key, (batch, heads, seq, dim), dtype=jnp.float32)
    rope = RotaryEmbeddingPallas(dim=dim, max_position_embeddings=max_pos,
                                 base=10000, theta=10000.0)
    cos, sin = rope(x, seq_len=seq)
    cos, sin = jax.block_until_ready((cos, sin))
    cos_ref, sin_ref = _reference(dim, max_pos, 10000.0, seq)
    assert cos.shape == (1, 1, seq, dim) and sin.shape == (1, 1, seq, dim)
    assert jnp.allclose(cos, cos_ref, atol=1e-5, rtol=1e-5)
    assert jnp.allclose(sin, sin_ref, atol=1e-5, rtol=1e-5)
    # Full-cache check (validates per-tile base angles across the grid; loose
    # atol only because f32 angle rounding at large p affects both sides).
    cos_f, sin_f = _reference(dim, max_pos, 10000.0, max_pos)
    assert jnp.allclose(rope.cos_cached, cos_f, atol=1e-2)
    assert jnp.allclose(rope.sin_cached, sin_f, atol=1e-2)

    # 2) Head dim that does not divide 128 (dim=80 -> r=8, width=640) with a
    #    max_pos not divisible by r -> exercises row padding + final slice
    #    while keeping lane-dense (unmasked) stores.
    inv80 = 1.0 / (10000.0 ** (jnp.arange(0, 80, 2, dtype=jnp.float32) / 80))
    cos80, sin80 = build_rope_cache(inv80, dim=80, max_pos=100)
    cos80, sin80 = jax.block_until_ready((cos80, sin80))
    cos80_ref, sin80_ref = _reference(80, 100, 10000.0, 100)
    assert cos80.shape == (100, 80)
    assert jnp.allclose(cos80[None, None], cos80_ref, atol=1e-4)
    assert jnp.allclose(sin80[None, None], sin80_ref, atol=1e-4)

    # 3) Large head dim (dim=256 -> r=1, width=256), uneven tile split.
    dim2, max_pos2, seq2 = 256, 2048, 17
    rope2 = RotaryEmbeddingPallas(dim=dim2, max_position_embeddings=max_pos2)
    x2 = jax.random.normal(key, (1, 1, seq2, dim2), dtype=jnp.float32)
    cos2, sin2 = rope2(x2, seq_len=seq2)
    cos2, sin2 = jax.block_until_ready((cos2, sin2))
    cos2_ref, sin2_ref = _reference(dim2, max_pos2, 10000.0, seq2)
    assert cos2.shape == (1, 1, seq2, dim2)
    assert jnp.allclose(cos2, cos2_ref, atol=1e-5, rtol=1e-5)
    assert jnp.allclose(sin2, sin2_ref, atol=1e-5, rtol=1e-5)
    cos2_f, sin2_f = _reference(dim2, max_pos2, 10000.0, max_pos2)
    assert jnp.allclose(rope2.cos_cached, cos2_f, atol=1e-2)
    assert jnp.allclose(rope2.sin_cached, sin2_f, atol=1e-2)

    # 4) bf16 cache (halves HBM writeback + persistent footprint; exercises the
    #    dtype-aware 16-row sublane rounding).
    rope3 = RotaryEmbeddingPallas(dim=64, max_position_embeddings=256,
                                  cache_dtype=jnp.bfloat16)
    cos3, sin3 = rope3(x, seq_len=seq)
    cos3, sin3 = jax.block_until_ready((cos3, sin3))
    cos3_ref, sin3_ref = _reference(64, 256, 10000.0, seq)
    assert cos3.dtype == jnp.bfloat16 and cos3.shape == (1, 1, seq, 64)
    assert jnp.allclose(cos3.astype(jnp.float32), cos3_ref, atol=2e-2)
    assert jnp.allclose(sin3.astype(jnp.float32), sin3_ref, atol=2e-2)

    print("KERNEL_OK")
</pallas_src>

<mosaic_0001>
module attributes {stable_mosaic.version = 11 : i64} {
  func.func @_rope_combine_kernel(%arg0: i32, %arg1: memref<1x1x128xf32, #tpu.memory_space<vmem>>, %arg2: memref<1x1x128xf32, #tpu.memory_space<vmem>>, %arg3: memref<2048x128xf32, #tpu.memory_space<vmem>>, %arg4: memref<2048x128xf32, #tpu.memory_space<vmem>>, %arg5: memref<2048x128xf32, #tpu.memory_space<vmem>>, %arg6: memref<2048x128xf32, #tpu.memory_space<vmem>>) attributes {dimension_semantics = [#tpu.dimension_semantics<core_parallel>], iteration_bounds = array<i64: 2>, scalar_prefetch = 0 : i64, scratch_operands = 0 : i64, tpu.core_type = #tpu.core_type<tc>, window_params = [{transform_indices = @transform_0, window_bounds = array<i64: 1, 1, 128>}, {transform_indices = @transform_1, window_bounds = array<i64: 1, 1, 128>}, {pipeline_mode = #tpu.pipeline_mode<synchronous>, transform_indices = @transform_2, window_bounds = array<i64: 2048, 128>}, {pipeline_mode = #tpu.pipeline_mode<synchronous>, transform_indices = @transform_3, window_bounds = array<i64: 2048, 128>}, {transform_indices = @transform_4, window_bounds = array<i64: 2048, 128>}, {transform_indices = @transform_5, window_bounds = array<i64: 2048, 128>}]} {
    %c0 = arith.constant 0 : index
    %c0_0 = arith.constant 0 : index
    %c0_1 = arith.constant 0 : index
    %0 = vector.load %arg1[%c0, %c0_0, %c0_1] : memref<1x1x128xf32, #tpu.memory_space<vmem>>, vector<1x1x128xf32>
    %1 = vector.shape_cast %0 : vector<1x1x128xf32> to vector<1x128xf32>
    %c0_2 = arith.constant 0 : index
    %c0_3 = arith.constant 0 : index
    %c0_4 = arith.constant 0 : index
    %2 = vector.load %arg2[%c0_2, %c0_3, %c0_4] : memref<1x1x128xf32, #tpu.memory_space<vmem>>, vector<1x1x128xf32>
    %3 = vector.shape_cast %2 : vector<1x1x128xf32> to vector<1x128xf32>
    %c0_5 = arith.constant 0 : index
    %c0_6 = arith.constant 0 : index
    %4 = vector.load %arg3[%c0_5, %c0_6] : memref<2048x128xf32, #tpu.memory_space<vmem>>, vector<2048x128xf32>
    %c0_7 = arith.constant 0 : index
    %c0_8 = arith.constant 0 : index
    %5 = vector.load %arg4[%c0_7, %c0_8] : memref<2048x128xf32, #tpu.memory_space<vmem>>, vector<2048x128xf32>
    %6 = vector.broadcast %1 : vector<1x128xf32> to vector<2048x128xf32>
    %7 = arith.mulf %6, %4 : vector<2048x128xf32>
    %8 = vector.broadcast %3 : vector<1x128xf32> to vector<2048x128xf32>
    %9 = arith.mulf %8, %5 : vector<2048x128xf32>
    %10 = arith.subf %7, %9 : vector<2048x128xf32>
    %c0_9 = arith.constant 0 : index
    %c0_10 = arith.constant 0 : index
    %11 = vector.load %arg5[%c0_9, %c0_10] : memref<2048x128xf32, #tpu.memory_space<vmem>>, vector<2048x128xf32>
    tpu.vector_store %arg5[%c0_9, %c0_10], %10 {strides = array<i32>} : memref<2048x128xf32, #tpu.memory_space<vmem>>, vector<2048x128xf32>,
    %12 = vector.broadcast %3 : vector<1x128xf32> to vector<2048x128xf32>
    %13 = arith.mulf %12, %4 : vector<2048x128xf32>
    %14 = vector.broadcast %1 : vector<1x128xf32> to vector<2048x128xf32>
    %15 = arith.mulf %14, %5 : vector<2048x128xf32>
    %16 = arith.addf %13, %15 : vector<2048x128xf32>
    %c0_11 = arith.constant 0 : index
    %c0_12 = arith.constant 0 : index
    %17 = vector.load %arg6[%c0_11, %c0_12] : memref<2048x128xf32, #tpu.memory_space<vmem>>, vector<2048x128xf32>
    tpu.vector_store %arg6[%c0_11, %c0_12], %16 {strides = array<i32>} : memref<2048x128xf32, #tpu.memory_space<vmem>>, vector<2048x128xf32>,
    return
  }
  func.func @transform_0(%arg0: i32) -> (i32, i32, i32) {
    %c0_i32 = arith.constant 0 : i32
    %c0_i32_0 = arith.constant 0 : i32
    %c0_i32_1 = arith.constant 0 : i32
    return %arg0, %c0_i32, %c0_i32_0 : i32, i32, i32
  }
  func.func @transform_1(%arg0: i32) -> (i32, i32, i32) {
    %c0_i32 = arith.constant 0 : i32
    %c0_i32_0 = arith.constant 0 : i32
    %c0_i32_1 = arith.constant 0 : i32
    return %arg0, %c0_i32, %c0_i32_0 : i32, i32, i32
  }
  func.func @transform_2(%arg0: i32) -> (i32, i32) {
    %c0_i32 = arith.constant 0 : i32
    %c0_i32_0 = arith.constant 0 : i32
    %c0_i32_1 = arith.constant 0 : i32
    return %c0_i32, %c0_i32_0 : i32, i32
  }
  func.func @transform_3(%arg0: i32) -> (i32, i32) {
    %c0_i32 = arith.constant 0 : i32
    %c0_i32_0 = arith.constant 0 : i32
    %c0_i32_1 = arith.constant 0 : i32
    return %c0_i32, %c0_i32_0 : i32, i32
  }
  func.func @transform_4(%arg0: i32) -> (i32, i32) {
    %c0_i32 = arith.constant 0 : i32
    %c0_i32_0 = arith.constant 0 : i32
    return %arg0, %c0_i32 : i32, i32
  }
  func.func @transform_5(%arg0: i32) -> (i32, i32) {
    %c0_i32 = arith.constant 0 : i32
    %c0_i32_0 = arith.constant 0 : i32
    return %arg0, %c0_i32 : i32, i32
  }
}

module attributes {stable_mosaic.version = 11 : i64} {
  func.func @_rope_combine_kernel(%arg0: i32, %arg1: memref<1x1x128xf32, #tpu.memory_space<vmem>>, %arg2: memref<1x1x128xf32, #tpu.memory_space<vmem>>, %arg3: memref<2048x128xf32, #tpu.memory_space<vmem>>, %arg4: memref<2048x128xf32, #tpu.memory_space<vmem>>, %arg5: memref<2048x128xf32, #tpu.memory_space<vmem>>, %arg6: memref<2048x128xf32, #tpu.memory_space<vmem>>) attributes {dimension_semantics = [#tpu.dimension_semantics<parallel>], iteration_bounds = array<i64: 2>, scalar_prefetch = 0 : i64, scratch_operands = 0 : i64, tpu.core_type = #tpu.core_type<tc>, window_params = [{transform_indices = @transform_0, window_bounds = array<i64: 1, 1, 128>}, {transform_indices = @transform_1, window_bounds = array<i64: 1, 1, 128>}, {pipeline_mode = #tpu.pipeline_mode<synchronous>, transform_indices = @transform_2, window_bounds = array<i64: 2048, 128>}, {pipeline_mode = #tpu.pipeline_mode<synchronous>, transform_indices = @transform_3, window_bounds = array<i64: 2048, 128>}, {transform_indices = @transform_4, window_bounds = array<i64: 2048, 128>}, {transform_indices = @transform_5, window_bounds = array<i64: 2048, 128>}]} {
    %c0 = arith.constant 0 : index
    %c0_0 = arith.constant 0 : index
    %c0_1 = arith.constant 0 : index
    %0 = vector.load %arg1[%c0, %c0_0, %c0_1] : memref<1x1x128xf32, #tpu.memory_space<vmem>>, vector<1x1x128xf32>
    %1 = vector.shape_cast %0 : vector<1x1x128xf32> to vector<1x128xf32>
    %c0_2 = arith.constant 0 : index
    %c0_3 = arith.constant 0 : index
    %c0_4 = arith.constant 0 : index
    %2 = vector.load %arg2[%c0_2, %c0_3, %c0_4] : memref<1x1x128xf32, #tpu.memory_space<vmem>>, vector<1x1x128xf32>
    %3 = vector.shape_cast %2 : vector<1x1x128xf32> to vector<1x128xf32>
    %c0_5 = arith.constant 0 : index
    %c0_6 = arith.constant 0 : index
    %4 = vector.load %arg3[%c0_5, %c0_6] : memref<2048x128xf32, #tpu.memory_space<vmem>>, vector<2048x128xf32>
    %c0_7 = arith.constant 0 : index
    %c0_8 = arith.constant 0 : index
    %5 = vector.load %arg4[%c0_7, %c0_8] : memref<2048x128xf32, #tpu.memory_space<vmem>>, vector<2048x128xf32>
    %6 = vector.broadcast %1 : vector<1x128xf32> to vector<2048x128xf32>
    %7 = arith.mulf %6, %4 : vector<2048x128xf32>
    %8 = vector.broadcast %3 : vector<1x128xf32> to vector<2048x128xf32>
    %9 = arith.mulf %8, %5 : vector<2048x128xf32>
    %10 = arith.subf %7, %9 : vector<2048x128xf32>
    %c0_9 = arith.constant 0 : index
    %c0_10 = arith.constant 0 : index
    %11 = vector.load %arg5[%c0_9, %c0_10] : memref<2048x128xf32, #tpu.memory_space<vmem>>, vector<2048x128xf32>
    tpu.vector_store %arg5[%c0_9, %c0_10], %10 {strides = array<i32>} : memref<2048x128xf32, #tpu.memory_space<vmem>>, vector<2048x128xf32>,
    %12 = vector.broadcast %3 : vector<1x128xf32> to vector<2048x128xf32>
    %13 = arith.mulf %12, %4 : vector<2048x128xf32>
    %14 = vector.broadcast %1 : vector<1x128xf32> to vector<2048x128xf32>
    %15 = arith.mulf %14, %5 : vector<2048x128xf32>
    %16 = arith.addf %13, %15 : vector<2048x128xf32>
    %c0_11 = arith.constant 0 : index
    %c0_12 = arith.constant 0 : index
    %17 = vector.load %arg6[%c0_11, %c0_12] : memref<2048x128xf32, #tpu.memory_space<vmem>>, vector<2048x128xf32>
    tpu.vector_store %arg6[%c0_11, %c0_12], %16 {strides = array<i32>} : memref<2048x128xf32, #tpu.memory_space<vmem>>, vector<2048x128xf32>,
    return
  }
  func.func @transform_0(%arg0: i32) -> (i32, i32, i32) {
    %c0_i32 = arith.constant 0 : i32
    %c0_i32_0 = arith.constant 0 : i32
    %c0_i32_1 = arith.constant 0 : i32
    return %arg0, %c0_i32, %c0_i32_0 : i32, i32, i32
  }
  func.func @transform_1(%arg0: i32) -> (i32, i32, i32) {
    %c0_i32 = arith.constant 0 : i32
    %c0_i32_0 = arith.constant 0 : i32
    %c0_i32_1 = arith.constant 0 : i32
    return %arg0, %c0_i32, %c0_i32_0 : i32, i32, i32
  }
  func.func @transform_2(%arg0: i32) -> (i32, i32) {
    %c0_i32 = arith.constant 0 : i32
    %c0_i32_0 = arith.constant 0 : i32
    %c0_i32_1 = arith.constant 0 : i32
    return %c0_i32, %c0_i32_0 : i32, i32
  }
  func.func @transform_3(%arg0: i32) -> (i32, i32) {
    %c0_i32 = arith.constant 0 : i32
    %c0_i32_0 = arith.constant 0 : i32
    %c0_i32_1 = arith.constant 0 : i32
    return %c0_i32, %c0_i32_0 : i32, i32
  }
  func.func @transform_4(%arg0: i32) -> (i32, i32) {
    %c0_i32 = arith.constant 0 : i32
    %c0_i32_0 = arith.constant 0 : i32
    return %arg0, %c0_i32 : i32, i32
  }
  func.func @transform_5(%arg0: i32) -> (i32, i32) {
    %c0_i32 = arith.constant 0 : i32
    %c0_i32_0 = arith.constant 0 : i32
    return %arg0, %c0_i32 : i32, i32
  }
}

</mosaic_0001>

<llo_original>
// kernel: tpu_custom_call.1
$region0: #{tpu_custom_call.1}
  #allocation0 [shape = 'u32[]', space=smem, size = 0x4, offset = 0x4, fixed_abs, tag = 'smem constant byte address 0x4 - core index']
  #allocation1 [shape = 'u32[72,128]{1,0:T(1,128)}', space=vmem, size = 0x9000, scoped, tag = 'internal scratch']
  %s0 = inlined_call_operand.hbm [shape: f32[2,1,128], index: 0, kind: input, shape index: {}]
  %s1 = inlined_call_operand.hbm [shape: f32[2,1,128], index: 1, kind: input, shape index: {}]
  %s2 = inlined_call_operand.hbm [shape: f32[2048,128], index: 2, kind: input, shape index: {}]
  %s3 = inlined_call_operand.hbm [shape: f32[2048,128], index: 3, kind: input, shape index: {}]
  %s4 = inlined_call_operand.hbm [shape: f32[4096,128], index: 4, kind: output, shape index: {0}]
  %s5 = inlined_call_operand.hbm [shape: f32[4096,128], index: 5, kind: output, shape index: {1}]
  %6 = xla_tuple %s4, %s5
  %s7 = sld [smem:[#allocation0]]
  $region73: #{tpu_custom_call.1} parent=0
    _
  %s9 = ssub.s32 1, %s7
  %s10 = scalar_select 0, %s9, %s7
  $region1: #{tpu_custom_call.1} parent=0
    #allocation2 [shape = 'u8[1024]{0}', space=vmem, size = 0x400, scoped, tag = 'input window, operand 0']
    #allocation3 [shape = 's32[2]{0}', space=sflag, size = 0x8, scoped, tag = 'scoped memory for tpu_custom_call.1']
    #allocation4 [shape = 's32[2]{0}', space=sflag, size = 0x8, scoped, tag = 'scoped memory for tpu_custom_call.1']
    #allocation5 [shape = 'u8[1024]{0}', space=vmem, size = 0x400, scoped, tag = 'input window, operand 1']
    #allocation6 [shape = 's32[2]{0}', space=sflag, size = 0x8, scoped, tag = 'scoped memory for tpu_custom_call.1']
    #allocation7 [shape = 'u8[1048576]{0}', space=vmem, size = 0x100000, scoped, tag = 'input window, operand 2, single buffered']
    #allocation8 [shape = 'u8[1048576]{0}', space=vmem, size = 0x100000, scoped, tag = 'input window, operand 3, single buffered']
    #allocation9 [shape = 's32[1]{0}', space=sflag, size = 0x4, scoped, tag = 'scoped memory for tpu_custom_call.1']
    #allocation10 [shape = 'u8[2097152]{0}', space=vmem, size = 0x200000, scoped, tag = 'output window, operand 0']
    #allocation11 [shape = 'u8[2097152]{0}', space=vmem, size = 0x200000, scoped, tag = 'output window, operand 1']
    #allocation12 [shape = 's32[2]{0}', space=sflag, size = 0x8, scoped, tag = 'scoped memory for tpu_custom_call.1']
    %11 = vsyncpa [#allocation3], 0
    %s12 = scalar_lea.sflag [#allocation3], 1
    %13 = vsyncpa %s12, 0
    %14 = vsyncpa [#allocation6], 0
    %s15 = scalar_lea.sflag [#allocation6], 1
    %16 = vsyncpa %s15, 0
    %17 = vsyncpa [#allocation9], 0
    %18 = vsyncpa [#allocation4], 0
    %s19 = scalar_lea.sflag [#allocation4], 1
    %20 = vsyncpa %s19, 0
    %21 = vsyncpa [#allocation12], 0
    %s22 = scalar_lea.sflag [#allocation12], 1
    %23 = vsyncpa %s22, 0
    loop: start=0, step=1, limit=4
    $region2: #{tpu_custom_call.1} parent=1 // loop_pre_header
      _
    $region3: #{tpu_custom_call.1} parent=1 // loop_header
      %s25 = sphi 0, %s29
      %p26 = scmp.ge.s32.totalorder %s25, 4
      %s35 = sphi 0, %s37
      %s38 = sphi 0, %s35
      %s39 = sphi 0, %s38
      %s55 = sphi 0, %s39
      %s61 = sphi 0, %s63
      %s64 = sphi 0, %s61
      %s65 = sphi 0, %s64
      %s81 = sphi 0, %s65
      %s85 = sphi 0, %s85
      %s87 = sphi 0, %s85
      %s88 = sphi 0, %s87
      %s102 = sphi 0, %s88
      %s106 = sphi 0, %s106
      %s108 = sphi 0, %s106
      %s109 = sphi 0, %s108
      %s123 = sphi 0, %s109
      %s129 = sphi 0, %s131
      %s132 = sphi 0, %s129
      %s133 = sphi 0, %s132
      %s149 = sphi 0, %s133
      %s155 = sphi 0, %s157
      %s158 = sphi 0, %s155
      %s159 = sphi 0, %s158
      %s175 = sphi 0, %s159
    $region4: #{tpu_custom_call.1} parent=1 // loop_header_branch
      %28 = sbr.rel (%p26) target = $region8
    $region5: #{tpu_custom_call.1} parent=1 // loop_body
      %s30 = ssub.s32 %s25, 1
      %s31 = ssub.s32 %s25, 2
      %s32 = sadd.s32 %s25, 1
      %s33 = ssub.s32 %s25, %s32
      %p34 = scmp.eq.s32.totalorder %s33, 0
      %s36 = sadd.s32 %s35, 1
      %s37 = scalar_select %p34, %s35, %s36
      %p40 = pneg %p34
      %p41 = scmp.eq.s32.totalorder %s25, 1
      %p42 = por %p40, %p41
      %p43 = scmp.ne.s32.totalorder %s35, %s38
      %p44 = scmp.eq.s32.totalorder %s25, 0
      %p45 = por %p43, %p44
      %p46 = scmp.ne.s32.totalorder %s35, %s38
      %p47 = scmp.eq.s32.totalorder %s30, 1
      %p48 = por %p46, %p47
      %p49 = scmp.ne.s32.totalorder %s38, %s39
      %p50 = scmp.eq.s32.totalorder %s30, 0
      %p51 = por %p49, %p50
      %p52 = scmp.ne.s32.totalorder %s38, %s39
      %p53 = scmp.eq.s32.totalorder %s31, 1
      %p54 = por %p52, %p53
      %p56 = scmp.ne.s32.totalorder %s39, %s55
      %p57 = scmp.eq.s32.totalorder %s31, 0
      %p58 = por %p56, %p57
      %s59 = ssub.s32 %s25, %s32
      %p60 = scmp.eq.s32.totalorder %s59, 0
      %s62 = sadd.s32 %s61, 1
      %s63 = scalar_select %p60, %s61, %s62
      %p66 = pneg %p60
      %p67 = scmp.eq.s32.totalorder %s25, 1
      %p68 = por %p66, %p67
      %p69 = scmp.ne.s32.totalorder %s61, %s64
      %p70 = scmp.eq.s32.totalorder %s25, 0
      %p71 = por %p69, %p70
      %p72 = scmp.ne.s32.totalorder %s61, %s64
      %p73 = scmp.eq.s32.totalorder %s30, 1
      %p74 = por %p72, %p73
      %p75 = scmp.ne.s32.totalorder %s64, %s65
      %p76 = scmp.eq.s32.totalorder %s30, 0
      %p77 = por %p75, %p76
      %p78 = scmp.ne.s32.totalorder %s64, %s65
      %p79 = scmp.eq.s32.totalorder %s31, 1
      %p80 = por %p78, %p79
      %p82 = scmp.ne.s32.totalorder %s65, %s81
      %p83 = scmp.eq.s32.totalorder %s31, 0
      %p84 = por %p82, %p83
      %s86 = sadd.s32 %s85, 1
      %p89 = scmp.eq.s32.totalorder %s25, 1
      %p90 = scmp.ne.s32.totalorder %s85, %s87
      %p91 = scmp.eq.s32.totalorder %s25, 0
      %p92 = por %p90, %p91
      %p93 = scmp.ne.s32.totalorder %s85, %s87
      %p94 = scmp.eq.s32.totalorder %s30, 1
      %p95 = por %p93, %p94
      %p96 = scmp.ne.s32.totalorder %s87, %s88
      %p97 = scmp.eq.s32.totalorder %s30, 0
      %p98 = por %p96, %p97
      %p99 = scmp.ne.s32.totalorder %s87, %s88
      %p100 = scmp.eq.s32.totalorder %s31, 1
      %p101 = por %p99, %p100
      %p103 = scmp.ne.s32.totalorder %s88, %s102
      %p104 = scmp.eq.s32.totalorder %s31, 0
      %p105 = por %p103, %p104
      %s107 = sadd.s32 %s106, 1
      %p110 = scmp.eq.s32.totalorder %s25, 1
      %p111 = scmp.ne.s32.totalorder %s106, %s108
      %p112 = scmp.eq.s32.totalorder %s25, 0
      %p113 = por %p111, %p112
      %p114 = scmp.ne.s32.totalorder %s106, %s108
      %p115 = scmp.eq.s32.totalorder %s30, 1
      %p116 = por %p114, %p115
      %p117 = scmp.ne.s32.totalorder %s108, %s109
      %p118 = scmp.eq.s32.totalorder %s30, 0
      %p119 = por %p117, %p118
      %p120 = scmp.ne.s32.totalorder %s108, %s109
      %p121 = scmp.eq.s32.totalorder %s31, 1
      %p122 = por %p120, %p121
      %p124 = scmp.ne.s32.totalorder %s109, %s123
      %p125 = scmp.eq.s32.totalorder %s31, 0
      %p126 = por %p124, %p125
      %s127 = ssub.s32 %s25, %s32
      %p128 = scmp.eq.s32.totalorder %s127, 0
      %s130 = sadd.s32 %s129, 1
      %s131 = scalar_select %p128, %s129, %s130
      %p134 = pneg %p128
      %p135 = scmp.eq.s32.totalorder %s25, 1
      %p136 = por %p134, %p135
      %p137 = scmp.ne.s32.totalorder %s129, %s132
      %p138 = scmp.eq.s32.totalorder %s25, 0
      %p139 = por %p137, %p138
      %p140 = scmp.ne.s32.totalorder %s129, %s132
      %p141 = scmp.eq.s32.totalorder %s30, 1
      %p142 = por %p140, %p141
      %p143 = scmp.ne.s32.totalorder %s132, %s133
      %p144 = scmp.eq.s32.totalorder %s30, 0
      %p145 = por %p143, %p144
      %p146 = scmp.ne.s32.totalorder %s132, %s133
      %p147 = scmp.eq.s32.totalorder %s31, 1
      %p148 = por %p146, %p147
      %p150 = scmp.ne.s32.totalorder %s133, %s149
      %p151 = scmp.eq.s32.totalorder %s31, 0
      %p152 = por %p150, %p151
      %s153 = ssub.s32 %s25, %s32
      %p154 = scmp.eq.s32.totalorder %s153, 0
      %s156 = sadd.s32 %s155, 1
      %s157 = scalar_select %p154, %s155, %s156
      %p160 = pneg %p154
      %p161 = scmp.eq.s32.totalorder %s25, 1
      %p162 = por %p160, %p161
      %p163 = scmp.ne.s32.totalorder %s155, %s158
      %p164 = scmp.eq.s32.totalorder %s25, 0
      %p165 = por %p163, %p164
      %p166 = scmp.ne.s32.totalorder %s155, %s158
      %p167 = scmp.eq.s32.totalorder %s30, 1
      %p168 = por %p166, %p167
      %p169 = scmp.ne.s32.totalorder %s158, %s159
      %p170 = scmp.eq.s32.totalorder %s30, 0
      %p171 = por %p169, %p170
      %p172 = scmp.ne.s32.totalorder %s158, %s159
      %p173 = scmp.eq.s32.totalorder %s31, 1
      %p174 = por %p172, %p173
      %p176 = scmp.ne.s32.totalorder %s159, %s175
      %p177 = scmp.eq.s32.totalorder %s31, 0
      %p178 = por %p176, %p177
      %p179 = scmp.le.s32.totalorder 1, %s25
      %p180 = scmp.lt.s32.totalorder %s25, 3
      %p181 = pnand %p179, %p180
      %p182 = pneg %p181
      // Predicated region
      $region9: #{tpu_custom_call.1} parent=5 // pred_check
        _
      $region10: #{tpu_custom_call.1} parent=5 // pred_check_branch
        %184 = sbr.rel (%p181) target = $region12
      $region11: #{tpu_custom_call.1} parent=5 // pred_region
        %s185 = ssub.s32 %s25, 1
        // Predicated region
        $region13: #{tpu_custom_call.1} parent=11 // pred_check
          %p186 = pneg %p98
        $region14: #{tpu_custom_call.1} parent=11 // pred_check_branch
          %188 = sbr.rel (%p186) target = $region16
        $region15: #{tpu_custom_call.1} parent=11 // pred_region
          %190 = vsyncadd [#allocation6], 0
          %s191 = sshll.u32 %s2, 4
          %s192 = int_to_ptr.hbm [resolvable:$true] %s191
          %s193 = sshll.u32 [#allocation7], 4
          %s194 = int_to_ptr.vmem [resolvable:$true] %s193
          %199 = dma.hbm_to_vmem [thread:$0]  %s192, 32768, %s194, [#allocation6], 128, 128, 8
        $region16: #{tpu_custom_call.1} parent=11 // pred_fallthru
          _
        // Predicated region
        $region17: #{tpu_custom_call.1} parent=11 // pred_check
          %p200 = pneg %p119
        $region18: #{tpu_custom_call.1} parent=11 // pred_check_branch
          %202 = sbr.rel (%p200) target = $region20
        $region19: #{tpu_custom_call.1} parent=11 // pred_region
          %204 = vsyncadd [#allocation9], 0
          %s205 = sshll.u32 %s3, 4
          %s206 = int_to_ptr.hbm [resolvable:$true] %s205
          %s207 = sshll.u32 [#allocation8], 4
          %s208 = int_to_ptr.vmem [resolvable:$true] %s207
          %213 = dma.hbm_to_vmem [thread:$0]  %s206, 32768, %s208, [#allocation9], 128, 128, 8
        $region20: #{tpu_custom_call.1} parent=11 // pred_fallthru
          _
      $region12: #{tpu_custom_call.1} parent=5 // pred_fallthru
        _
      %p214 = scmp.lt.s32.totalorder %s25, 2
      // Predicated region
      $region21: #{tpu_custom_call.1} parent=5 // pred_check
        %p215 = pneg %p214
      $region22: #{tpu_custom_call.1} parent=5 // pred_check_branch
        %217 = sbr.rel (%p215) target = $region24
      $region23: #{tpu_custom_call.1} parent=5 // pred_region
        // Predicated region
        $region25: #{tpu_custom_call.1} parent=23 // pred_check
          %p218 = pneg %p45
        $region26: #{tpu_custom_call.1} parent=23 // pred_check_branch
          %220 = sbr.rel (%p218) target = $region28
        $region27: #{tpu_custom_call.1} parent=23 // pred_region
          %s221 = sand.u32 %s35, 1
          %s222 = scalar_lea.sflag [#allocation3], %s221
          %s223 = sand.u32 %s35, 1
          %s224 = scalar_lea.vmem [#allocation2], %s223
          %226 = vsyncadd %s222, 0
          %s227 = scalar_lea.hbm %s0, %s25
          %s229 = sshll.u32 %s227, 4
          %s230 = int_to_ptr.hbm [resolvable:$true] %s229
          %s231 = sshll.u32 %s224, 4
          %s232 = int_to_ptr.vmem [resolvable:$true] %s231
          %234 = dma.hbm_to_vmem [thread:$0]  %s230, 16, %s232, %s222
        $region28: #{tpu_custom_call.1} parent=23 // pred_fallthru
          _
        // Predicated region
        $region29: #{tpu_custom_call.1} parent=23 // pred_check
          %p235 = pneg %p71
        $region30: #{tpu_custom_call.1} parent=23 // pred_check_branch
          %237 = sbr.rel (%p235) target = $region32
        $region31: #{tpu_custom_call.1} parent=23 // pred_region
          %s238 = sand.u32 %s25, 1
          %s239 = scalar_lea.sflag [#allocation6], %s238
          %s240 = sand.u32 %s61, 1
          %s241 = scalar_lea.vmem [#allocation5], %s240
          %243 = vsyncadd %s239, 0
          %s244 = scalar_lea.hbm %s1, %s25
          %s246 = sshll.u32 %s244, 4
          %s247 = int_to_ptr.hbm [resolvable:$true] %s246
          %s248 = sshll.u32 %s241, 4
          %s249 = int_to_ptr.vmem [resolvable:$true] %s248
          %251 = dma.hbm_to_vmem [thread:$0]  %s247, 16, %s249, %s239
        $region32: #{tpu_custom_call.1} parent=23 // pred_fallthru
          _
      $region24: #{tpu_custom_call.1} parent=5 // pred_fallthru
        _
      %p252 = scmp.le.s32.totalorder 1, %s25
      %p253 = scmp.lt.s32.totalorder %s25, 3
      %p254 = pnand %p252, %p253
      %p255 = pneg %p254
      // Predicated region
      $region33: #{tpu_custom_call.1} parent=5 // pred_check
        _
      $region34: #{tpu_custom_call.1} parent=5 // pred_check_branch
        %257 = sbr.rel (%p254) target = $region36
      $region35: #{tpu_custom_call.1} parent=5 // pred_region
        %s258 = ssub.s32 %s25, 1
        %s259 = sand.u32 %s38, 1
        %s260 = scalar_lea.sflag [#allocation3], %s259
        %s261 = sand.u32 %s38, 1
        %s262 = scalar_lea.vmem [#allocation2], %s261
        // Predicated region
        $region37: #{tpu_custom_call.1} parent=35 // pred_check
          %p263 = pneg %p51
        $region38: #{tpu_custom_call.1} parent=35 // pred_check_branch
          %265 = sbr.rel (%p263) target = $region40
        $region39: #{tpu_custom_call.1} parent=35 // pred_region
          %267 = dma.done %s260, 16
        $region40: #{tpu_custom_call.1} parent=35 // pred_fallthru
          _
        %s268 = sand.u32 %s30, 1
        %s269 = scalar_lea.sflag [#allocation6], %s268
        %s270 = sand.u32 %s64, 1
        %s271 = scalar_lea.vmem [#allocation5], %s270
        // Predicated region
        $region41: #{tpu_custom_call.1} parent=35 // pred_check
          %p272 = pneg %p77
        $region42: #{tpu_custom_call.1} parent=35 // pred_check_branch
          %274 = sbr.rel (%p272) target = $region44
        $region43: #{tpu_custom_call.1} parent=35 // pred_region
          %276 = dma.done %s269, 16
        $region44: #{tpu_custom_call.1} parent=35 // pred_fallthru
          _
        // Predicated region
        $region45: #{tpu_custom_call.1} parent=35 // pred_check
          %p277 = pneg %p98
        $region46: #{tpu_custom_call.1} parent=35 // pred_check_branch
          %279 = sbr.rel (%p277) target = $region48
        $region47: #{tpu_custom_call.1} parent=35 // pred_region
          %281 = dma.done [#allocation6], 32768
        $region48: #{tpu_custom_call.1} parent=35 // pred_fallthru
          _
        // Predicated region
        $region49: #{tpu_custom_call.1} parent=35 // pred_check
          %p282 = pneg %p119
        $region50: #{tpu_custom_call.1} parent=35 // pred_check_branch
          %284 = sbr.rel (%p282) target = $region52
        $region51: #{tpu_custom_call.1} parent=35 // pred_region
          %286 = dma.done [#allocation9], 32768
        $region52: #{tpu_custom_call.1} parent=35 // pred_fallthru
          _
        %s287 = sand.u32 %s38, 1
        %s288 = scalar_lea.sflag [#allocation3], %s287
        %s289 = sand.u32 %s38, 1
        %s290 = scalar_lea.vmem [#allocation2], %s289
        %p291 = pneg %p51
        %p292 = pneg %p48
        %s293 = sand.u32 %s30, 1
        %s294 = scalar_lea.sflag [#allocation6], %s293
        %s295 = sand.u32 %s64, 1
        %s296 = scalar_lea.vmem [#allocation5], %s295
        %p297 = pneg %p77
        %p298 = pneg %p74
        %p299 = pneg %p98
        %p300 = pneg %p95
        %p301 = pneg %p119
        %p302 = pneg %p116
        %p303 = pneg %p145
        %p304 = pneg %p142
        %s305 = sand.u32 %s132, 1
        %s306 = scalar_lea.sflag [#allocation4], %s305
        %s307 = sand.u32 %s132, 1
        %s308 = smul.addr %s307, 2048
        %s309 = scalar_lea.vmem [#allocation10], %s308
        %p310 = pneg %p171
        %p311 = pneg %p168
        %s312 = sand.u32 %s158, 1
        %s313 = scalar_lea.sflag [#allocation12], %s312
        %s314 = sand.u32 %s158, 1
        %s315 = smul.addr %s314, 2048
        %s316 = scalar_lea.vmem [#allocation11], %s315
        %s317 = smul.u32 256, %s30
        %s318 = smul.u32 256, %s30
        %v319 = vld [vmem:[%s262] sm:$0x1]
        %v320 = vld [vmem:[%s271] sm:$0x1]
        %v321 = vld [vmem:[#allocation7] sm:$0xff]
        %v322 = vld [vmem:[#allocation7 + $0x8] sm:$0xff]
        %v323 = vld [vmem:[#allocation7 + $0x10] sm:$0xff]
        %v324 = vld [vmem:[#allocation7 + $0x18] sm:$0xff]
        %v325 = vld [vmem:[#allocation7 + $0x20] sm:$0xff]
        %v326 = vld [vmem:[#allocation7 + $0x28] sm:$0xff]
        %v327 = vld [vmem:[#allocation7 + $0x30] sm:$0xff]
        %v328 = vld [vmem:[#allocation7 + $0x38] sm:$0xff]
        %v329 = vld [vmem:[#allocation7 + $0x40] sm:$0xff]
        %v330 = vld [vmem:[#allocation7 + $0x48] sm:$0xff]
        %v331 = vld [vmem:[#allocation7 + $0x50] sm:$0xff]
        %v332 = vld [vmem:[#allocation7 + $0x58] sm:$0xff]
        %v333 = vld [vmem:[#allocation7 + $0x60] sm:$0xff]
        %v334 = vld [vmem:[#allocation7 + $0x68] sm:$0xff]
        %v335 = vld [vmem:[#allocation7 + $0x70] sm:$0xff]
        %v336 = vld [vmem:[#allocation7 + $0x78] sm:$0xff]
        %v337 = vld [vmem:[#allocation7 + $0x80] sm:$0xff]
        %v338 = vld [vmem:[#allocation7 + $0x88] sm:$0xff]
        %v339 = vld [vmem:[#allocation7 + $0x90] sm:$0xff]
        %v340 = vld [vmem:[#allocation7 + $0x98] sm:$0xff]
        %v341 = vld [vmem:[#allocation7 + $0xa0] sm:$0xff]
        %v342 = vld [vmem:[#allocation7 + $0xa8] sm:$0xff]
        %v343 = vld [vmem:[#allocation7 + $0xb0] sm:$0xff]
        %v344 = vld [vmem:[#allocation7 + $0xb8] sm:$0xff]
        %v345 = vld [vmem:[#allocation7 + $0xc0] sm:$0xff]
        %v346 = vld [vmem:[#allocation7 + $0xc8] sm:$0xff]
        %v347 = vld [vmem:[#allocation7 + $0xd0] sm:$0xff]
        %v348 = vld [vmem:[#allocation7 + $0xd8] sm:$0xff]
        %v349 = vld [vmem:[#allocation7 + $0xe0] sm:$0xff]
        %v350 = vld [vmem:[#allocation7 + $0xe8] sm:$0xff]
        %v351 = vld [vmem:[#allocation7 + $0xf0] sm:$0xff]
        %v352 = vld [vmem:[#allocation7 + $0xf8] sm:$0xff]
        %v353 = vld [vmem:[#allocation7 + $0x100] sm:$0xff]
        %v354 = vld [vmem:[#allocation7 + $0x108] sm:$0xff]
        %v355 = vld [vmem:[#allocation7 + $0x110] sm:$0xff]
        %v356 = vld [vmem:[#allocation7 + $0x118] sm:$0xff]
        %v357 = vld [vmem:[#allocation7 + $0x120] sm:$0xff]
        %v358 = vld [vmem:[#allocation7 + $0x128] sm:$0xff]
        %v359 = vld [vmem:[#allocation7 + $0x130] sm:$0xff]
        %v360 = vld [vmem:[#allocation7 + $0x138] sm:$0xff]
        %v361 = vld [vmem:[#allocation7 + $0x140] sm:$0xff]
        %v362 = vld [vmem:[#allocation7 + $0x148] sm:$0xff]
        %v363 = vld [vmem:[#allocation7 + $0x150] sm:$0xff]
        %v364 = vld [vmem:[#allocation7 + $0x158] sm:$0xff]
        %v365 = vld [vmem:[#allocation7 + $0x160] sm:$0xff]
        %v366 = vld [vmem:[#allocation7 + $0x168] sm:$0xff]
        %v367 = vld [vmem:[#allocation7 + $0x170] sm:$0xff]
        %v368 = vld [vmem:[#allocation7 + $0x178] sm:$0xff]
        %v369 = vld [vmem:[#allocation7 + $0x180] sm:$0xff]
        %v370 = vld [vmem:[#allocation7 + $0x188] sm:$0xff]
        %v371 = vld [vmem:[#allocation7 + $0x190] sm:$0xff]
        %v372 = vld [vmem:[#allocation7 + $0x198] sm:$0xff]
        %v373 = vld [vmem:[#allocation7 + $0x1a0] sm:$0xff]
        %v374 = vld [vmem:[#allocation7 + $0x1a8] sm:$0xff]
        %v375 = vld [vmem:[#allocation7 + $0x1b0] sm:$0xff]
        %v376 = vld [vmem:[#allocation7 + $0x1b8] sm:$0xff]
        %v377 = vld [vmem:[#allocation7 + $0x1c0] sm:$0xff]
        %v378 = vld [vmem:[#allocation7 + $0x1c8] sm:$0xff]
        %v379 = vld [vmem:[#allocation7 + $0x1d0] sm:$0xff]
        %v380 = vld [vmem:[#allocation7 + $0x1d8] sm:$0xff]
        %v381 = vld [vmem:[#allocation7 + $0x1e0] sm:$0xff]
        %v382 = vld [vmem:[#allocation7 + $0x1e8] sm:$0xff]
        %v383 = vld [vmem:[#allocation7 + $0x1f0] sm:$0xff]
        %v384 = vld [vmem:[#allocation7 + $0x1f8] sm:$0xff]
        %v385 = vld [vmem:[#allocation7 + $0x200] sm:$0xff]
        %v386 = vld [vmem:[#allocation7 + $0x208] sm:$0xff]
        %v387 = vld [vmem:[#allocation7 + $0x210] sm:$0xff]
        %v388 = vld [vmem:[#allocation7 + $0x218] sm:$0xff]
        %v389 = vld [vmem:[#allocation7 + $0x220] sm:$0xff]
        %v390 = vld [vmem:[#allocation7 + $0x228] sm:$0xff]
        %v391 = vld [vmem:[#allocation7 + $0x230] sm:$0xff]
        %v392 = vld [vmem:[#allocation7 + $0x238] sm:$0xff]
        %v393 = vld [vmem:[#allocation7 + $0x240] sm:$0xff]
        %v394 = vld [vmem:[#allocation7 + $0x248] sm:$0xff]
        %v395 = vld [vmem:[#allocation7 + $0x250] sm:$0xff]
        %v396 = vld [vmem:[#allocation7 + $0x258] sm:$0xff]
        %v397 = vld [vmem:[#allocation7 + $0x260] sm:$0xff]
        %v398 = vld [vmem:[#allocation7 + $0x268] sm:$0xff]
        %v399 = vld [vmem:[#allocation7 + $0x270] sm:$0xff]
        %v400 = vld [vmem:[#allocation7 + $0x278] sm:$0xff]
        %v401 = vld [vmem:[#allocation7 + $0x280] sm:$0xff]
        %v402 = vld [vmem:[#allocation7 + $0x288] sm:$0xff]
        %v403 = vld [vmem:[#allocation7 + $0x290] sm:$0xff]
        %v404 = vld [vmem:[#allocation7 + $0x298] sm:$0xff]
        %v405 = vld [vmem:[#allocation7 + $0x2a0] sm:$0xff]
        %v406 = vld [vmem:[#allocation7 + $0x2a8] sm:$0xff]
        %v407 = vld [vmem:[#allocation7 + $0x2b0] sm:$0xff]
        %v408 = vld [vmem:[#allocation7 + $0x2b8] sm:$0xff]
        %v409 = vld [vmem:[#allocation7 + $0x2c0] sm:$0xff]
        %v410 = vld [vmem:[#allocation7 + $0x2c8] sm:$0xff]
        %v411 = vld [vmem:[#allocation7 + $0x2d0] sm:$0xff]
        %v412 = vld [vmem:[#allocation7 + $0x2d8] sm:$0xff]
        %v413 = vld [vmem:[#allocation7 + $0x2e0] sm:$0xff]
        %v414 = vld [vmem:[#allocation7 + $0x2e8] sm:$0xff]
        %v415 = vld [vmem:[#allocation7 + $0x2f0] sm:$0xff]
        %v416 = vld [vmem:[#allocation7 + $0x2f8] sm:$0xff]
        %v417 = vld [vmem:[#allocation7 + $0x300] sm:$0xff]
        %v418 = vld [vmem:[#allocation7 + $0x308] sm:$0xff]
        %v419 = vld [vmem:[#allocation7 + $0x310] sm:$0xff]
        %v420 = vld [vmem:[#allocation7 + $0x318] sm:$0xff]
        %v421 = vld [vmem:[#allocation7 + $0x320] sm:$0xff]
        %v422 = vld [vmem:[#allocation7 + $0x328] sm:$0xff]
        %v423 = vld [vmem:[#allocation7 + $0x330] sm:$0xff]
        %v424 = vld [vmem:[#allocation7 + $0x338] sm:$0xff]
        %v425 = vld [vmem:[#allocation7 + $0x340] sm:$0xff]
        %v426 = vld [vmem:[#allocation7 + $0x348] sm:$0xff]
        %v427 = vld [vmem:[#allocation7 + $0x350] sm:$0xff]
        %v428 = vld [vmem:[#allocation7 + $0x358] sm:$0xff]
        %v429 = vld [vmem:[#allocation7 + $0x360] sm:$0xff]
        %v430 = vld [vmem:[#allocation7 + $0x368] sm:$0xff]
        %v431 = vld [vmem:[#allocation7 + $0x370] sm:$0xff]
        %v432 = vld [vmem:[#allocation7 + $0x378] sm:$0xff]
        %v433 = vld [vmem:[#allocation7 + $0x380] sm:$0xff]
        %v434 = vld [vmem:[#allocation7 + $0x388] sm:$0xff]
        %v435 = vld [vmem:[#allocation7 + $0x390] sm:$0xff]
        %v436 = vld [vmem:[#allocation7 + $0x398] sm:$0xff]
        %v437 = vld [vmem:[#allocation7 + $0x3a0] sm:$0xff]
        %v438 = vld [vmem:[#allocation7 + $0x3a8] sm:$0xff]
        %v439 = vld [vmem:[#allocation7 + $0x3b0] sm:$0xff]
        %v440 = vld [vmem:[#allocation7 + $0x3b8] sm:$0xff]
        %v441 = vld [vmem:[#allocation7 + $0x3c0] sm:$0xff]
        %v442 = vld [vmem:[#allocation7 + $0x3c8] sm:$0xff]
        %v443 = vld [vmem:[#allocation7 + $0x3d0] sm:$0xff]
        %v444 = vld [vmem:[#allocation7 + $0x3d8] sm:$0xff]
        %v445 = vld [vmem:[#allocation7 + $0x3e0] sm:$0xff]
        %v446 = vld [vmem:[#allocation7 + $0x3e8] sm:$0xff]
        %v447 = vld [vmem:[#allocation7 + $0x3f0] sm:$0xff]
        %v448 = vld [vmem:[#allocation7 + $0x3f8] sm:$0xff]
        %v449 = vld [vmem:[#allocation7 + $0x400] sm:$0xff]
        %v450 = vld [vmem:[#allocation7 + $0x408] sm:$0xff]
        %v451 = vld [vmem:[#allocation7 + $0x410] sm:$0xff]
        %v452 = vld [vmem:[#allocation7 + $0x418] sm:$0xff]
        %v453 = vld [vmem:[#allocation7 + $0x420] sm:$0xff]
        %v454 = vld [vmem:[#allocation7 + $0x428] sm:$0xff]
        %v455 = vld [vmem:[#allocation7 + $0x430] sm:$0xff]
        %v456 = vld [vmem:[#allocation7 + $0x438] sm:$0xff]
        %v457 = vld [vmem:[#allocation7 + $0x440] sm:$0xff]
        %v458 = vld [vmem:[#allocation7 + $0x448] sm:$0xff]
        %v459 = vld [vmem:[#allocation7 + $0x450] sm:$0xff]
        %v460 = vld [vmem:[#allocation7 + $0x458] sm:$0xff]
        %v461 = vld [vmem:[#allocation7 + $0x460] sm:$0xff]
        %v462 = vld [vmem:[#allocation7 + $0x468] sm:$0xff]
        %v463 = vld [vmem:[#allocation7 + $0x470] sm:$0xff]
        %v464 = vld [vmem:[#allocation7 + $0x478] sm:$0xff]
        %v465 = vld [vmem:[#allocation7 + $0x480] sm:$0xff]
        %v466 = vld [vmem:[#allocation7 + $0x488] sm:$0xff]
        %v467 = vld [vmem:[#allocation7 + $0x490] sm:$0xff]
        %v468 = vld [vmem:[#allocation7 + $0x498] sm:$0xff]
        %v469 = vld [vmem:[#allocation7 + $0x4a0] sm:$0xff]
        %v470 = vld [vmem:[#allocation7 + $0x4a8] sm:$0xff]
        %v471 = vld [vmem:[#allocation7 + $0x4b0] sm:$0xff]
        %v472 = vld [vmem:[#allocation7 + $0x4b8] sm:$0xff]
        %v473 = vld [vmem:[#allocation7 + $0x4c0] sm:$0xff]
        %v474 = vld [vmem:[#allocation7 + $0x4c8] sm:$0xff]
        %v475 = vld [vmem:[#allocation7 + $0x4d0] sm:$0xff]
        %v476 = vld [vmem:[#allocation7 + $0x4d8] sm:$0xff]
        %v477 = vld [vmem:[#allocation7 + $0x4e0] sm:$0xff]
        %v478 = vld [vmem:[#allocation7 + $0x4e8] sm:$0xff]
        %v479 = vld [vmem:[#allocation7 + $0x4f0] sm:$0xff]
        %v480 = vld [vmem:[#allocation7 + $0x4f8] sm:$0xff]
        %v481 = vld [vmem:[#allocation7 + $0x500] sm:$0xff]
        %v482 = vld [vmem:[#allocation7 + $0x508] sm:$0xff]
        %v483 = vld [vmem:[#allocation7 + $0x510] sm:$0xff]
        %v484 = vld [vmem:[#allocation7 + $0x518] sm:$0xff]
        %v485 = vld [vmem:[#allocation7 + $0x520] sm:$0xff]
        %v486 = vld [vmem:[#allocation7 + $0x528] sm:$0xff]
        %v487 = vld [vmem:[#allocation7 + $0x530] sm:$0xff]
        %v488 = vld [vmem:[#allocation7 + $0x538] sm:$0xff]
        %v489 = vld [vmem:[#allocation7 + $0x540] sm:$0xff]
        %v490 = vld [vmem:[#allocation7 + $0x548] sm:$0xff]
        %v491 = vld [vmem:[#allocation7 + $0x550] sm:$0xff]
        %v492 = vld [vmem:[#allocation7 + $0x558] sm:$0xff]
        %v493 = vld [vmem:[#allocation7 + $0x560] sm:$0xff]
        %v494 = vld [vmem:[#allocation7 + $0x568] sm:$0xff]
        %v495 = vld [vmem:[#allocation7 + $0x570] sm:$0xff]
        %v496 = vld [vmem:[#allocation7 + $0x578] sm:$0xff]
        %v497 = vld [vmem:[#allocation7 + $0x580] sm:$0xff]
        %v498 = vld [vmem:[#allocation7 + $0x588] sm:$0xff]
        %v499 = vld [vmem:[#allocation7 + $0x590] sm:$0xff]
        %v500 = vld [vmem:[#allocation7 + $0x598] sm:$0xff]
        %v501 = vld [vmem:[#allocation7 + $0x5a0] sm:$0xff]
        %v502 = vld [vmem:[#allocation7 + $0x5a8] sm:$0xff]
        %v503 = vld [vmem:[#allocation7 + $0x5b0] sm:$0xff]
        %v504 = vld [vmem:[#allocation7 + $0x5b8] sm:$0xff]
        %v505 = vld [vmem:[#allocation7 + $0x5c0] sm:$0xff]
        %v506 = vld [vmem:[#allocation7 + $0x5c8] sm:$0xff]
        %v507 = vld [vmem:[#allocation7 + $0x5d0] sm:$0xff]
        %v508 = vld [vmem:[#allocation7 + $0x5d8] sm:$0xff]
        %v509 = vld [vmem:[#allocation7 + $0x5e0] sm:$0xff]
        %v510 = vld [vmem:[#allocation7 + $0x5e8] sm:$0xff]
        %v511 = vld [vmem:[#allocation7 + $0x5f0] sm:$0xff]
        %v512 = vld [vmem:[#allocation7 + $0x5f8] sm:$0xff]
        %v513 = vld [vmem:[#allocation7 + $0x600] sm:$0xff]
        %v514 = vld [vmem:[#allocation7 + $0x608] sm:$0xff]
        %v515 = vld [vmem:[#allocation7 + $0x610] sm:$0xff]
        %v516 = vld [vmem:[#allocation7 + $0x618] sm:$0xff]
        %v517 = vld [vmem:[#allocation7 + $0x620] sm:$0xff]
        %v518 = vld [vmem:[#allocation7 + $0x628] sm:$0xff]
        %v519 = vld [vmem:[#allocation7 + $0x630] sm:$0xff]
        %v520 = vld [vmem:[#allocation7 + $0x638] sm:$0xff]
        %v521 = vld [vmem:[#allocation7 + $0x640] sm:$0xff]
        %v522 = vld [vmem:[#allocation7 + $0x648] sm:$0xff]
        %v523 = vld [vmem:[#allocation7 + $0x650] sm:$0xff]
        %v524 = vld [vmem:[#allocation7 + $0x658] sm:$0xff]
        %v525 = vld [vmem:[#allocation7 + $0x660] sm:$0xff]
        %v526 = vld [vmem:[#allocation7 + $0x668] sm:$0xff]
        %v527 = vld [vmem:[#allocation7 + $0x670] sm:$0xff]
        %v528 = vld [vmem:[#allocation7 + $0x678] sm:$0xff]
        %v529 = vld [vmem:[#allocation7 + $0x680] sm:$0xff]
        %v530 = vld [vmem:[#allocation7 + $0x688] sm:$0xff]
        %v531 = vld [vmem:[#allocation7 + $0x690] sm:$0xff]
        %v532 = vld [vmem:[#allocation7 + $0x698] sm:$0xff]
        %v533 = vld [vmem:[#allocation7 + $0x6a0] sm:$0xff]
        %v534 = vld [vmem:[#allocation7 + $0x6a8] sm:$0xff]
        %v535 = vld [vmem:[#allocation7 + $0x6b0] sm:$0xff]
        %v536 = vld [vmem:[#allocation7 + $0x6b8] sm:$0xff]
        %v537 = vld [vmem:[#allocation7 + $0x6c0] sm:$0xff]
        %v538 = vld [vmem:[#allocation7 + $0x6c8] sm:$0xff]
        %v539 = vld [vmem:[#allocation7 + $0x6d0] sm:$0xff]
        %v540 = vld [vmem:[#allocation7 + $0x6d8] sm:$0xff]
        %v541 = vld [vmem:[#allocation7 + $0x6e0] sm:$0xff]
        %v542 = vld [vmem:[#allocation7 + $0x6e8] sm:$0xff]
        %v543 = vld [vmem:[#allocation7 + $0x6f0] sm:$0xff]
        %v544 = vld [vmem:[#allocation7 + $0x6f8] sm:$0xff]
        %v545 = vld [vmem:[#allocation7 + $0x700] sm:$0xff]
        %v546 = vld [vmem:[#allocation7 + $0x708] sm:$0xff]
        %v547 = vld [vmem:[#allocation7 + $0x710] sm:$0xff]
        %v548 = vld [vmem:[#allocation7 + $0x718] sm:$0xff]
        %v549 = vld [vmem:[#allocation7 + $0x720] sm:$0xff]
        %v550 = vld [vmem:[#allocation7 + $0x728] sm:$0xff]
        %v551 = vld [vmem:[#allocation7 + $0x730] sm:$0xff]
        %v552 = vld [vmem:[#allocation7 + $0x738] sm:$0xff]
        %v553 = vld [vmem:[#allocation7 + $0x740] sm:$0xff]
        %v554 = vld [vmem:[#allocation7 + $0x748] sm:$0xff]
        %v555 = vld [vmem:[#allocation7 + $0x750] sm:$0xff]
        %v556 = vld [vmem:[#allocation7 + $0x758] sm:$0xff]
        %v557 = vld [vmem:[#allocation7 + $0x760] sm:$0xff]
        %v558 = vld [vmem:[#allocation7 + $0x768] sm:$0xff]
        %v559 = vld [vmem:[#allocation7 + $0x770] sm:$0xff]
        %v560 = vld [vmem:[#allocation7 + $0x778] sm:$0xff]
        %v561 = vld [vmem:[#allocation7 + $0x780] sm:$0xff]
        %v562 = vld [vmem:[#allocation7 + $0x788] sm:$0xff]
        %v563 = vld [vmem:[#allocation7 + $0x790] sm:$0xff]
        %v564 = vld [vmem:[#allocation7 + $0x798] sm:$0xff]
        %v565 = vld [vmem:[#allocation7 + $0x7a0] sm:$0xff]
        %v566 = vld [vmem:[#allocation7 + $0x7a8] sm:$0xff]
        %v567 = vld [vmem:[#allocation7 + $0x7b0] sm:$0xff]
        %v568 = vld [vmem:[#allocation7 + $0x7b8] sm:$0xff]
        %v569 = vld [vmem:[#allocation7 + $0x7c0] sm:$0xff]
        %v570 = vld [vmem:[#allocation7 + $0x7c8] sm:$0xff]
        %v571 = vld [vmem:[#allocation7 + $0x7d0] sm:$0xff]
        %v572 = vld [vmem:[#allocation7 + $0x7d8] sm:$0xff]
        %v573 = vld [vmem:[#allocation7 + $0x7e0] sm:$0xff]
        %v574 = vld [vmem:[#allocation7 + $0x7e8] sm:$0xff]
        %v575 = vld [vmem:[#allocation7 + $0x7f0] sm:$0xff]
        %v576 = vld [vmem:[#allocation7 + $0x7f8] sm:$0xff]
        %v577 = vld [vmem:[#allocation8] sm:$0xff]
        %v578 = vld [vmem:[#allocation8 + $0x8] sm:$0xff]
        %v579 = vld [vmem:[#allocation8 + $0x10] sm:$0xff]
        %v580 = vld [vmem:[#allocation8 + $0x18] sm:$0xff]
        %v581 = vld [vmem:[#allocation8 + $0x20] sm:$0xff]
        %v582 = vld [vmem:[#allocation8 + $0x28] sm:$0xff]
        %v583 = vld [vmem:[#allocation8 + $0x30] sm:$0xff]
        %v584 = vld [vmem:[#allocation8 + $0x38] sm:$0xff]
        %v585 = vld [vmem:[#allocation8 + $0x40] sm:$0xff]
        %v586 = vld [vmem:[#allocation8 + $0x48] sm:$0xff]
        %v587 = vld [vmem:[#allocation8 + $0x50] sm:$0xff]
        %v588 = vld [vmem:[#allocation8 + $0x58] sm:$0xff]
        %v589 = vld [vmem:[#allocation8 + $0x60] sm:$0xff]
        %v590 = vld [vmem:[#allocation8 + $0x68] sm:$0xff]
        %v591 = vld [vmem:[#allocation8 + $0x70] sm:$0xff]
        %v592 = vld [vmem:[#allocation8 + $0x78] sm:$0xff]
        %v593 = vld [vmem:[#allocation8 + $0x80] sm:$0xff]
        %v594 = vld [vmem:[#allocation8 + $0x88] sm:$0xff]
        %v595 = vld [vmem:[#allocation8 + $0x90] sm:$0xff]
        %v596 = vld [vmem:[#allocation8 + $0x98] sm:$0xff]
        %v597 = vld [vmem:[#allocation8 + $0xa0] sm:$0xff]
        %v598 = vld [vmem:[#allocation8 + $0xa8] sm:$0xff]
        %v599 = vld [vmem:[#allocation8 + $0xb0] sm:$0xff]
        %v600 = vld [vmem:[#allocation8 + $0xb8] sm:$0xff]
        %v601 = vld [vmem:[#allocation8 + $0xc0] sm:$0xff]
        %v602 = vld [vmem:[#allocation8 + $0xc8] sm:$0xff]
        %v603 = vld [vmem:[#allocation8 + $0xd0] sm:$0xff]
        %v604 = vld [vmem:[#allocation8 + $0xd8] sm:$0xff]
        %v605 = vld [vmem:[#allocation8 + $0xe0] sm:$0xff]
        %v606 = vld [vmem:[#allocation8 + $0xe8] sm:$0xff]
        %v607 = vld [vmem:[#allocation8 + $0xf0] sm:$0xff]
        %v608 = vld [vmem:[#allocation8 + $0xf8] sm:$0xff]
        %v609 = vld [vmem:[#allocation8 + $0x100] sm:$0xff]
        %v610 = vld [vmem:[#allocation8 + $0x108] sm:$0xff]
        %v611 = vld [vmem:[#allocation8 + $0x110] sm:$0xff]
        %v612 = vld [vmem:[#allocation8 + $0x118] sm:$0xff]
        %v613 = vld [vmem:[#allocation8 + $0x120] sm:$0xff]
        %v614 = vld [vmem:[#allocation8 + $0x128] sm:$0xff]
        %v615 = vld [vmem:[#allocation8 + $0x130] sm:$0xff]
        %v616 = vld [vmem:[#allocation8 + $0x138] sm:$0xff]
        %v617 = vld [vmem:[#allocation8 + $0x140] sm:$0xff]
        %v618 = vld [vmem:[#allocation8 + $0x148] sm:$0xff]
        %v619 = vld [vmem:[#allocation8 + $0x150] sm:$0xff]
        %v620 = vld [vmem:[#allocation8 + $0x158] sm:$0xff]
        %v621 = vld [vmem:[#allocation8 + $0x160] sm:$0xff]
        %v622 = vld [vmem:[#allocation8 + $0x168] sm:$0xff]
        %v623 = vld [vmem:[#allocation8 + $0x170] sm:$0xff]
        %v624 = vld [vmem:[#allocation8 + $0x178] sm:$0xff]
        %v625 = vld [vmem:[#allocation8 + $0x180] sm:$0xff]
        %v626 = vld [vmem:[#allocation8 + $0x188] sm:$0xff]
        %v627 = vld [vmem:[#allocation8 + $0x190] sm:$0xff]
        %v628 = vld [vmem:[#allocation8 + $0x198] sm:$0xff]
        %v629 = vld [vmem:[#allocation8 + $0x1a0] sm:$0xff]
        %v630 = vld [vmem:[#allocation8 + $0x1a8] sm:$0xff]
        %v631 = vld [vmem:[#allocation8 + $0x1b0] sm:$0xff]
        %v632 = vld [vmem:[#allocation8 + $0x1b8] sm:$0xff]
        %v633 = vld [vmem:[#allocation8 + $0x1c0] sm:$0xff]
        %v634 = vld [vmem:[#allocation8 + $0x1c8] sm:$0xff]
        %v635 = vld [vmem:[#allocation8 + $0x1d0] sm:$0xff]
        %v636 = vld [vmem:[#allocation8 + $0x1d8] sm:$0xff]
        %v637 = vld [vmem:[#allocation8 + $0x1e0] sm:$0xff]
        %v638 = vld [vmem:[#allocation8 + $0x1e8] sm:$0xff]
        %v639 = vld [vmem:[#allocation8 + $0x1f0] sm:$0xff]
        %v640 = vld [vmem:[#allocation8 + $0x1f8] sm:$0xff]
        %v641 = vld [vmem:[#allocation8 + $0x200] sm:$0xff]
        %v642 = vld [vmem:[#allocation8 + $0x208] sm:$0xff]
        %v643 = vld [vmem:[#allocation8 + $0x210] sm:$0xff]
        %v644 = vld [vmem:[#allocation8 + $0x218] sm:$0xff]
        %v645 = vld [vmem:[#allocation8 + $0x220] sm:$0xff]
        %v646 = vld [vmem:[#allocation8 + $0x228] sm:$0xff]
        %v647 = vld [vmem:[#allocation8 + $0x230] sm:$0xff]
        %v648 = vld [vmem:[#allocation8 + $0x238] sm:$0xff]
        %v649 = vld [vmem:[#allocation8 + $0x240] sm:$0xff]
        %v650 = vld [vmem:[#allocation8 + $0x248] sm:$0xff]
        %v651 = vld [vmem:[#allocation8 + $0x250] sm:$0xff]
        %v652 = vld [vmem:[#allocation8 + $0x258] sm:$0xff]
        %v653 = vld [vmem:[#allocation8 + $0x260] sm:$0xff]
        %v654 = vld [vmem:[#allocation8 + $0x268] sm:$0xff]
        %v655 = vld [vmem:[#allocation8 + $0x270] sm:$0xff]
        %v656 = vld [vmem:[#allocation8 + $0x278] sm:$0xff]
        %v657 = vld [vmem:[#allocation8 + $0x280] sm:$0xff]
        %v658 = vld [vmem:[#allocation8 + $0x288] sm:$0xff]
        %v659 = vld [vmem:[#allocation8 + $0x290] sm:$0xff]
        %v660 = vld [vmem:[#allocation8 + $0x298] sm:$0xff]
        %v661 = vld [vmem:[#allocation8 + $0x2a0] sm:$0xff]
        %v662 = vld [vmem:[#allocation8 + $0x2a8] sm:$0xff]
        %v663 = vld [vmem:[#allocation8 + $0x2b0] sm:$0xff]
        %v664 = vld [vmem:[#allocation8 + $0x2b8] sm:$0xff]
        %v665 = vld [vmem:[#allocation8 + $0x2c0] sm:$0xff]
        %v666 = vld [vmem:[#allocation8 + $0x2c8] sm:$0xff]
        %v667 = vld [vmem:[#allocation8 + $0x2d0] sm:$0xff]
        %v668 = vld [vmem:[#allocation8 + $0x2d8] sm:$0xff]
        %v669 = vld [vmem:[#allocation8 + $0x2e0] sm:$0xff]
        %v670 = vld [vmem:[#allocation8 + $0x2e8] sm:$0xff]
        %v671 = vld [vmem:[#allocation8 + $0x2f0] sm:$0xff]
        %v672 = vld [vmem:[#allocation8 + $0x2f8] sm:$0xff]
        %v673 = vld [vmem:[#allocation8 + $0x300] sm:$0xff]
        %v674 = vld [vmem:[#allocation8 + $0x308] sm:$0xff]
        %v675 = vld [vmem:[#allocation8 + $0x310] sm:$0xff]
        %v676 = vld [vmem:[#allocation8 + $0x318] sm:$0xff]
        %v677 = vld [vmem:[#allocation8 + $0x320] sm:$0xff]
        %v678 = vld [vmem:[#allocation8 + $0x328] sm:$0xff]
        %v679 = vld [vmem:[#allocation8 + $0x330] sm:$0xff]
        %v680 = vld [vmem:[#allocation8 + $0x338] sm:$0xff]
        %v681 = vld [vmem:[#allocation8 + $0x340] sm:$0xff]
        %v682 = vld [vmem:[#allocation8 + $0x348] sm:$0xff]
        %v683 = vld [vmem:[#allocation8 + $0x350] sm:$0xff]
        %v684 = vld [vmem:[#allocation8 + $0x358] sm:$0xff]
        %v685 = vld [vmem:[#allocation8 + $0x360] sm:$0xff]
        %v686 = vld [vmem:[#allocation8 + $0x368] sm:$0xff]
        %v687 = vld [vmem:[#allocation8 + $0x370] sm:$0xff]
        %v688 = vld [vmem:[#allocation8 + $0x378] sm:$0xff]
        %v689 = vld [vmem:[#allocation8 + $0x380] sm:$0xff]
        %v690 = vld [vmem:[#allocation8 + $0x388] sm:$0xff]
        %v691 = vld [vmem:[#allocation8 + $0x390] sm:$0xff]
        %v692 = vld [vmem:[#allocation8 + $0x398] sm:$0xff]
        %v693 = vld [vmem:[#allocation8 + $0x3a0] sm:$0xff]
        %v694 = vld [vmem:[#allocation8 + $0x3a8] sm:$0xff]
        %v695 = vld [vmem:[#allocation8 + $0x3b0] sm:$0xff]
        %v696 = vld [vmem:[#allocation8 + $0x3b8] sm:$0xff]
        %v697 = vld [vmem:[#allocation8 + $0x3c0] sm:$0xff]
        %v698 = vld [vmem:[#allocation8 + $0x3c8] sm:$0xff]
        %v699 = vld [vmem:[#allocation8 + $0x3d0] sm:$0xff]
        %v700 = vld [vmem:[#allocation8 + $0x3d8] sm:$0xff]
        %v701 = vld [vmem:[#allocation8 + $0x3e0] sm:$0xff]
        %v702 = vld [vmem:[#allocation8 + $0x3e8] sm:$0xff]
        %v703 = vld [vmem:[#allocation8 + $0x3f0] sm:$0xff]
        %v704 = vld [vmem:[#allocation8 + $0x3f8] sm:$0xff]
        %v705 = vld [vmem:[#allocation8 + $0x400] sm:$0xff]
        %v706 = vld [vmem:[#allocation8 + $0x408] sm:$0xff]
        %v707 = vld [vmem:[#allocation8 + $0x410] sm:$0xff]
        %v708 = vld [vmem:[#allocation8 + $0x418] sm:$0xff]
        %v709 = vld [vmem:[#allocation8 + $0x420] sm:$0xff]
        %v710 = vld [vmem:[#allocation8 + $0x428] sm:$0xff]
        %v711 = vld [vmem:[#allocation8 + $0x430] sm:$0xff]
        %v712 = vld [vmem:[#allocation8 + $0x438] sm:$0xff]
        %v713 = vld [vmem:[#allocation8 + $0x440] sm:$0xff]
        %v714 = vld [vmem:[#allocation8 + $0x448] sm:$0xff]
        %v715 = vld [vmem:[#allocation8 + $0x450] sm:$0xff]
        %v716 = vld [vmem:[#allocation8 + $0x458] sm:$0xff]
        %v717 = vld [vmem:[#allocation8 + $0x460] sm:$0xff]
        %v718 = vld [vmem:[#allocation8 + $0x468] sm:$0xff]
        %v719 = vld [vmem:[#allocation8 + $0x470] sm:$0xff]
        %v720 = vld [vmem:[#allocation8 + $0x478] sm:$0xff]
        %v721 = vld [vmem:[#allocation8 + $0x480] sm:$0xff]
        %v722 = vld [vmem:[#allocation8 + $0x488] sm:$0xff]
        %v723 = vld [vmem:[#allocation8 + $0x490] sm:$0xff]
        %v724 = vld [vmem:[#allocation8 + $0x498] sm:$0xff]
        %v725 = vld [vmem:[#allocation8 + $0x4a0] sm:$0xff]
        %v726 = vld [vmem:[#allocation8 + $0x4a8] sm:$0xff]
        %v727 = vld [vmem:[#allocation8 + $0x4b0] sm:$0xff]
        %v728 = vld [vmem:[#allocation8 + $0x4b8] sm:$0xff]
        %v729 = vld [vmem:[#allocation8 + $0x4c0] sm:$0xff]
        %v730 = vld [vmem:[#allocation8 + $0x4c8] sm:$0xff]
        %v731 = vld [vmem:[#allocation8 + $0x4d0] sm:$0xff]
        %v732 = vld [vmem:[#allocation8 + $0x4d8] sm:$0xff]
        %v733 = vld [vmem:[#allocation8 + $0x4e0] sm:$0xff]
        %v734 = vld [vmem:[#allocation8 + $0x4e8] sm:$0xff]
        %v735 = vld [vmem:[#allocation8 + $0x4f0] sm:$0xff]
        %v736 = vld [vmem:[#allocation8 + $0x4f8] sm:$0xff]
        %v737 = vld [vmem:[#allocation8 + $0x500] sm:$0xff]
        %v738 = vld [vmem:[#allocation8 + $0x508] sm:$0xff]
        %v739 = vld [vmem:[#allocation8 + $0x510] sm:$0xff]
        %v740 = vld [vmem:[#allocation8 + $0x518] sm:$0xff]
        %v741 = vld [vmem:[#allocation8 + $0x520] sm:$0xff]
        %v742 = vld [vmem:[#allocation8 + $0x528] sm:$0xff]
        %v743 = vld [vmem:[#allocation8 + $0x530] sm:$0xff]
        %v744 = vld [vmem:[#allocation8 + $0x538] sm:$0xff]
        %v745 = vld [vmem:[#allocation8 + $0x540] sm:$0xff]
        %v746 = vld [vmem:[#allocation8 + $0x548] sm:$0xff]
        %v747 = vld [vmem:[#allocation8 + $0x550] sm:$0xff]
        %v748 = vld [vmem:[#allocation8 + $0x558] sm:$0xff]
        %v749 = vld [vmem:[#allocation8 + $0x560] sm:$0xff]
        %v750 = vld [vmem:[#allocation8 + $0x568] sm:$0xff]
        %v751 = vld [vmem:[#allocation8 + $0x570] sm:$0xff]
        %v752 = vld [vmem:[#allocation8 + $0x578] sm:$0xff]
        %v753 = vld [vmem:[#allocation8 + $0x580] sm:$0xff]
        %v754 = vld [vmem:[#allocation8 + $0x588] sm:$0xff]
        %v755 = vld [vmem:[#allocation8 + $0x590] sm:$0xff]
        %v756 = vld [vmem:[#allocation8 + $0x598] sm:$0xff]
        %v757 = vld [vmem:[#allocation8 + $0x5a0] sm:$0xff]
        %v758 = vld [vmem:[#allocation8 + $0x5a8] sm:$0xff]
        %v759 = vld [vmem:[#allocation8 + $0x5b0] sm:$0xff]
        %v760 = vld [vmem:[#allocation8 + $0x5b8] sm:$0xff]
        %v761 = vld [vmem:[#allocation8 + $0x5c0] sm:$0xff]
        %v762 = vld [vmem:[#allocation8 + $0x5c8] sm:$0xff]
        %v763 = vld [vmem:[#allocation8 + $0x5d0] sm:$0xff]
        %v764 = vld [vmem:[#allocation8 + $0x5d8] sm:$0xff]
        %v765 = vld [vmem:[#allocation8 + $0x5e0] sm:$0xff]
        %v766 = vld [vmem:[#allocation8 + $0x5e8] sm:$0xff]
        %v767 = vld [vmem:[#allocation8 + $0x5f0] sm:$0xff]
        %v768 = vld [vmem:[#allocation8 + $0x5f8] sm:$0xff]
        %v769 = vld [vmem:[#allocation8 + $0x600] sm:$0xff]
        %v770 = vld [vmem:[#allocation8 + $0x608] sm:$0xff]
        %v771 = vld [vmem:[#allocation8 + $0x610] sm:$0xff]
        %v772 = vld [vmem:[#allocation8 + $0x618] sm:$0xff]
        %v773 = vld [vmem:[#allocation8 + $0x620] sm:$0xff]
        %v774 = vld [vmem:[#allocation8 + $0x628] sm:$0xff]
        %v775 = vld [vmem:[#allocation8 + $0x630] sm:$0xff]
        %v776 = vld [vmem:[#allocation8 + $0x638] sm:$0xff]
        %v777 = vld [vmem:[#allocation8 + $0x640] sm:$0xff]
        %v778 = vld [vmem:[#allocation8 + $0x648] sm:$0xff]
        %v779 = vld [vmem:[#allocation8 + $0x650] sm:$0xff]
        %v780 = vld [vmem:[#allocation8 + $0x658] sm:$0xff]
        %v781 = vld [vmem:[#allocation8 + $0x660] sm:$0xff]
        %v782 = vld [vmem:[#allocation8 + $0x668] sm:$0xff]
        %v783 = vld [vmem:[#allocation8 + $0x670] sm:$0xff]
        %v784 = vld [vmem:[#allocation8 + $0x678] sm:$0xff]
        %v785 = vld [vmem:[#allocation8 + $0x680] sm:$0xff]
        %v786 = vld [vmem:[#allocation8 + $0x688] sm:$0xff]
        %v787 = vld [vmem:[#allocation8 + $0x690] sm:$0xff]
        %v788 = vld [vmem:[#allocation8 + $0x698] sm:$0xff]
        %v789 = vld [vmem:[#allocation8 + $0x6a0] sm:$0xff]
        %v790 = vld [vmem:[#allocation8 + $0x6a8] sm:$0xff]
        %v791 = vld [vmem:[#allocation8 + $0x6b0] sm:$0xff]
        %v792 = vld [vmem:[#allocation8 + $0x6b8] sm:$0xff]
        %v793 = vld [vmem:[#allocation8 + $0x6c0] sm:$0xff]
        %v794 = vld [vmem:[#allocation8 + $0x6c8] sm:$0xff]
        %v795 = vld [vmem:[#allocation8 + $0x6d0] sm:$0xff]
        %v796 = vld [vmem:[#allocation8 + $0x6d8] sm:$0xff]
        %v797 = vld [vmem:[#allocation8 + $0x6e0] sm:$0xff]
        %v798 = vld [vmem:[#allocation8 + $0x6e8] sm:$0xff]
        %v799 = vld [vmem:[#allocation8 + $0x6f0] sm:$0xff]
        %v800 = vld [vmem:[#allocation8 + $0x6f8] sm:$0xff]
        %v801 = vld [vmem:[#allocation8 + $0x700] sm:$0xff]
        %v802 = vld [vmem:[#allocation8 + $0x708] sm:$0xff]
        %v803 = vld [vmem:[#allocation8 + $0x710] sm:$0xff]
        %v804 = vld [vmem:[#allocation8 + $0x718] sm:$0xff]
        %v805 = vld [vmem:[#allocation8 + $0x720] sm:$0xff]
        %v806 = vld [vmem:[#allocation8 + $0x728] sm:$0xff]
        %v807 = vld [vmem:[#allocation8 + $0x730] sm:$0xff]
        %v808 = vld [vmem:[#allocation8 + $0x738] sm:$0xff]
        %v809 = vld [vmem:[#allocation8 + $0x740] sm:$0xff]
        %v810 = vld [vmem:[#allocation8 + $0x748] sm:$0xff]
        %v811 = vld [vmem:[#allocation8 + $0x750] sm:$0xff]
        %v812 = vld [vmem:[#allocation8 + $0x758] sm:$0xff]
        %v813 = vld [vmem:[#allocation8 + $0x760] sm:$0xff]
        %v814 = vld [vmem:[#allocation8 + $0x768] sm:$0xff]
        %v815 = vld [vmem:[#allocation8 + $0x770] sm:$0xff]
        %v816 = vld [vmem:[#allocation8 + $0x778] sm:$0xff]
        %v817 = vld [vmem:[#allocation8 + $0x780] sm:$0xff]
        %v818 = vld [vmem:[#allocation8 + $0x788] sm:$0xff]
        %v819 = vld [vmem:[#allocation8 + $0x790] sm:$0xff]
        %v820 = vld [vmem:[#allocation8 + $0x798] sm:$0xff]
        %v821 = vld [vmem:[#allocation8 + $0x7a0] sm:$0xff]
        %v822 = vld [vmem:[#allocation8 + $0x7a8] sm:$0xff]
        %v823 = vld [vmem:[#allocation8 + $0x7b0] sm:$0xff]
        %v824 = vld [vmem:[#allocation8 + $0x7b8] sm:$0xff]
        %v825 = vld [vmem:[#allocation8 + $0x7c0] sm:$0xff]
        %v826 = vld [vmem:[#allocation8 + $0x7c8] sm:$0xff]
        %v827 = vld [vmem:[#allocation8 + $0x7d0] sm:$0xff]
        %v828 = vld [vmem:[#allocation8 + $0x7d8] sm:$0xff]
        %v829 = vld [vmem:[#allocation8 + $0x7e0] sm:$0xff]
        %v830 = vld [vmem:[#allocation8 + $0x7e8] sm:$0xff]
        %v831 = vld [vmem:[#allocation8 + $0x7f0] sm:$0xff]
        %v832 = vld [vmem:[#allocation8 + $0x7f8] sm:$0xff]
        %v834 = vperm.slane %v319, 0
        %v836 = vmul.f32 %v834, %v321
        %v837 = vmul.f32 %v834, %v322
        %v838 = vmul.f32 %v834, %v323
        %v839 = vmul.f32 %v834, %v324
        %v840 = vmul.f32 %v834, %v325
        %v841 = vmul.f32 %v834, %v326
        %v842 = vmul.f32 %v834, %v327
        %v843 = vmul.f32 %v834, %v328
        %v844 = vmul.f32 %v834, %v329
        %v845 = vmul.f32 %v834, %v330
        %v846 = vmul.f32 %v834, %v331
        %v847 = vmul.f32 %v834, %v332
        %v848 = vmul.f32 %v834, %v333
        %v849 = vmul.f32 %v834, %v334
        %v850 = vmul.f32 %v834, %v335
        %v851 = vmul.f32 %v834, %v336
        %v852 = vmul.f32 %v834, %v337
        %v853 = vmul.f32 %v834, %v338
        %v854 = vmul.f32 %v834, %v339
        %v855 = vmul.f32 %v834, %v340
        %v856 = vmul.f32 %v834, %v341
        %v857 = vmul.f32 %v834, %v342
        %v858 = vmul.f32 %v834, %v343
        %v859 = vmul.f32 %v834, %v344
        %v860 = vmul.f32 %v834, %v345
        %v861 = vmul.f32 %v834, %v346
        %v862 = vmul.f32 %v834, %v347
        %v863 = vmul.f32 %v834, %v348
        %v864 = vmul.f32 %v834, %v349
        %v865 = vmul.f32 %v834, %v350
        %v866 = vmul.f32 %v834, %v351
        %v867 = vmul.f32 %v834, %v352
        %v868 = vmul.f32 %v834, %v353
        %v869 = vmul.f32 %v834, %v354
        %v870 = vmul.f32 %v834, %v355
        %v871 = vmul.f32 %v834, %v356
        %v872 = vmul.f32 %v834, %v357
        %v873 = vmul.f32 %v834, %v358
        %v874 = vmul.f32 %v834, %v359
        %v875 = vmul.f32 %v834, %v360
        %v876 = vmul.f32 %v834, %v361
        %v877 = vmul.f32 %v834, %v362
        %v878 = vmul.f32 %v834, %v363
        %v879 = vmul.f32 %v834, %v364
        %v880 = vmul.f32 %v834, %v365
        %v881 = vmul.f32 %v834, %v366
        %v882 = vmul.f32 %v834, %v367
        %v883 = vmul.f32 %v834, %v368
        %v884 = vmul.f32 %v834, %v369
        %v885 = vmul.f32 %v834, %v370
        %v886 = vmul.f32 %v834, %v371
        %v887 = vmul.f32 %v834, %v372
        %v888 = vmul.f32 %v834, %v373
        %v889 = vmul.f32 %v834, %v374
        %v890 = vmul.f32 %v834, %v375
        %v891 = vmul.f32 %v834, %v376
        %v892 = vmul.f32 %v834, %v377
        %v893 = vmul.f32 %v834, %v378
        %v894 = vmul.f32 %v834, %v379
        %v895 = vmul.f32 %v834, %v380
        %v896 = vmul.f32 %v834, %v381
        %v897 = vmul.f32 %v834, %v382
        %v898 = vmul.f32 %v834, %v383
        %v899 = vmul.f32 %v834, %v384
        %v900 = vmul.f32 %v834, %v385
        %v901 = vmul.f32 %v834, %v386
        %v902 = vmul.f32 %v834, %v387
        %v903 = vmul.f32 %v834, %v388
        %v904 = vmul.f32 %v834, %v389
        %v905 = vmul.f32 %v834, %v390
        %v906 = vmul.f32 %v834, %v391
        %v907 = vmul.f32 %v834, %v392
        %v908 = vmul.f32 %v834, %v393
        %v909 = vmul.f32 %v834, %v394
        %v910 = vmul.f32 %v834, %v395
        %v911 = vmul.f32 %v834, %v396
        %v912 = vmul.f32 %v834, %v397
        %v913 = vmul.f32 %v834, %v398
        %v914 = vmul.f32 %v834, %v399
        %v915 = vmul.f32 %v834, %v400
        %v916 = vmul.f32 %v834, %v401
        %v917 = vmul.f32 %v834, %v402
        %v918 = vmul.f32 %v834, %v403
        %v919 = vmul.f32 %v834, %v404
        %v920 = vmul.f32 %v834, %v405
        %v921 = vmul.f32 %v834, %v406
        %v922 = vmul.f32 %v834, %v407
        %v923 = vmul.f32 %v834, %v408
        %v924 = vmul.f32 %v834, %v409
        %v925 = vmul.f32 %v834, %v410
        %v926 = vmul.f32 %v834, %v411
        %v927 = vmul.f32 %v834, %v412
        %v928 = vmul.f32 %v834, %v413
        %v929 = vmul.f32 %v834, %v414
        %v930 = vmul.f32 %v834, %v415
        %v931 = vmul.f32 %v834, %v416
        %v932 = vmul.f32 %v834, %v417
        %v933 = vmul.f32 %v834, %v418
        %v934 = vmul.f32 %v834, %v419
        %v935 = vmul.f32 %v834, %v420
        %v936 = vmul.f32 %v834, %v421
        %v937 = vmul.f32 %v834, %v422
        %v938 = vmul.f32 %v834, %v423
        %v939 = vmul.f32 %v834, %v424
        %v940 = vmul.f32 %v834, %v425
        %v941 = vmul.f32 %v834, %v426
        %v942 = vmul.f32 %v834, %v427
        %v943 = vmul.f32 %v834, %v428
        %v944 = vmul.f32 %v834, %v429
        %v945 = vmul.f32 %v834, %v430
        %v946 = vmul.f32 %v834, %v431
        %v947 = vmul.f32 %v834, %v432
        %v948 = vmul.f32 %v834, %v433
        %v949 = vmul.f32 %v834, %v434
        %v950 = vmul.f32 %v834, %v435
        %v951 = vmul.f32 %v834, %v436
        %v952 = vmul.f32 %v834, %v437
        %v953 = vmul.f32 %v834, %v438
        %v954 = vmul.f32 %v834, %v439
        %v955 = vmul.f32 %v834, %v440
        %v956 = vmul.f32 %v834, %v441
        %v957 = vmul.f32 %v834, %v442
        %v958 = vmul.f32 %v834, %v443
        %v959 = vmul.f32 %v834, %v444
        %v960 = vmul.f32 %v834, %v445
        %v961 = vmul.f32 %v834, %v446
        %v962 = vmul.f32 %v834, %v447
        %v963 = vmul.f32 %v834, %v448
        %v964 = vmul.f32 %v834, %v449
        %v965 = vmul.f32 %v834, %v450
        %v966 = vmul.f32 %v834, %v451
        %v967 = vmul.f32 %v834, %v452
        %v968 = vmul.f32 %v834, %v453
        %v969 = vmul.f32 %v834, %v454
        %v970 = vmul.f32 %v834, %v455
        %v971 = vmul.f32 %v834, %v456
        %v972 = vmul.f32 %v834, %v457
        %v973 = vmul.f32 %v834, %v458
        %v974 = vmul.f32 %v834, %v459
        %v975 = vmul.f32 %v834, %v460
        %v976 = vmul.f32 %v834, %v461
        %v977 = vmul.f32 %v834, %v462
        %v978 = vmul.f32 %v834, %v463
        %v979 = vmul.f32 %v834, %v464
        %v980 = vmul.f32 %v834, %v465
        %v981 = vmul.f32 %v834, %v466
        %v982 = vmul.f32 %v834, %v467
        %v983 = vmul.f32 %v834, %v468
        %v984 = vmul.f32 %v834, %v469
        %v985 = vmul.f32 %v834, %v470
        %v986 = vmul.f32 %v834, %v471
        %v987 = vmul.f32 %v834, %v472
        %v988 = vmul.f32 %v834, %v473
        %v989 = vmul.f32 %v834, %v474
        %v990 = vmul.f32 %v834, %v475
        %v991 = vmul.f32 %v834, %v476
        %v992 = vmul.f32 %v834, %v477
        %v993 = vmul.f32 %v834, %v478
        %v994 = vmul.f32 %v834, %v479
        %v995 = vmul.f32 %v834, %v480
        %v996 = vmul.f32 %v834, %v481
        %v997 = vmul.f32 %v834, %v482
        %v998 = vmul.f32 %v834, %v483
        %v999 = vmul.f32 %v834, %v484
        %v1000 = vmul.f32 %v834, %v485
        %v1001 = vmul.f32 %v834, %v486
        %v1002 = vmul.f32 %v834, %v487
        %v1003 = vmul.f32 %v834, %v488
        %v1004 = vmul.f32 %v834, %v489
        %v1005 = vmul.f32 %v834, %v490
        %v1006 = vmul.f32 %v834, %v491
        %v1007 = vmul.f32 %v834, %v492
        %v1008 = vmul.f32 %v834, %v493
        %v1009 = vmul.f32 %v834, %v494
        %v1010 = vmul.f32 %v834, %v495
        %v1011 = vmul.f32 %v834, %v496
        %v1012 = vmul.f32 %v834, %v497
        %v1013 = vmul.f32 %v834, %v498
        %v1014 = vmul.f32 %v834, %v499
        %v1015 = vmul.f32 %v834, %v500
        %v1016 = vmul.f32 %v834, %v501
        %v1017 = vmul.f32 %v834, %v502
        %v1018 = vmul.f32 %v834, %v503
        %v1019 = vmul.f32 %v834, %v504
        %v1020 = vmul.f32 %v834, %v505
        %v1021 = vmul.f32 %v834, %v506
        %v1022 = vmul.f32 %v834, %v507
        %v1023 = vmul.f32 %v834, %v508
        %v1024 = vmul.f32 %v834, %v509
        %v1025 = vmul.f32 %v834, %v510
        %v1026 = vmul.f32 %v834, %v511
        %v1027 = vmul.f32 %v834, %v512
        %v1028 = vmul.f32 %v834, %v513
        %v1029 = vmul.f32 %v834, %v514
        %v1030 = vmul.f32 %v834, %v515
        %v1031 = vmul.f32 %v834, %v516
        %v1032 = vmul.f32 %v834, %v517
        %v1033 = vmul.f32 %v834, %v518
        %v1034 = vmul.f32 %v834, %v519
        %v1035 = vmul.f32 %v834, %v520
        %v1036 = vmul.f32 %v834, %v521
        %v1037 = vmul.f32 %v834, %v522
        %v1038 = vmul.f32 %v834, %v523
        %v1039 = vmul.f32 %v834, %v524
        %v1040 = vmul.f32 %v834, %v525
        %v1041 = vmul.f32 %v834, %v526
        %v1042 = vmul.f32 %v834, %v527
        %v1043 = vmul.f32 %v834, %v528
        %v1044 = vmul.f32 %v834, %v529
        %v1045 = vmul.f32 %v834, %v530
        %v1046 = vmul.f32 %v834, %v531
        %v1047 = vmul.f32 %v834, %v532
        %v1048 = vmul.f32 %v834, %v533
        %v1049 = vmul.f32 %v834, %v534
        %v1050 = vmul.f32 %v834, %v535
        %v1051 = vmul.f32 %v834, %v536
        %v1052 = vmul.f32 %v834, %v537
        %v1053 = vmul.f32 %v834, %v538
        %v1054 = vmul.f32 %v834, %v539
        %v1055 = vmul.f32 %v834, %v540
        %v1056 = vmul.f32 %v834, %v541
        %v1057 = vmul.f32 %v834, %v542
        %v1058 = vmul.f32 %v834, %v543
        %v1059 = vmul.f32 %v834, %v544
        %v1060 = vmul.f32 %v834, %v545
        %v1061 = vmul.f32 %v834, %v546
        %v1062 = vmul.f32 %v834, %v547
        %v1063 = vmul.f32 %v834, %v548
        %v1064 = vmul.f32 %v834, %v549
        %v1065 = vmul.f32 %v834, %v550
        %v1066 = vmul.f32 %v834, %v551
        %v1067 = vmul.f32 %v834, %v552
        %v1068 = vmul.f32 %v834, %v553
        %v1069 = vmul.f32 %v834, %v554
        %v1070 = vmul.f32 %v834, %v555
        %v1071 = vmul.f32 %v834, %v556
        %v1072 = vmul.f32 %v834, %v557
        %v1073 = vmul.f32 %v834, %v558
        %v1074 = vmul.f32 %v834, %v559
        %v1075 = vmul.f32 %v834, %v560
        %v1076 = vmul.f32 %v834, %v561
        %v1077 = vmul.f32 %v834, %v562
        %v1078 = vmul.f32 %v834, %v563
        %v1079 = vmul.f32 %v834, %v564
        %v1080 = vmul.f32 %v834, %v565
        %v1081 = vmul.f32 %v834, %v566
        %v1082 = vmul.f32 %v834, %v567
        %v1083 = vmul.f32 %v834, %v568
        %v1084 = vmul.f32 %v834, %v569
        %v1085 = vmul.f32 %v834, %v570
        %v1086 = vmul.f32 %v834, %v571
        %v1087 = vmul.f32 %v834, %v572
        %v1088 = vmul.f32 %v834, %v573
        %v1089 = vmul.f32 %v834, %v574
        %v1090 = vmul.f32 %v834, %v575
        %v1091 = vmul.f32 %v834, %v576
        %v1093 = vperm.slane %v320, 0
        %v1095 = vmul.f32 %v1093, %v577
        %v1096 = vmul.f32 %v1093, %v578
        %v1097 = vmul.f32 %v1093, %v579
        %v1098 = vmul.f32 %v1093, %v580
        %v1099 = vmul.f32 %v1093, %v581
        %v1100 = vmul.f32 %v1093, %v582
        %v1101 = vmul.f32 %v1093, %v583
        %v1102 = vmul.f32 %v1093, %v584
        %v1103 = vmul.f32 %v1093, %v585
        %v1104 = vmul.f32 %v1093, %v586
        %v1105 = vmul.f32 %v1093, %v587
        %v1106 = vmul.f32 %v1093, %v588
        %v1107 = vmul.f32 %v1093, %v589
        %v1108 = vmul.f32 %v1093, %v590
        %v1109 = vmul.f32 %v1093, %v591
        %v1110 = vmul.f32 %v1093, %v592
        %v1111 = vmul.f32 %v1093, %v593
        %v1112 = vmul.f32 %v1093, %v594
        %v1113 = vmul.f32 %v1093, %v595
        %v1114 = vmul.f32 %v1093, %v596
        %v1115 = vmul.f32 %v1093, %v597
        %v1116 = vmul.f32 %v1093, %v598
        %v1117 = vmul.f32 %v1093, %v599
        %v1118 = vmul.f32 %v1093, %v600
        %v1119 = vmul.f32 %v1093, %v601
        %v1120 = vmul.f32 %v1093, %v602
        %v1121 = vmul.f32 %v1093, %v603
        %v1122 = vmul.f32 %v1093, %v604
        %v1123 = vmul.f32 %v1093, %v605
        %v1124 = vmul.f32 %v1093, %v606
        %v1125 = vmul.f32 %v1093, %v607
        %v1126 = vmul.f32 %v1093, %v608
        %v1127 = vmul.f32 %v1093, %v609
        %v1128 = vmul.f32 %v1093, %v610
        %v1129 = vmul.f32 %v1093, %v611
        %v1130 = vmul.f32 %v1093, %v612
        %v1131 = vmul.f32 %v1093, %v613
        %v1132 = vmul.f32 %v1093, %v614
        %v1133 = vmul.f32 %v1093, %v615
        %v1134 = vmul.f32 %v1093, %v616
        %v1135 = vmul.f32 %v1093, %v617
        %v1136 = vmul.f32 %v1093, %v618
        %v1137 = vmul.f32 %v1093, %v619
        %v1138 = vmul.f32 %v1093, %v620
        %v1139 = vmul.f32 %v1093, %v621
        %v1140 = vmul.f32 %v1093, %v622
        %v1141 = vmul.f32 %v1093, %v623
        %v1142 = vmul.f32 %v1093, %v624
        %v1143 = vmul.f32 %v1093, %v625
        %v1144 = vmul.f32 %v1093, %v626
        %v1145 = vmul.f32 %v1093, %v627
        %v1146 = vmul.f32 %v1093, %v628
        %v1147 = vmul.f32 %v1093, %v629
        %v1148 = vmul.f32 %v1093, %v630
        %v1149 = vmul.f32 %v1093, %v631
        %v1150 = vmul.f32 %v1093, %v632
        %v1151 = vmul.f32 %v1093, %v633
        %v1152 = vmul.f32 %v1093, %v634
        %v1153 = vmul.f32 %v1093, %v635
        %v1154 = vmul.f32 %v1093, %v636
        %v1155 = vmul.f32 %v1093, %v637
        %v1156 = vmul.f32 %v1093, %v638
        %v1157 = vmul.f32 %v1093, %v639
        %v1158 = vmul.f32 %v1093, %v640
        %v1159 = vmul.f32 %v1093, %v641
        %v1160 = vmul.f32 %v1093, %v642
        %v1161 = vmul.f32 %v1093, %v643
        %v1162 = vmul.f32 %v1093, %v644
        %v1163 = vmul.f32 %v1093, %v645
        %v1164 = vmul.f32 %v1093, %v646
        %v1165 = vmul.f32 %v1093, %v647
        %v1166 = vmul.f32 %v1093, %v648
        %v1167 = vmul.f32 %v1093, %v649
        %v1168 = vmul.f32 %v1093, %v650
        %v1169 = vmul.f32 %v1093, %v651
        %v1170 = vmul.f32 %v1093, %v652
        %v1171 = vmul.f32 %v1093, %v653
        %v1172 = vmul.f32 %v1093, %v654
        %v1173 = vmul.f32 %v1093, %v655
        %v1174 = vmul.f32 %v1093, %v656
        %v1175 = vmul.f32 %v1093, %v657
        %v1176 = vmul.f32 %v1093, %v658
        %v1177 = vmul.f32 %v1093, %v659
        %v1178 = vmul.f32 %v1093, %v660
        %v1179 = vmul.f32 %v1093, %v661
        %v1180 = vmul.f32 %v1093, %v662
        %v1181 = vmul.f32 %v1093, %v663
        %v1182 = vmul.f32 %v1093, %v664
        %v1183 = vmul.f32 %v1093, %v665
        %v1184 = vmul.f32 %v1093, %v666
        %v1185 = vmul.f32 %v1093, %v667
        %v1186 = vmul.f32 %v1093, %v668
        %v1187 = vmul.f32 %v1093, %v669
        %v1188 = vmul.f32 %v1093, %v670
        %v1189 = vmul.f32 %v1093, %v671
        %v1190 = vmul.f32 %v1093, %v672
        %v1191 = vmul.f32 %v1093, %v673
        %v1192 = vmul.f32 %v1093, %v674
        %v1193 = vmul.f32 %v1093, %v675
        %v1194 = vmul.f32 %v1093, %v676
        %v1195 = vmul.f32 %v1093, %v677
        %v1196 = vmul.f32 %v1093, %v678
        %v1197 = vmul.f32 %v1093, %v679
        %v1198 = vmul.f32 %v1093, %v680
        %v1199 = vmul.f32 %v1093, %v681
        %v1200 = vmul.f32 %v1093, %v682
        %v1201 = vmul.f32 %v1093, %v683
        %v1202 = vmul.f32 %v1093, %v684
        %v1203 = vmul.f32 %v1093, %v685
        %v1204 = vmul.f32 %v1093, %v686
        %v1205 = vmul.f32 %v1093, %v687
        %v1206 = vmul.f32 %v1093, %v688
        %v1207 = vmul.f32 %v1093, %v689
        %v1208 = vmul.f32 %v1093, %v690
        %v1209 = vmul.f32 %v1093, %v691
        %v1210 = vmul.f32 %v1093, %v692
        %v1211 = vmul.f32 %v1093, %v693
        %v1212 = vmul.f32 %v1093, %v694
        %v1213 = vmul.f32 %v1093, %v695
        %v1214 = vmul.f32 %v1093, %v696
        %v1215 = vmul.f32 %v1093, %v697
        %v1216 = vmul.f32 %v1093, %v698
        %v1217 = vmul.f32 %v1093, %v699
        %v1218 = vmul.f32 %v1093, %v700
        %v1219 = vmul.f32 %v1093, %v701
        %v1220 = vmul.f32 %v1093, %v702
        %v1221 = vmul.f32 %v1093, %v703
        %v1222 = vmul.f32 %v1093, %v704
        %v1223 = vmul.f32 %v1093, %v705
        %v1224 = vmul.f32 %v1093, %v706
        %v1225 = vmul.f32 %v1093, %v707
        %v1226 = vmul.f32 %v1093, %v708
        %v1227 = vmul.f32 %v1093, %v709
        %v1228 = vmul.f32 %v1093, %v710
        %v1229 = vmul.f32 %v1093, %v711
        %v1230 = vmul.f32 %v1093, %v712
        %v1231 = vmul.f32 %v1093, %v713
        %v1232 = vmul.f32 %v1093, %v714
        %v1233 = vmul.f32 %v1093, %v715
        %v1234 = vmul.f32 %v1093, %v716
        %v1235 = vmul.f32 %v1093, %v717
        %v1236 = vmul.f32 %v1093, %v718
        %v1237 = vmul.f32 %v1093, %v719
        %v1238 = vmul.f32 %v1093, %v720
        %v1239 = vmul.f32 %v1093, %v721
        %v1240 = vmul.f32 %v1093, %v722
        %v1241 = vmul.f32 %v1093, %v723
        %v1242 = vmul.f32 %v1093, %v724
        %v1243 = vmul.f32 %v1093, %v725
        %v1244 = vmul.f32 %v1093, %v726
        %v1245 = vmul.f32 %v1093, %v727
        %v1246 = vmul.f32 %v1093, %v728
        %v1247 = vmul.f32 %v1093, %v729
        %v1248 = vmul.f32 %v1093, %v730
        %v1249 = vmul.f32 %v1093, %v731
        %v1250 = vmul.f32 %v1093, %v732
        %v1251 = vmul.f32 %v1093, %v733
        %v1252 = vmul.f32 %v1093, %v734
        %v1253 = vmul.f32 %v1093, %v735
        %v1254 = vmul.f32 %v1093, %v736
        %v1255 = vmul.f32 %v1093, %v737
        %v1256 = vmul.f32 %v1093, %v738
        %v1257 = vmul.f32 %v1093, %v739
        %v1258 = vmul.f32 %v1093, %v740
        %v1259 = vmul.f32 %v1093, %v741
        %v1260 = vmul.f32 %v1093, %v742
        %v1261 = vmul.f32 %v1093, %v743
        %v1262 = vmul.f32 %v1093, %v744
        %v1263 = vmul.f32 %v1093, %v745
        %v1264 = vmul.f32 %v1093, %v746
        %v1265 = vmul.f32 %v1093, %v747
        %v1266 = vmul.f32 %v1093, %v748
        %v1267 = vmul.f32 %v1093, %v749
        %v1268 = vmul.f32 %v1093, %v750
        %v1269 = vmul.f32 %v1093, %v751
        %v1270 = vmul.f32 %v1093, %v752
        %v1271 = vmul.f32 %v1093, %v753
        %v1272 = vmul.f32 %v1093, %v754
        %v1273 = vmul.f32 %v1093, %v755
        %v1274 = vmul.f32 %v1093, %v756
        %v1275 = vmul.f32 %v1093, %v757
        %v1276 = vmul.f32 %v1093, %v758
        %v1277 = vmul.f32 %v1093, %v759
        %v1278 = vmul.f32 %v1093, %v760
        %v1279 = vmul.f32 %v1093, %v761
        %v1280 = vmul.f32 %v1093, %v762
        %v1281 = vmul.f32 %v1093, %v763
        %v1282 = vmul.f32 %v1093, %v764
        %v1283 = vmul.f32 %v1093, %v765
        %v1284 = vmul.f32 %v1093, %v766
        %v1285 = vmul.f32 %v1093, %v767
        %v1286 = vmul.f32 %v1093, %v768
        %v1287 = vmul.f32 %v1093, %v769
        %v1288 = vmul.f32 %v1093, %v770
        %v1289 = vmul.f32 %v1093, %v771
        %v1290 = vmul.f32 %v1093, %v772
        %v1291 = vmul.f32 %v1093, %v773
        %v1292 = vmul.f32 %v1093, %v774
        %v1293 = vmul.f32 %v1093, %v775
        %v1294 = vmul.f32 %v1093, %v776
        %v1295 = vmul.f32 %v1093, %v777
        %v1296 = vmul.f32 %v1093, %v778
        %v1297 = vmul.f32 %v1093, %v779
        %v1298 = vmul.f32 %v1093, %v780
        %v1299 = vmul.f32 %v1093, %v781
        %v1300 = vmul.f32 %v1093, %v782
        %v1301 = vmul.f32 %v1093, %v783
        %v1302 = vmul.f32 %v1093, %v784
        %v1303 = vmul.f32 %v1093, %v785
        %v1304 = vmul.f32 %v1093, %v786
        %v1305 = vmul.f32 %v1093, %v787
        %v1306 = vmul.f32 %v1093, %v788
        %v1307 = vmul.f32 %v1093, %v789
        %v1308 = vmul.f32 %v1093, %v790
        %v1309 = vmul.f32 %v1093, %v791
        %v1310 = vmul.f32 %v1093, %v792
        %v1311 = vmul.f32 %v1093, %v793
        %v1312 = vmul.f32 %v1093, %v794
        %v1313 = vmul.f32 %v1093, %v795
        %v1314 = vmul.f32 %v1093, %v796
        %v1315 = vmul.f32 %v1093, %v797
        %v1316 = vmul.f32 %v1093, %v798
        %v1317 = vmul.f32 %v1093, %v799
        %v1318 = vmul.f32 %v1093, %v800
        %v1319 = vmul.f32 %v1093, %v801
        %v1320 = vmul.f32 %v1093, %v802
        %v1321 = vmul.f32 %v1093, %v803
        %v1322 = vmul.f32 %v1093, %v804
        %v1323 = vmul.f32 %v1093, %v805
        %v1324 = vmul.f32 %v1093, %v806
        %v1325 = vmul.f32 %v1093, %v807
        %v1326 = vmul.f32 %v1093, %v808
        %v1327 = vmul.f32 %v1093, %v809
        %v1328 = vmul.f32 %v1093, %v810
        %v1329 = vmul.f32 %v1093, %v811
        %v1330 = vmul.f32 %v1093, %v812
        %v1331 = vmul.f32 %v1093, %v813
        %v1332 = vmul.f32 %v1093, %v814
        %v1333 = vmul.f32 %v1093, %v815
        %v1334 = vmul.f32 %v1093, %v816
        %v1335 = vmul.f32 %v1093, %v817
        %v1336 = vmul.f32 %v1093, %v818
        %v1337 = vmul.f32 %v1093, %v819
        %v1338 = vmul.f32 %v1093, %v820
        %v1339 = vmul.f32 %v1093, %v821
        %v1340 = vmul.f32 %v1093, %v822
        %v1341 = vmul.f32 %v1093, %v823
        %v1342 = vmul.f32 %v1093, %v824
        %v1343 = vmul.f32 %v1093, %v825
        %v1344 = vmul.f32 %v1093, %v826
        %v1345 = vmul.f32 %v1093, %v827
        %v1346 = vmul.f32 %v1093, %v828
        %v1347 = vmul.f32 %v1093, %v829
        %v1348 = vmul.f32 %v1093, %v830
        %v1349 = vmul.f32 %v1093, %v831
        %v1350 = vmul.f32 %v1093, %v832
        %v1351 = vsub.f32 %v836, %v1095
        %v1352 = vsub.f32 %v837, %v1096
        %v1353 = vsub.f32 %v838, %v1097
        %v1354 = vsub.f32 %v839, %v1098
        %v1355 = vsub.f32 %v840, %v1099
        %v1356 = vsub.f32 %v841, %v1100
        %v1357 = vsub.f32 %v842, %v1101
        %v1358 = vsub.f32 %v843, %v1102
        %v1359 = vsub.f32 %v844, %v1103
        %v1360 = vsub.f32 %v845, %v1104
        %v1361 = vsub.f32 %v846, %v1105
        %v1362 = vsub.f32 %v847, %v1106
        %v1363 = vsub.f32 %v848, %v1107
        %v1364 = vsub.f32 %v849, %v1108
        %v1365 = vsub.f32 %v850, %v1109
        %v1366 = vsub.f32 %v851, %v1110
        %v1367 = vsub.f32 %v852, %v1111
        %v1368 = vsub.f32 %v853, %v1112
        %v1369 = vsub.f32 %v854, %v1113
        %v1370 = vsub.f32 %v855, %v1114
        %v1371 = vsub.f32 %v856, %v1115
        %v1372 = vsub.f32 %v857, %v1116
        %v1373 = vsub.f32 %v858, %v1117
        %v1374 = vsub.f32 %v859, %v1118
        %v1375 = vsub.f32 %v860, %v1119
        %v1376 = vsub.f32 %v861, %v1120
        %v1377 = vsub.f32 %v862, %v1121
        %v1378 = vsub.f32 %v863, %v1122
        %v1379 = vsub.f32 %v864, %v1123
        %v1380 = vsub.f32 %v865, %v1124
        %v1381 = vsub.f32 %v866, %v1125
        %v1382 = vsub.f32 %v867, %v1126
        %v1383 = vsub.f32 %v868, %v1127
        %v1384 = vsub.f32 %v869, %v1128
        %v1385 = vsub.f32 %v870, %v1129
        %v1386 = vsub.f32 %v871, %v1130
        %v1387 = vsub.f32 %v872, %v1131
        %v1388 = vsub.f32 %v873, %v1132
        %v1389 = vsub.f32 %v874, %v1133
        %v1390 = vsub.f32 %v875, %v1134
        %v1391 = vsub.f32 %v876, %v1135
        %v1392 = vsub.f32 %v877, %v1136
        %v1393 = vsub.f32 %v878, %v1137
        %v1394 = vsub.f32 %v879, %v1138
        %v1395 = vsub.f32 %v880, %v1139
        %v1396 = vsub.f32 %v881, %v1140
        %v1397 = vsub.f32 %v882, %v1141
        %v1398 = vsub.f32 %v883, %v1142
        %v1399 = vsub.f32 %v884, %v1143
        %v1400 = vsub.f32 %v885, %v1144
        %v1401 = vsub.f32 %v886, %v1145
        %v1402 = vsub.f32 %v887, %v1146
        %v1403 = vsub.f32 %v888, %v1147
        %v1404 = vsub.f32 %v889, %v1148
        %v1405 = vsub.f32 %v890, %v1149
        %v1406 = vsub.f32 %v891, %v1150
        %v1407 = vsub.f32 %v892, %v1151
        %v1408 = vsub.f32 %v893, %v1152
        %v1409 = vsub.f32 %v894, %v1153
        %v1410 = vsub.f32 %v895, %v1154
        %v1411 = vsub.f32 %v896, %v1155
        %v1412 = vsub.f32 %v897, %v1156
        %v1413 = vsub.f32 %v898, %v1157
        %v1414 = vsub.f32 %v899, %v1158
        %v1415 = vsub.f32 %v900, %v1159
        %v1416 = vsub.f32 %v901, %v1160
        %v1417 = vsub.f32 %v902, %v1161
        %v1418 = vsub.f32 %v903, %v1162
        %v1419 = vsub.f32 %v904, %v1163
        %v1420 = vsub.f32 %v905, %v1164
        %v1421 = vsub.f32 %v906, %v1165
        %v1422 = vsub.f32 %v907, %v1166
        %v1423 = vsub.f32 %v908, %v1167
        %v1424 = vsub.f32 %v909, %v1168
        %v1425 = vsub.f32 %v910, %v1169
        %v1426 = vsub.f32 %v911, %v1170
        %v1427 = vsub.f32 %v912, %v1171
        %v1428 = vsub.f32 %v913, %v1172
        %v1429 = vsub.f32 %v914, %v1173
        %v1430 = vsub.f32 %v915, %v1174
        %v1431 = vsub.f32 %v916, %v1175
        %v1432 = vsub.f32 %v917, %v1176
        %v1433 = vsub.f32 %v918, %v1177
        %v1434 = vsub.f32 %v919, %v1178
        %v1435 = vsub.f32 %v920, %v1179
        %v1436 = vsub.f32 %v921, %v1180
        %v1437 = vsub.f32 %v922, %v1181
        %v1438 = vsub.f32 %v923, %v1182
        %v1439 = vsub.f32 %v924, %v1183
        %v1440 = vsub.f32 %v925, %v1184
        %v1441 = vsub.f32 %v926, %v1185
        %v1442 = vsub.f32 %v927, %v1186
        %v1443 = vsub.f32 %v928, %v1187
        %v1444 = vsub.f32 %v929, %v1188
        %v1445 = vsub.f32 %v930, %v1189
        %v1446 = vsub.f32 %v931, %v1190
        %v1447 = vsub.f32 %v932, %v1191
        %v1448 = vsub.f32 %v933, %v1192
        %v1449 = vsub.f32 %v934, %v1193
        %v1450 = vsub.f32 %v935, %v1194
        %v1451 = vsub.f32 %v936, %v1195
        %v1452 = vsub.f32 %v937, %v1196
        %v1453 = vsub.f32 %v938, %v1197
        %v1454 = vsub.f32 %v939, %v1198
        %v1455 = vsub.f32 %v940, %v1199
        %v1456 = vsub.f32 %v941, %v1200
        %v1457 = vsub.f32 %v942, %v1201
        %v1458 = vsub.f32 %v943, %v1202
        %v1459 = vsub.f32 %v944, %v1203
        %v1460 = vsub.f32 %v945, %v1204
        %v1461 = vsub.f32 %v946, %v1205
        %v1462 = vsub.f32 %v947, %v1206
        %v1463 = vsub.f32 %v948, %v1207
        %v1464 = vsub.f32 %v949, %v1208
        %v1465 = vsub.f32 %v950, %v1209
        %v1466 = vsub.f32 %v951, %v1210
        %v1467 = vsub.f32 %v952, %v1211
        %v1468 = vsub.f32 %v953, %v1212
        %v1469 = vsub.f32 %v954, %v1213
        %v1470 = vsub.f32 %v955, %v1214
        %v1471 = vsub.f32 %v956, %v1215
        %v1472 = vsub.f32 %v957, %v1216
        %v1473 = vsub.f32 %v958, %v1217
        %v1474 = vsub.f32 %v959, %v1218
        %v1475 = vsub.f32 %v960, %v1219
        %v1476 = vsub.f32 %v961, %v1220
        %v1477 = vsub.f32 %v962, %v1221
        %v1478 = vsub.f32 %v963, %v1222
        %v1479 = vsub.f32 %v964, %v1223
        %v1480 = vsub.f32 %v965, %v1224
        %v1481 = vsub.f32 %v966, %v1225
        %v1482 = vsub.f32 %v967, %v1226
        %v1483 = vsub.f32 %v968, %v1227
        %v1484 = vsub.f32 %v969, %v1228
        %v1485 = vsub.f32 %v970, %v1229
        %v1486 = vsub.f32 %v971, %v1230
        %v1487 = vsub.f32 %v972, %v1231
        %v1488 = vsub.f32 %v973, %v1232
        %v1489 = vsub.f32 %v974, %v1233
        %v1490 = vsub.f32 %v975, %v1234
        %v1491 = vsub.f32 %v976, %v1235
        %v1492 = vsub.f32 %v977, %v1236
        %v1493 = vsub.f32 %v978, %v1237
        %v1494 = vsub.f32 %v979, %v1238
        %v1495 = vsub.f32 %v980, %v1239
        %v1496 = vsub.f32 %v981, %v1240
        %v1497 = vsub.f32 %v982, %v1241
        %v1498 = vsub.f32 %v983, %v1242
        %v1499 = vsub.f32 %v984, %v1243
        %v1500 = vsub.f32 %v985, %v1244
        %v1501 = vsub.f32 %v986, %v1245
        %v1502 = vsub.f32 %v987, %v1246
        %v1503 = vsub.f32 %v988, %v1247
        %v1504 = vsub.f32 %v989, %v1248
        %v1505 = vsub.f32 %v990, %v1249
        %v1506 = vsub.f32 %v991, %v1250
        %v1507 = vsub.f32 %v992, %v1251
        %v1508 = vsub.f32 %v993, %v1252
        %v1509 = vsub.f32 %v994, %v1253
        %v1510 = vsub.f32 %v995, %v1254
        %v1511 = vsub.f32 %v996, %v1255
        %v1512 = vsub.f32 %v997, %v1256
        %v1513 = vsub.f32 %v998, %v1257
        %v1514 = vsub.f32 %v999, %v1258
        %v1515 = vsub.f32 %v1000, %v1259
        %v1516 = vsub.f32 %v1001, %v1260
        %v1517 = vsub.f32 %v1002, %v1261
        %v1518 = vsub.f32 %v1003, %v1262
        %v1519 = vsub.f32 %v1004, %v1263
        %v1520 = vsub.f32 %v1005, %v1264
        %v1521 = vsub.f32 %v1006, %v1265
        %v1522 = vsub.f32 %v1007, %v1266
        %v1523 = vsub.f32 %v1008, %v1267
        %v1524 = vsub.f32 %v1009, %v1268
        %v1525 = vsub.f32 %v1010, %v1269
        %v1526 = vsub.f32 %v1011, %v1270
        %v1527 = vsub.f32 %v1012, %v1271
        %v1528 = vsub.f32 %v1013, %v1272
        %v1529 = vsub.f32 %v1014, %v1273
        %v1530 = vsub.f32 %v1015, %v1274
        %v1531 = vsub.f32 %v1016, %v1275
        %v1532 = vsub.f32 %v1017, %v1276
        %v1533 = vsub.f32 %v1018, %v1277
        %v1534 = vsub.f32 %v1019, %v1278
        %v1535 = vsub.f32 %v1020, %v1279
        %v1536 = vsub.f32 %v1021, %v1280
        %v1537 = vsub.f32 %v1022, %v1281
        %v1538 = vsub.f32 %v1023, %v1282
        %v1539 = vsub.f32 %v1024, %v1283
        %v1540 = vsub.f32 %v1025, %v1284
        %v1541 = vsub.f32 %v1026, %v1285
        %v1542 = vsub.f32 %v1027, %v1286
        %v1543 = vsub.f32 %v1028, %v1287
        %v1544 = vsub.f32 %v1029, %v1288
        %v1545 = vsub.f32 %v1030, %v1289
        %v1546 = vsub.f32 %v1031, %v1290
        %v1547 = vsub.f32 %v1032, %v1291
        %v1548 = vsub.f32 %v1033, %v1292
        %v1549 = vsub.f32 %v1034, %v1293
        %v1550 = vsub.f32 %v1035, %v1294
        %v1551 = vsub.f32 %v1036, %v1295
        %v1552 = vsub.f32 %v1037, %v1296
        %v1553 = vsub.f32 %v1038, %v1297
        %v1554 = vsub.f32 %v1039, %v1298
        %v1555 = vsub.f32 %v1040, %v1299
        %v1556 = vsub.f32 %v1041, %v1300
        %v1557 = vsub.f32 %v1042, %v1301
        %v1558 = vsub.f32 %v1043, %v1302
        %v1559 = vsub.f32 %v1044, %v1303
        %v1560 = vsub.f32 %v1045, %v1304
        %v1561 = vsub.f32 %v1046, %v1305
        %v1562 = vsub.f32 %v1047, %v1306
        %v1563 = vsub.f32 %v1048, %v1307
        %v1564 = vsub.f32 %v1049, %v1308
        %v1565 = vsub.f32 %v1050, %v1309
        %v1566 = vsub.f32 %v1051, %v1310
        %v1567 = vsub.f32 %v1052, %v1311
        %v1568 = vsub.f32 %v1053, %v1312
        %v1569 = vsub.f32 %v1054, %v1313
        %v1570 = vsub.f32 %v1055, %v1314
        %v1571 = vsub.f32 %v1056, %v1315
        %v1572 = vsub.f32 %v1057, %v1316
        %v1573 = vsub.f32 %v1058, %v1317
        %v1574 = vsub.f32 %v1059, %v1318
        %v1575 = vsub.f32 %v1060, %v1319
        %v1576 = vsub.f32 %v1061, %v1320
        %v1577 = vsub.f32 %v1062, %v1321
        %v1578 = vsub.f32 %v1063, %v1322
        %v1579 = vsub.f32 %v1064, %v1323
        %v1580 = vsub.f32 %v1065, %v1324
        %v1581 = vsub.f32 %v1066, %v1325
        %v1582 = vsub.f32 %v1067, %v1326
        %v1583 = vsub.f32 %v1068, %v1327
        %v1584 = vsub.f32 %v1069, %v1328
        %v1585 = vsub.f32 %v1070, %v1329
        %v1586 = vsub.f32 %v1071, %v1330
        %v1587 = vsub.f32 %v1072, %v1331
        %v1588 = vsub.f32 %v1073, %v1332
        %v1589 = vsub.f32 %v1074, %v1333
        %v1590 = vsub.f32 %v1075, %v1334
        %v1591 = vsub.f32 %v1076, %v1335
        %v1592 = vsub.f32 %v1077, %v1336
        %v1593 = vsub.f32 %v1078, %v1337
        %v1594 = vsub.f32 %v1079, %v1338
        %v1595 = vsub.f32 %v1080, %v1339
        %v1596 = vsub.f32 %v1081, %v1340
        %v1597 = vsub.f32 %v1082, %v1341
        %v1598 = vsub.f32 %v1083, %v1342
        %v1599 = vsub.f32 %v1084, %v1343
        %v1600 = vsub.f32 %v1085, %v1344
        %v1601 = vsub.f32 %v1086, %v1345
        %v1602 = vsub.f32 %v1087, %v1346
        %v1603 = vsub.f32 %v1088, %v1347
        %v1604 = vsub.f32 %v1089, %v1348
        %v1605 = vsub.f32 %v1090, %v1349
        %v1606 = vsub.f32 %v1091, %v1350
        %1607 = vst [vmem:[%s309] sm:$0xff] %v1351
        %1608 = vst [vmem:[%s309 + $0x8] sm:$0xff] %v1352
        %1609 = vst [vmem:[%s309 + $0x10] sm:$0xff] %v1353
        %1610 = vst [vmem:[%s309 + $0x18] sm:$0xff] %v1354
        %1611 = vst [vmem:[%s309 + $0x20] sm:$0xff] %v1355
        %1612 = vst [vmem:[%s309 + $0x28] sm:$0xff] %v1356
        %1613 = vst [vmem:[%s309 + $0x30] sm:$0xff] %v1357
        %1614 = vst [vmem:[%s309 + $0x38] sm:$0xff] %v1358
        %1615 = vst [vmem:[%s309 + $0x40] sm:$0xff] %v1359
        %1616 = vst [vmem:[%s309 + $0x48] sm:$0xff] %v1360
        %1617 = vst [vmem:[%s309 + $0x50] sm:$0xff] %v1361
        %1618 = vst [vmem:[%s309 + $0x58] sm:$0xff] %v1362
        %1619 = vst [vmem:[%s309 + $0x60] sm:$0xff] %v1363
        %1620 = vst [vmem:[%s309 + $0x68] sm:$0xff] %v1364
        %1621 = vst [vmem:[%s309 + $0x70] sm:$0xff] %v1365
        %1622 = vst [vmem:[%s309 + $0x78] sm:$0xff] %v1366
        %1623 = vst [vmem:[%s309 + $0x80] sm:$0xff] %v1367
        %1624 = vst [vmem:[%s309 + $0x88] sm:$0xff] %v1368
        %1625 = vst [vmem:[%s309 + $0x90] sm:$0xff] %v1369
        %1626 = vst [vmem:[%s309 + $0x98] sm:$0xff] %v1370
        %1627 = vst [vmem:[%s309 + $0xa0] sm:$0xff] %v1371
        %1628 = vst [vmem:[%s309 + $0xa8] sm:$0xff] %v1372
        %1629 = vst [vmem:[%s309 + $0xb0] sm:$0xff] %v1373
        %1630 = vst [vmem:[%s309 + $0xb8] sm:$0xff] %v1374
        %1631 = vst [vmem:[%s309 + $0xc0] sm:$0xff] %v1375
        %1632 = vst [vmem:[%s309 + $0xc8] sm:$0xff] %v1376
        %1633 = vst [vmem:[%s309 + $0xd0] sm:$0xff] %v1377
        %1634 = vst [vmem:[%s309 + $0xd8] sm:$0xff] %v1378
        %1635 = vst [vmem:[%s309 + $0xe0] sm:$0xff] %v1379
        %1636 = vst [vmem:[%s309 + $0xe8] sm:$0xff] %v1380
        %1637 = vst [vmem:[%s309 + $0xf0] sm:$0xff] %v1381
        %1638 = vst [vmem:[%s309 + $0xf8] sm:$0xff] %v1382
        %1639 = vst [vmem:[%s309 + $0x100] sm:$0xff] %v1383
        %1640 = vst [vmem:[%s309 + $0x108] sm:$0xff] %v1384
        %1641 = vst [vmem:[%s309 + $0x110] sm:$0xff] %v1385
        %1642 = vst [vmem:[%s309 + $0x118] sm:$0xff] %v1386
        %1643 = vst [vmem:[%s309 + $0x120] sm:$0xff] %v1387
        %1644 = vst [vmem:[%s309 + $0x128] sm:$0xff] %v1388
        %1645 = vst [vmem:[%s309 + $0x130] sm:$0xff] %v1389
        %1646 = vst [vmem:[%s309 + $0x138] sm:$0xff] %v1390
        %1647 = vst [vmem:[%s309 + $0x140] sm:$0xff] %v1391
        %1648 = vst [vmem:[%s309 + $0x148] sm:$0xff] %v1392
        %1649 = vst [vmem:[%s309 + $0x150] sm:$0xff] %v1393
        %1650 = vst [vmem:[%s309 + $0x158] sm:$0xff] %v1394
        %1651 = vst [vmem:[%s309 + $0x160] sm:$0xff] %v1395
        %1652 = vst [vmem:[%s309 + $0x168] sm:$0xff] %v1396
        %1653 = vst [vmem:[%s309 + $0x170] sm:$0xff] %v1397
        %1654 = vst [vmem:[%s309 + $0x178] sm:$0xff] %v1398
        %1655 = vst [vmem:[%s309 + $0x180] sm:$0xff] %v1399
        %1656 = vst [vmem:[%s309 + $0x188] sm:$0xff] %v1400
        %1657 = vst [vmem:[%s309 + $0x190] sm:$0xff] %v1401
        %1658 = vst [vmem:[%s309 + $0x198] sm:$0xff] %v1402
        %1659 = vst [vmem:[%s309 + $0x1a0] sm:$0xff] %v1403
        %1660 = vst [vmem:[%s309 + $0x1a8] sm:$0xff] %v1404
        %1661 = vst [vmem:[%s309 + $0x1b0] sm:$0xff] %v1405
        %1662 = vst [vmem:[%s309 + $0x1b8] sm:$0xff] %v1406
        %1663 = vst [vmem:[%s309 + $0x1c0] sm:$0xff] %v1407
        %1664 = vst [vmem:[%s309 + $0x1c8] sm:$0xff] %v1408
        %1665 = vst [vmem:[%s309 + $0x1d0] sm:$0xff] %v1409
        %1666 = vst [vmem:[%s309 + $0x1d8] sm:$0xff] %v1410
        %1667 = vst [vmem:[%s309 + $0x1e0] sm:$0xff] %v1411
        %1668 = vst [vmem:[%s309 + $0x1e8] sm:$0xff] %v1412
        %1669 = vst [vmem:[%s309 + $0x1f0] sm:$0xff] %v1413
        %1670 = vst [vmem:[%s309 + $0x1f8] sm:$0xff] %v1414
        %1671 = vst [vmem:[%s309 + $0x200] sm:$0xff] %v1415
        %1672 = vst [vmem:[%s309 + $0x208] sm:$0xff] %v1416
        %1673 = vst [vmem:[%s309 + $0x210] sm:$0xff] %v1417
        %1674 = vst [vmem:[%s309 + $0x218] sm:$0xff] %v1418
        %1675 = vst [vmem:[%s309 + $0x220] sm:$0xff] %v1419
        %1676 = vst [vmem:[%s309 + $0x228] sm:$0xff] %v1420
        %1677 = vst [vmem:[%s309 + $0x230] sm:$0xff] %v1421
        %1678 = vst [vmem:[%s309 + $0x238] sm:$0xff] %v1422
        %1679 = vst [vmem:[%s309 + $0x240] sm:$0xff] %v1423
        %1680 = vst [vmem:[%s309 + $0x248] sm:$0xff] %v1424
        %1681 = vst [vmem:[%s309 + $0x250] sm:$0xff] %v1425
        %1682 = vst [vmem:[%s309 + $0x258] sm:$0xff] %v1426
        %1683 = vst [vmem:[%s309 + $0x260] sm:$0xff] %v1427
        %1684 = vst [vmem:[%s309 + $0x268] sm:$0xff] %v1428
        %1685 = vst [vmem:[%s309 + $0x270] sm:$0xff] %v1429
        %1686 = vst [vmem:[%s309 + $0x278] sm:$0xff] %v1430
        %1687 = vst [vmem:[%s309 + $0x280] sm:$0xff] %v1431
        %1688 = vst [vmem:[%s309 + $0x288] sm:$0xff] %v1432
        %1689 = vst [vmem:[%s309 + $0x290] sm:$0xff] %v1433
        %1690 = vst [vmem:[%s309 + $0x298] sm:$0xff] %v1434
        %1691 = vst [vmem:[%s309 + $0x2a0] sm:$0xff] %v1435
        %1692 = vst [vmem:[%s309 + $0x2a8] sm:$0xff] %v1436
        %1693 = vst [vmem:[%s309 + $0x2b0] sm:$0xff] %v1437
        %1694 = vst [vmem:[%s309 + $0x2b8] sm:$0xff] %v1438
        %1695 = vst [vmem:[%s309 + $0x2c0] sm:$0xff] %v1439
        %1696 = vst [vmem:[%s309 + $0x2c8] sm:$0xff] %v1440
        %1697 = vst [vmem:[%s309 + $0x2d0] sm:$0xff] %v1441
        %1698 = vst [vmem:[%s309 + $0x2d8] sm:$0xff] %v1442
        %1699 = vst [vmem:[%s309 + $0x2e0] sm:$0xff] %v1443
        %1700 = vst [vmem:[%s309 + $0x2e8] sm:$0xff] %v1444
        %1701 = vst [vmem:[%s309 + $0x2f0] sm:$0xff] %v1445
        %1702 = vst [vmem:[%s309 + $0x2f8] sm:$0xff] %v1446
        %1703 = vst [vmem:[%s309 + $0x300] sm:$0xff] %v1447
        %1704 = vst [vmem:[%s309 + $0x308] sm:$0xff] %v1448
        %1705 = vst [vmem:[%s309 + $0x310] sm:$0xff] %v1449
        %1706 = vst [vmem:[%s309 + $0x318] sm:$0xff] %v1450
        %1707 = vst [vmem:[%s309 + $0x320] sm:$0xff] %v1451
        %1708 = vst [vmem:[%s309 + $0x328] sm:$0xff] %v1452
        %1709 = vst [vmem:[%s309 + $0x330] sm:$0xff] %v1453
        %1710 = vst [vmem:[%s309 + $0x338] sm:$0xff] %v1454
        %1711 = vst [vmem:[%s309 + $0x340] sm:$0xff] %v1455
        %1712 = vst [vmem:[%s309 + $0x348] sm:$0xff] %v1456
        %1713 = vst [vmem:[%s309 + $0x350] sm:$0xff] %v1457
        %1714 = vst [vmem:[%s309 + $0x358] sm:$0xff] %v1458
        %1715 = vst [vmem:[%s309 + $0x360] sm:$0xff] %v1459
        %1716 = vst [vmem:[%s309 + $0x368] sm:$0xff] %v1460
        %1717 = vst [vmem:[%s309 + $0x370] sm:$0xff] %v1461
        %1718 = vst [vmem:[%s309 + $0x378] sm:$0xff] %v1462
        %1719 = vst [vmem:[%s309 + $0x380] sm:$0xff] %v1463
        %1720 = vst [vmem:[%s309 + $0x388] sm:$0xff] %v1464
        %1721 = vst [vmem:[%s309 + $0x390] sm:$0xff] %v1465
        %1722 = vst [vmem:[%s309 + $0x398] sm:$0xff] %v1466
        %1723 = vst [vmem:[%s309 + $0x3a0] sm:$0xff] %v1467
        %1724 = vst [vmem:[%s309 + $0x3a8] sm:$0xff] %v1468
        %1725 = vst [vmem:[%s309 + $0x3b0] sm:$0xff] %v1469
        %1726 = vst [vmem:[%s309 + $0x3b8] sm:$0xff] %v1470
        %1727 = vst [vmem:[%s309 + $0x3c0] sm:$0xff] %v1471
        %1728 = vst [vmem:[%s309 + $0x3c8] sm:$0xff] %v1472
        %1729 = vst [vmem:[%s309 + $0x3d0] sm:$0xff] %v1473
        %1730 = vst [vmem:[%s309 + $0x3d8] sm:$0xff] %v1474
        %1731 = vst [vmem:[%s309 + $0x3e0] sm:$0xff] %v1475
        %1732 = vst [vmem:[%s309 + $0x3e8] sm:$0xff] %v1476
        %1733 = vst [vmem:[%s309 + $0x3f0] sm:$0xff] %v1477
        %1734 = vst [vmem:[%s309 + $0x3f8] sm:$0xff] %v1478
        %1735 = vst [vmem:[%s309 + $0x400] sm:$0xff] %v1479
        %1736 = vst [vmem:[%s309 + $0x408] sm:$0xff] %v1480
        %1737 = vst [vmem:[%s309 + $0x410] sm:$0xff] %v1481
        %1738 = vst [vmem:[%s309 + $0x418] sm:$0xff] %v1482
        %1739 = vst [vmem:[%s309 + $0x420] sm:$0xff] %v1483
        %1740 = vst [vmem:[%s309 + $0x428] sm:$0xff] %v1484
        %1741 = vst [vmem:[%s309 + $0x430] sm:$0xff] %v1485
        %1742 = vst [vmem:[%s309 + $0x438] sm:$0xff] %v1486
        %1743 = vst [vmem:[%s309 + $0x440] sm:$0xff] %v1487
        %1744 = vst [vmem:[%s309 + $0x448] sm:$0xff] %v1488
        %1745 = vst [vmem:[%s309 + $0x450] sm:$0xff] %v1489
        %1746 = vst [vmem:[%s309 + $0x458] sm:$0xff] %v1490
        %1747 = vst [vmem:[%s309 + $0x460] sm:$0xff] %v1491
        %1748 = vst [vmem:[%s309 + $0x468] sm:$0xff] %v1492
        %1749 = vst [vmem:[%s309 + $0x470] sm:$0xff] %v1493
        %1750 = vst [vmem:[%s309 + $0x478] sm:$0xff] %v1494
        %1751 = vst [vmem:[%s309 + $0x480] sm:$0xff] %v1495
        %1752 = vst [vmem:[%s309 + $0x488] sm:$0xff] %v1496
        %1753 = vst [vmem:[%s309 + $0x490] sm:$0xff] %v1497
        %1754 = vst [vmem:[%s309 + $0x498] sm:$0xff] %v1498
        %1755 = vst [vmem:[%s309 + $0x4a0] sm:$0xff] %v1499
        %1756 = vst [vmem:[%s309 + $0x4a8] sm:$0xff] %v1500
        %1757 = vst [vmem:[%s309 + $0x4b0] sm:$0xff] %v1501
        %1758 = vst [vmem:[%s309 + $0x4b8] sm:$0xff] %v1502
        %1759 = vst [vmem:[%s309 + $0x4c0] sm:$0xff] %v1503
        %1760 = vst [vmem:[%s309 + $0x4c8] sm:$0xff] %v1504
        %1761 = vst [vmem:[%s309 + $0x4d0] sm:$0xff] %v1505
        %1762 = vst [vmem:[%s309 + $0x4d8] sm:$0xff] %v1506
        %1763 = vst [vmem:[%s309 + $0x4e0] sm:$0xff] %v1507
        %1764 = vst [vmem:[%s309 + $0x4e8] sm:$0xff] %v1508
        %1765 = vst [vmem:[%s309 + $0x4f0] sm:$0xff] %v1509
        %1766 = vst [vmem:[%s309 + $0x4f8] sm:$0xff] %v1510
        %1767 = vst [vmem:[%s309 + $0x500] sm:$0xff] %v1511
        %1768 = vst [vmem:[%s309 + $0x508] sm:$0xff] %v1512
        %1769 = vst [vmem:[%s309 + $0x510] sm:$0xff] %v1513
        %1770 = vst [vmem:[%s309 + $0x518] sm:$0xff] %v1514
        %1771 = vst [vmem:[%s309 + $0x520] sm:$0xff] %v1515
        %1772 = vst [vmem:[%s309 + $0x528] sm:$0xff] %v1516
        %1773 = vst [vmem:[%s309 + $0x530] sm:$0xff] %v1517
        %1774 = vst [vmem:[%s309 + $0x538] sm:$0xff] %v1518
        %1775 = vst [vmem:[%s309 + $0x540] sm:$0xff] %v1519
        %1776 = vst [vmem:[%s309 + $0x548] sm:$0xff] %v1520
        %1777 = vst [vmem:[%s309 + $0x550] sm:$0xff] %v1521
        %1778 = vst [vmem:[%s309 + $0x558] sm:$0xff] %v1522
        %1779 = vst [vmem:[%s309 + $0x560] sm:$0xff] %v1523
        %1780 = vst [vmem:[%s309 + $0x568] sm:$0xff] %v1524
        %1781 = vst [vmem:[%s309 + $0x570] sm:$0xff] %v1525
        %1782 = vst [vmem:[%s309 + $0x578] sm:$0xff] %v1526
        %1783 = vst [vmem:[%s309 + $0x580] sm:$0xff] %v1527
        %1784 = vst [vmem:[%s309 + $0x588] sm:$0xff] %v1528
        %1785 = vst [vmem:[%s309 + $0x590] sm:$0xff] %v1529
        %1786 = vst [vmem:[%s309 + $0x598] sm:$0xff] %v1530
        %1787 = vst [vmem:[%s309 + $0x5a0] sm:$0xff] %v1531
        %1788 = vst [vmem:[%s309 + $0x5a8] sm:$0xff] %v1532
        %1789 = vst [vmem:[%s309 + $0x5b0] sm:$0xff] %v1533
        %1790 = vst [vmem:[%s309 + $0x5b8] sm:$0xff] %v1534
        %1791 = vst [vmem:[%s309 + $0x5c0] sm:$0xff] %v1535
        %1792 = vst [vmem:[%s309 + $0x5c8] sm:$0xff] %v1536
        %1793 = vst [vmem:[%s309 + $0x5d0] sm:$0xff] %v1537
        %1794 = vst [vmem:[%s309 + $0x5d8] sm:$0xff] %v1538
        %1795 = vst [vmem:[%s309 + $0x5e0] sm:$0xff] %v1539
        %1796 = vst [vmem:[%s309 + $0x5e8] sm:$0xff] %v1540
        %1797 = vst [vmem:[%s309 + $0x5f0] sm:$0xff] %v1541
        %1798 = vst [vmem:[%s309 + $0x5f8] sm:$0xff] %v1542
        %1799 = vst [vmem:[%s309 + $0x600] sm:$0xff] %v1543
        %1800 = vst [vmem:[%s309 + $0x608] sm:$0xff] %v1544
        %1801 = vst [vmem:[%s309 + $0x610] sm:$0xff] %v1545
        %1802 = vst [vmem:[%s309 + $0x618] sm:$0xff] %v1546
        %1803 = vst [vmem:[%s309 + $0x620] sm:$0xff] %v1547
        %1804 = vst [vmem:[%s309 + $0x628] sm:$0xff] %v1548
        %1805 = vst [vmem:[%s309 + $0x630] sm:$0xff] %v1549
        %1806 = vst [vmem:[%s309 + $0x638] sm:$0xff] %v1550
        %1807 = vst [vmem:[%s309 + $0x640] sm:$0xff] %v1551
        %1808 = vst [vmem:[%s309 + $0x648] sm:$0xff] %v1552
        %1809 = vst [vmem:[%s309 + $0x650] sm:$0xff] %v1553
        %1810 = vst [vmem:[%s309 + $0x658] sm:$0xff] %v1554
        %1811 = vst [vmem:[%s309 + $0x660] sm:$0xff] %v1555
        %1812 = vst [vmem:[%s309 + $0x668] sm:$0xff] %v1556
        %1813 = vst [vmem:[%s309 + $0x670] sm:$0xff] %v1557
        %1814 = vst [vmem:[%s309 + $0x678] sm:$0xff] %v1558
        %1815 = vst [vmem:[%s309 + $0x680] sm:$0xff] %v1559
        %1816 = vst [vmem:[%s309 + $0x688] sm:$0xff] %v1560
        %1817 = vst [vmem:[%s309 + $0x690] sm:$0xff] %v1561
        %1818 = vst [vmem:[%s309 + $0x698] sm:$0xff] %v1562
        %1819 = vst [vmem:[%s309 + $0x6a0] sm:$0xff] %v1563
        %1820 = vst [vmem:[%s309 + $0x6a8] sm:$0xff] %v1564
        %1821 = vst [vmem:[%s309 + $0x6b0] sm:$0xff] %v1565
        %1822 = vst [vmem:[%s309 + $0x6b8] sm:$0xff] %v1566
        %1823 = vst [vmem:[%s309 + $0x6c0] sm:$0xff] %v1567
        %1824 = vst [vmem:[%s309 + $0x6c8] sm:$0xff] %v1568
        %1825 = vst [vmem:[%s309 + $0x6d0] sm:$0xff] %v1569
        %1826 = vst [vmem:[%s309 + $0x6d8] sm:$0xff] %v1570
        %1827 = vst [vmem:[%s309 + $0x6e0] sm:$0xff] %v1571
        %1828 = vst [vmem:[%s309 + $0x6e8] sm:$0xff] %v1572
        %1829 = vst [vmem:[%s309 + $0x6f0] sm:$0xff] %v1573
        %1830 = vst [vmem:[%s309 + $0x6f8] sm:$0xff] %v1574
        %1831 = vst [vmem:[%s309 + $0x700] sm:$0xff] %v1575
        %1832 = vst [vmem:[%s309 + $0x708] sm:$0xff] %v1576
        %1833 = vst [vmem:[%s309 + $0x710] sm:$0xff] %v1577
        %1834 = vst [vmem:[%s309 + $0x718] sm:$0xff] %v1578
        %1835 = vst [vmem:[%s309 + $0x720] sm:$0xff] %v1579
        %1836 = vst [vmem:[%s309 + $0x728] sm:$0xff] %v1580
        %1837 = vst [vmem:[%s309 + $0x730] sm:$0xff] %v1581
        %1838 = vst [vmem:[%s309 + $0x738] sm:$0xff] %v1582
        %1839 = vst [vmem:[%s309 + $0x740] sm:$0xff] %v1583
        %1840 = vst [vmem:[%s309 + $0x748] sm:$0xff] %v1584
        %1841 = vst [vmem:[%s309 + $0x750] sm:$0xff] %v1585
        %1842 = vst [vmem:[%s309 + $0x758] sm:$0xff] %v1586
        %1843 = vst [vmem:[%s309 + $0x760] sm:$0xff] %v1587
        %1844 = vst [vmem:[%s309 + $0x768] sm:$0xff] %v1588
        %1845 = vst [vmem:[%s309 + $0x770] sm:$0xff] %v1589
        %1846 = vst [vmem:[%s309 + $0x778] sm:$0xff] %v1590
        %1847 = vst [vmem:[%s309 + $0x780] sm:$0xff] %v1591
        %1848 = vst [vmem:[%s309 + $0x788] sm:$0xff] %v1592
        %1849 = vst [vmem:[%s309 + $0x790] sm:$0xff] %v1593
        %1850 = vst [vmem:[%s309 + $0x798] sm:$0xff] %v1594
        %1851 = vst [vmem:[%s309 + $0x7a0] sm:$0xff] %v1595
        %1852 = vst [vmem:[%s309 + $0x7a8] sm:$0xff] %v1596
        %1853 = vst [vmem:[%s309 + $0x7b0] sm:$0xff] %v1597
        %1854 = vst [vmem:[%s309 + $0x7b8] sm:$0xff] %v1598
        %1855 = vst [vmem:[%s309 + $0x7c0] sm:$0xff] %v1599
        %1856 = vst [vmem:[%s309 + $0x7c8] sm:$0xff] %v1600
        %1857 = vst [vmem:[%s309 + $0x7d0] sm:$0xff] %v1601
        %1858 = vst [vmem:[%s309 + $0x7d8] sm:$0xff] %v1602
        %1859 = vst [vmem:[%s309 + $0x7e0] sm:$0xff] %v1603
        %1860 = vst [vmem:[%s309 + $0x7e8] sm:$0xff] %v1604
        %1861 = vst [vmem:[%s309 + $0x7f0] sm:$0xff] %v1605
        %1862 = vst [vmem:[%s309 + $0x7f8] sm:$0xff] %v1606
        %v1863 = vmul.f32 %v1093, %v321
        %v1864 = vmul.f32 %v1093, %v322
        %v1865 = vmul.f32 %v1093, %v323
        %v1866 = vmul.f32 %v1093, %v324
        %v1867 = vmul.f32 %v1093, %v325
        %v1868 = vmul.f32 %v1093, %v326
        %v1869 = vmul.f32 %v1093, %v327
        %v1870 = vmul.f32 %v1093, %v328
        %v1871 = vmul.f32 %v1093, %v329
        %v1872 = vmul.f32 %v1093, %v330
        %v1873 = vmul.f32 %v1093, %v331
        %v1874 = vmul.f32 %v1093, %v332
        %v1875 = vmul.f32 %v1093, %v333
        %v1876 = vmul.f32 %v1093, %v334
        %v1877 = vmul.f32 %v1093, %v335
        %v1878 = vmul.f32 %v1093, %v336
        %v1879 = vmul.f32 %v1093, %v337
        %v1880 = vmul.f32 %v1093, %v338
        %v1881 = vmul.f32 %v1093, %v339
        %v1882 = vmul.f32 %v1093, %v340
        %v1883 = vmul.f32 %v1093, %v341
        %v1884 = vmul.f32 %v1093, %v342
        %v1885 = vmul.f32 %v1093, %v343
        %v1886 = vmul.f32 %v1093, %v344
        %v1887 = vmul.f32 %v1093, %v345
        %v1888 = vmul.f32 %v1093, %v346
        %v1889 = vmul.f32 %v1093, %v347
        %v1890 = vmul.f32 %v1093, %v348
        %v1891 = vmul.f32 %v1093, %v349
        %v1892 = vmul.f32 %v1093, %v350
        %v1893 = vmul.f32 %v1093, %v351
        %v1894 = vmul.f32 %v1093, %v352
        %v1895 = vmul.f32 %v1093, %v353
        %v1896 = vmul.f32 %v1093, %v354
        %v1897 = vmul.f32 %v1093, %v355
        %v1898 = vmul.f32 %v1093, %v356
        %v1899 = vmul.f32 %v1093, %v357
        %v1900 = vmul.f32 %v1093, %v358
        %v1901 = vmul.f32 %v1093, %v359
        %v1902 = vmul.f32 %v1093, %v360
        %v1903 = vmul.f32 %v1093, %v361
        %v1904 = vmul.f32 %v1093, %v362
        %v1905 = vmul.f32 %v1093, %v363
        %v1906 = vmul.f32 %v1093, %v364
        %v1907 = vmul.f32 %v1093, %v365
        %v1908 = vmul.f32 %v1093, %v366
        %v1909 = vmul.f32 %v1093, %v367
        %v1910 = vmul.f32 %v1093, %v368
        %v1911 = vmul.f32 %v1093, %v369
        %v1912 = vmul.f32 %v1093, %v370
        %v1913 = vmul.f32 %v1093, %v371
        %v1914 = vmul.f32 %v1093, %v372
        %v1915 = vmul.f32 %v1093, %v373
        %v1916 = vmul.f32 %v1093, %v374
        %v1917 = vmul.f32 %v1093, %v375
        %v1918 = vmul.f32 %v1093, %v376
        %v1919 = vmul.f32 %v1093, %v377
        %v1920 = vmul.f32 %v1093, %v378
        %v1921 = vmul.f32 %v1093, %v379
        %v1922 = vmul.f32 %v1093, %v380
        %v1923 = vmul.f32 %v1093, %v381
        %v1924 = vmul.f32 %v1093, %v382
        %v1925 = vmul.f32 %v1093, %v383
        %v1926 = vmul.f32 %v1093, %v384
        %v1927 = vmul.f32 %v1093, %v385
        %v1928 = vmul.f32 %v1093, %v386
        %v1929 = vmul.f32 %v1093, %v387
        %v1930 = vmul.f32 %v1093, %v388
        %v1931 = vmul.f32 %v1093, %v389
        %v1932 = vmul.f32 %v1093, %v390
        %v1933 = vmul.f32 %v1093, %v391
        %v1934 = vmul.f32 %v1093, %v392
        %v1935 = vmul.f32 %v1093, %v393
        %v1936 = vmul.f32 %v1093, %v394
        %v1937 = vmul.f32 %v1093, %v395
        %v1938 = vmul.f32 %v1093, %v396
        %v1939 = vmul.f32 %v1093, %v397
        %v1940 = vmul.f32 %v1093, %v398
        %v1941 = vmul.f32 %v1093, %v399
        %v1942 = vmul.f32 %v1093, %v400
        %v1943 = vmul.f32 %v1093, %v401
        %v1944 = vmul.f32 %v1093, %v402
        %v1945 = vmul.f32 %v1093, %v403
        %v1946 = vmul.f32 %v1093, %v404
        %v1947 = vmul.f32 %v1093, %v405
        %v1948 = vmul.f32 %v1093, %v406
        %v1949 = vmul.f32 %v1093, %v407
        %v1950 = vmul.f32 %v1093, %v408
        %v1951 = vmul.f32 %v1093, %v409
        %v1952 = vmul.f32 %v1093, %v410
        %v1953 = vmul.f32 %v1093, %v411
        %v1954 = vmul.f32 %v1093, %v412
        %v1955 = vmul.f32 %v1093, %v413
        %v1956 = vmul.f32 %v1093, %v414
        %v1957 = vmul.f32 %v1093, %v415
        %v1958 = vmul.f32 %v1093, %v416
        %v1959 = vmul.f32 %v1093, %v417
        %v1960 = vmul.f32 %v1093, %v418
        %v1961 = vmul.f32 %v1093, %v419
        %v1962 = vmul.f32 %v1093, %v420
        %v1963 = vmul.f32 %v1093, %v421
        %v1964 = vmul.f32 %v1093, %v422
        %v1965 = vmul.f32 %v1093, %v423
        %v1966 = vmul.f32 %v1093, %v424
        %v1967 = vmul.f32 %v1093, %v425
        %v1968 = vmul.f32 %v1093, %v426
        %v1969 = vmul.f32 %v1093, %v427
        %v1970 = vmul.f32 %v1093, %v428
        %v1971 = vmul.f32 %v1093, %v429
        %v1972 = vmul.f32 %v1093, %v430
        %v1973 = vmul.f32 %v1093, %v431
        %v1974 = vmul.f32 %v1093, %v432
        %v1975 = vmul.f32 %v1093, %v433
        %v1976 = vmul.f32 %v1093, %v434
        %v1977 = vmul.f32 %v1093, %v435
        %v1978 = vmul.f32 %v1093, %v436
        %v1979 = vmul.f32 %v1093, %v437
        %v1980 = vmul.f32 %v1093, %v438
        %v1981 = vmul.f32 %v1093, %v439
        %v1982 = vmul.f32 %v1093, %v440
        %v1983 = vmul.f32 %v1093, %v441
        %v1984 = vmul.f32 %v1093, %v442
        %v1985 = vmul.f32 %v1093, %v443
        %v1986 = vmul.f32 %v1093, %v444
        %v1987 = vmul.f32 %v1093, %v445
        %v1988 = vmul.f32 %v1093, %v446
        %v1989 = vmul.f32 %v1093, %v447
        %v1990 = vmul.f32 %v1093, %v448
        %v1991 = vmul.f32 %v1093, %v449
        %v1992 = vmul.f32 %v1093, %v450
        %v1993 = vmul.f32 %v1093, %v451
        %v1994 = vmul.f32 %v1093, %v452
        %v1995 = vmul.f32 %v1093, %v453
        %v1996 = vmul.f32 %v1093, %v454
        %v1997 = vmul.f32 %v1093, %v455
        %v1998 = vmul.f32 %v1093, %v456
        %v1999 = vmul.f32 %v1093, %v457
        %v2000 = vmul.f32 %v1093, %v458
        %v2001 = vmul.f32 %v1093, %v459
        %v2002 = vmul.f32 %v1093, %v460
        %v2003 = vmul.f32 %v1093, %v461
        %v2004 = vmul.f32 %v1093, %v462
        %v2005 = vmul.f32 %v1093, %v463
        %v2006 = vmul.f32 %v1093, %v464
        %v2007 = vmul.f32 %v1093, %v465
        %v2008 = vmul.f32 %v1093, %v466
        %v2009 = vmul.f32 %v1093, %v467
        %v2010 = vmul.f32 %v1093, %v468
        %v2011 = vmul.f32 %v1093, %v469
        %v2012 = vmul.f32 %v1093, %v470
        %v2013 = vmul.f32 %v1093, %v471
        %v2014 = vmul.f32 %v1093, %v472
        %v2015 = vmul.f32 %v1093, %v473
        %v2016 = vmul.f32 %v1093, %v474
        %v2017 = vmul.f32 %v1093, %v475
        %v2018 = vmul.f32 %v1093, %v476
        %v2019 = vmul.f32 %v1093, %v477
        %v2020 = vmul.f32 %v1093, %v478
        %v2021 = vmul.f32 %v1093, %v479
        %v2022 = vmul.f32 %v1093, %v480
        %v2023 = vmul.f32 %v1093, %v481
        %v2024 = vmul.f32 %v1093, %v482
        %v2025 = vmul.f32 %v1093, %v483
        %v2026 = vmul.f32 %v1093, %v484
        %v2027 = vmul.f32 %v1093, %v485
        %v2028 = vmul.f32 %v1093, %v486
        %v2029 = vmul.f32 %v1093, %v487
        %v2030 = vmul.f32 %v1093, %v488
        %v2031 = vmul.f32 %v1093, %v489
        %v2032 = vmul.f32 %v1093, %v490
        %v2033 = vmul.f32 %v1093, %v491
        %v2034 = vmul.f32 %v1093, %v492
        %v2035 = vmul.f32 %v1093, %v493
        %v2036 = vmul.f32 %v1093, %v494
        %v2037 = vmul.f32 %v1093, %v495
        %v2038 = vmul.f32 %v1093, %v496
        %v2039 = vmul.f32 %v1093, %v497
        %v2040 = vmul.f32 %v1093, %v498
        %v2041 = vmul.f32 %v1093, %v499
        %v2042 = vmul.f32 %v1093, %v500
        %v2043 = vmul.f32 %v1093, %v501
        %v2044 = vmul.f32 %v1093, %v502
        %v2045 = vmul.f32 %v1093, %v503
        %v2046 = vmul.f32 %v1093, %v504
        %v2047 = vmul.f32 %v1093, %v505
        %v2048 = vmul.f32 %v1093, %v506
        %v2049 = vmul.f32 %v1093, %v507
        %v2050 = vmul.f32 %v1093, %v508
        %v2051 = vmul.f32 %v1093, %v509
        %v2052 = vmul.f32 %v1093, %v510
        %v2053 = vmul.f32 %v1093, %v511
        %v2054 = vmul.f32 %v1093, %v512
        %v2055 = vmul.f32 %v1093, %v513
        %v2056 = vmul.f32 %v1093, %v514
        %v2057 = vmul.f32 %v1093, %v515
        %v2058 = vmul.f32 %v1093, %v516
        %v2059 = vmul.f32 %v1093, %v517
        %v2060 = vmul.f32 %v1093, %v518
        %v2061 = vmul.f32 %v1093, %v519
        %v2062 = vmul.f32 %v1093, %v520
        %v2063 = vmul.f32 %v1093, %v521
        %v2064 = vmul.f32 %v1093, %v522
        %v2065 = vmul.f32 %v1093, %v523
        %v2066 = vmul.f32 %v1093, %v524
        %v2067 = vmul.f32 %v1093, %v525
        %v2068 = vmul.f32 %v1093, %v526
        %v2069 = vmul.f32 %v1093, %v527
        %v2070 = vmul.f32 %v1093, %v528
        %v2071 = vmul.f32 %v1093, %v529
        %v2072 = vmul.f32 %v1093, %v530
        %v2073 = vmul.f32 %v1093, %v531
        %v2074 = vmul.f32 %v1093, %v532
        %v2075 = vmul.f32 %v1093, %v533
        %v2076 = vmul.f32 %v1093, %v534
        %v2077 = vmul.f32 %v1093, %v535
        %v2078 = vmul.f32 %v1093, %v536
        %v2079 = vmul.f32 %v1093, %v537
        %v2080 = vmul.f32 %v1093, %v538
        %v2081 = vmul.f32 %v1093, %v539
        %v2082 = vmul.f32 %v1093, %v540
        %v2083 = vmul.f32 %v1093, %v541
        %v2084 = vmul.f32 %v1093, %v542
        %v2085 = vmul.f32 %v1093, %v543
        %v2086 = vmul.f32 %v1093, %v544
        %v2087 = vmul.f32 %v1093, %v545
        %v2088 = vmul.f32 %v1093, %v546
        %v2089 = vmul.f32 %v1093, %v547
        %v2090 = vmul.f32 %v1093, %v548
        %v2091 = vmul.f32 %v1093, %v549
        %v2092 = vmul.f32 %v1093, %v550
        %v2093 = vmul.f32 %v1093, %v551
        %v2094 = vmul.f32 %v1093, %v552
        %v2095 = vmul.f32 %v1093, %v553
        %v2096 = vmul.f32 %v1093, %v554
        %v2097 = vmul.f32 %v1093, %v555
        %v2098 = vmul.f32 %v1093, %v556
        %v2099 = vmul.f32 %v1093, %v557
        %v2100 = vmul.f32 %v1093, %v558
        %v2101 = vmul.f32 %v1093, %v559
        %v2102 = vmul.f32 %v1093, %v560
        %v2103 = vmul.f32 %v1093, %v561
        %v2104 = vmul.f32 %v1093, %v562
        %v2105 = vmul.f32 %v1093, %v563
        %v2106 = vmul.f32 %v1093, %v564
        %v2107 = vmul.f32 %v1093, %v565
        %v2108 = vmul.f32 %v1093, %v566
        %v2109 = vmul.f32 %v1093, %v567
        %v2110 = vmul.f32 %v1093, %v568
        %v2111 = vmul.f32 %v1093, %v569
        %v2112 = vmul.f32 %v1093, %v570
        %v2113 = vmul.f32 %v1093, %v571
        %v2114 = vmul.f32 %v1093, %v572
        %v2115 = vmul.f32 %v1093, %v573
        %v2116 = vmul.f32 %v1093, %v574
        %v2117 = vmul.f32 %v1093, %v575
        %v2118 = vmul.f32 %v1093, %v576
        %v2119 = vmul.f32 %v834, %v577
        %v2120 = vmul.f32 %v834, %v578
        %v2121 = vmul.f32 %v834, %v579
        %v2122 = vmul.f32 %v834, %v580
        %v2123 = vmul.f32 %v834, %v581
        %v2124 = vmul.f32 %v834, %v582
        %v2125 = vmul.f32 %v834, %v583
        %v2126 = vmul.f32 %v834, %v584
        %v2127 = vmul.f32 %v834, %v585
        %v2128 = vmul.f32 %v834, %v586
        %v2129 = vmul.f32 %v834, %v587
        %v2130 = vmul.f32 %v834, %v588
        %v2131 = vmul.f32 %v834, %v589
        %v2132 = vmul.f32 %v834, %v590
        %v2133 = vmul.f32 %v834, %v591
        %v2134 = vmul.f32 %v834, %v592
        %v2135 = vmul.f32 %v834, %v593
        %v2136 = vmul.f32 %v834, %v594
        %v2137 = vmul.f32 %v834, %v595
        %v2138 = vmul.f32 %v834, %v596
        %v2139 = vmul.f32 %v834, %v597
        %v2140 = vmul.f32 %v834, %v598
        %v2141 = vmul.f32 %v834, %v599
        %v2142 = vmul.f32 %v834, %v600
        %v2143 = vmul.f32 %v834, %v601
        %v2144 = vmul.f32 %v834, %v602
        %v2145 = vmul.f32 %v834, %v603
        %v2146 = vmul.f32 %v834, %v604
        %v2147 = vmul.f32 %v834, %v605
        %v2148 = vmul.f32 %v834, %v606
        %v2149 = vmul.f32 %v834, %v607
        %v2150 = vmul.f32 %v834, %v608
        %v2151 = vmul.f32 %v834, %v609
        %v2152 = vmul.f32 %v834, %v610
        %v2153 = vmul.f32 %v834, %v611
        %v2154 = vmul.f32 %v834, %v612
        %v2155 = vmul.f32 %v834, %v613
        %v2156 = vmul.f32 %v834, %v614
        %v2157 = vmul.f32 %v834, %v615
        %v2158 = vmul.f32 %v834, %v616
        %v2159 = vmul.f32 %v834, %v617
        %v2160 = vmul.f32 %v834, %v618
        %v2161 = vmul.f32 %v834, %v619
        %v2162 = vmul.f32 %v834, %v620
        %v2163 = vmul.f32 %v834, %v621
        %v2164 = vmul.f32 %v834, %v622
        %v2165 = vmul.f32 %v834, %v623
        %v2166 = vmul.f32 %v834, %v624
        %v2167 = vmul.f32 %v834, %v625
        %v2168 = vmul.f32 %v834, %v626
        %v2169 = vmul.f32 %v834, %v627
        %v2170 = vmul.f32 %v834, %v628
        %v2171 = vmul.f32 %v834, %v629
        %v2172 = vmul.f32 %v834, %v630
        %v2173 = vmul.f32 %v834, %v631
        %v2174 = vmul.f32 %v834, %v632
        %v2175 = vmul.f32 %v834, %v633
        %v2176 = vmul.f32 %v834, %v634
        %v2177 = vmul.f32 %v834, %v635
        %v2178 = vmul.f32 %v834, %v636
        %v2179 = vmul.f32 %v834, %v637
        %v2180 = vmul.f32 %v834, %v638
        %v2181 = vmul.f32 %v834, %v639
        %v2182 = vmul.f32 %v834, %v640
        %v2183 = vmul.f32 %v834, %v641
        %v2184 = vmul.f32 %v834, %v642
        %v2185 = vmul.f32 %v834, %v643
        %v2186 = vmul.f32 %v834, %v644
        %v2187 = vmul.f32 %v834, %v645
        %v2188 = vmul.f32 %v834, %v646
        %v2189 = vmul.f32 %v834, %v647
        %v2190 = vmul.f32 %v834, %v648
        %v2191 = vmul.f32 %v834, %v649
        %v2192 = vmul.f32 %v834, %v650
        %v2193 = vmul.f32 %v834, %v651
        %v2194 = vmul.f32 %v834, %v652
        %v2195 = vmul.f32 %v834, %v653
        %v2196 = vmul.f32 %v834, %v654
        %v2197 = vmul.f32 %v834, %v655
        %v2198 = vmul.f32 %v834, %v656
        %v2199 = vmul.f32 %v834, %v657
        %v2200 = vmul.f32 %v834, %v658
        %v2201 = vmul.f32 %v834, %v659
        %v2202 = vmul.f32 %v834, %v660
        %v2203 = vmul.f32 %v834, %v661
        %v2204 = vmul.f32 %v834, %v662
        %v2205 = vmul.f32 %v834, %v663
        %v2206 = vmul.f32 %v834, %v664
        %v2207 = vmul.f32 %v834, %v665
        %v2208 = vmul.f32 %v834, %v666
        %v2209 = vmul.f32 %v834, %v667
        %v2210 = vmul.f32 %v834, %v668
        %v2211 = vmul.f32 %v834, %v669
        %v2212 = vmul.f32 %v834, %v670
        %v2213 = vmul.f32 %v834, %v671
        %v2214 = vmul.f32 %v834, %v672
        %v2215 = vmul.f32 %v834, %v673
        %v2216 = vmul.f32 %v834, %v674
        %v2217 = vmul.f32 %v834, %v675
        %v2218 = vmul.f32 %v834, %v676
        %v2219 = vmul.f32 %v834, %v677
        %v2220 = vmul.f32 %v834, %v678
        %v2221 = vmul.f32 %v834, %v679
        %v2222 = vmul.f32 %v834, %v680
        %v2223 = vmul.f32 %v834, %v681
        %v2224 = vmul.f32 %v834, %v682
        %v2225 = vmul.f32 %v834, %v683
        %v2226 = vmul.f32 %v834, %v684
        %v2227 = vmul.f32 %v834, %v685
        %v2228 = vmul.f32 %v834, %v686
        %v2229 = vmul.f32 %v834, %v687
        %v2230 = vmul.f32 %v834, %v688
        %v2231 = vmul.f32 %v834, %v689
        %v2232 = vmul.f32 %v834, %v690
        %v2233 = vmul.f32 %v834, %v691
        %v2234 = vmul.f32 %v834, %v692
        %v2235 = vmul.f32 %v834, %v693
        %v2236 = vmul.f32 %v834, %v694
        %v2237 = vmul.f32 %v834, %v695
        %v2238 = vmul.f32 %v834, %v696
        %v2239 = vmul.f32 %v834, %v697
        %v2240 = vmul.f32 %v834, %v698
        %v2241 = vmul.f32 %v834, %v699
        %v2242 = vmul.f32 %v834, %v700
        %v2243 = vmul.f32 %v834, %v701
        %v2244 = vmul.f32 %v834, %v702
        %v2245 = vmul.f32 %v834, %v703
        %v2246 = vmul.f32 %v834, %v704
        %v2247 = vmul.f32 %v834, %v705
        %v2248 = vmul.f32 %v834, %v706
        %v2249 = vmul.f32 %v834, %v707
        %v2250 = vmul.f32 %v834, %v708
        %v2251 = vmul.f32 %v834, %v709
        %v2252 = vmul.f32 %v834, %v710
        %v2253 = vmul.f32 %v834, %v711
        %v2254 = vmul.f32 %v834, %v712
        %v2255 = vmul.f32 %v834, %v713
        %v2256 = vmul.f32 %v834, %v714
        %v2257 = vmul.f32 %v834, %v715
        %v2258 = vmul.f32 %v834, %v716
        %v2259 = vmul.f32 %v834, %v717
        %v2260 = vmul.f32 %v834, %v718
        %v2261 = vmul.f32 %v834, %v719
        %v2262 = vmul.f32 %v834, %v720
        %v2263 = vmul.f32 %v834, %v721
        %v2264 = vmul.f32 %v834, %v722
        %v2265 = vmul.f32 %v834, %v723
        %v2266 = vmul.f32 %v834, %v724
        %v2267 = vmul.f32 %v834, %v725
        %v2268 = vmul.f32 %v834, %v726
        %v2269 = vmul.f32 %v834, %v727
        %v2270 = vmul.f32 %v834, %v728
        %v2271 = vmul.f32 %v834, %v729
        %v2272 = vmul.f32 %v834, %v730
        %v2273 = vmul.f32 %v834, %v731
        %v2274 = vmul.f32 %v834, %v732
        %v2275 = vmul.f32 %v834, %v733
        %v2276 = vmul.f32 %v834, %v734
        %v2277 = vmul.f32 %v834, %v735
        %v2278 = vmul.f32 %v834, %v736
        %v2279 = vmul.f32 %v834, %v737
        %v2280 = vmul.f32 %v834, %v738
        %v2281 = vmul.f32 %v834, %v739
        %v2282 = vmul.f32 %v834, %v740
        %v2283 = vmul.f32 %v834, %v741
        %v2284 = vmul.f32 %v834, %v742
        %v2285 = vmul.f32 %v834, %v743
        %v2286 = vmul.f32 %v834, %v744
        %v2287 = vmul.f32 %v834, %v745
        %v2288 = vmul.f32 %v834, %v746
        %v2289 = vmul.f32 %v834, %v747
        %v2290 = vmul.f32 %v834, %v748
        %v2291 = vmul.f32 %v834, %v749
        %v2292 = vmul.f32 %v834, %v750
        %v2293 = vmul.f32 %v834, %v751
        %v2294 = vmul.f32 %v834, %v752
        %v2295 = vmul.f32 %v834, %v753
        %v2296 = vmul.f32 %v834, %v754
        %v2297 = vmul.f32 %v834, %v755
        %v2298 = vmul.f32 %v834, %v756
        %v2299 = vmul.f32 %v834, %v757
        %v2300 = vmul.f32 %v834, %v758
        %v2301 = vmul.f32 %v834, %v759
        %v2302 = vmul.f32 %v834, %v760
        %v2303 = vmul.f32 %v834, %v761
        %v2304 = vmul.f32 %v834, %v762
        %v2305 = vmul.f32 %v834, %v763
        %v2306 = vmul.f32 %v834, %v764
        %v2307 = vmul.f32 %v834, %v765
        %v2308 = vmul.f32 %v834, %v766
        %v2309 = vmul.f32 %v834, %v767
        %v2310 = vmul.f32 %v834, %v768
        %v2311 = vmul.f32 %v834, %v769
        %v2312 = vmul.f32 %v834, %v770
        %v2313 = vmul.f32 %v834, %v771
        %v2314 = vmul.f32 %v834, %v772
        %v2315 = vmul.f32 %v834, %v773
        %v2316 = vmul.f32 %v834, %v774
        %v2317 = vmul.f32 %v834, %v775
        %v2318 = vmul.f32 %v834, %v776
        %v2319 = vmul.f32 %v834, %v777
        %v2320 = vmul.f32 %v834, %v778
        %v2321 = vmul.f32 %v834, %v779
        %v2322 = vmul.f32 %v834, %v780
        %v2323 = vmul.f32 %v834, %v781
        %v2324 = vmul.f32 %v834, %v782
        %v2325 = vmul.f32 %v834, %v783
        %v2326 = vmul.f32 %v834, %v784
        %v2327 = vmul.f32 %v834, %v785
        %v2328 = vmul.f32 %v834, %v786
        %v2329 = vmul.f32 %v834, %v787
        %v2330 = vmul.f32 %v834, %v788
        %v2331 = vmul.f32 %v834, %v789
        %v2332 = vmul.f32 %v834, %v790
        %v2333 = vmul.f32 %v834, %v791
        %v2334 = vmul.f32 %v834, %v792
        %v2335 = vmul.f32 %v834, %v793
        %v2336 = vmul.f32 %v834, %v794
        %v2337 = vmul.f32 %v834, %v795
        %v2338 = vmul.f32 %v834, %v796
        %v2339 = vmul.f32 %v834, %v797
        %v2340 = vmul.f32 %v834, %v798
        %v2341 = vmul.f32 %v834, %v799
        %v2342 = vmul.f32 %v834, %v800
        %v2343 = vmul.f32 %v834, %v801
        %v2344 = vmul.f32 %v834, %v802
        %v2345 = vmul.f32 %v834, %v803
        %v2346 = vmul.f32 %v834, %v804
        %v2347 = vmul.f32 %v834, %v805
        %v2348 = vmul.f32 %v834, %v806
        %v2349 = vmul.f32 %v834, %v807
        %v2350 = vmul.f32 %v834, %v808
        %v2351 = vmul.f32 %v834, %v809
        %v2352 = vmul.f32 %v834, %v810
        %v2353 = vmul.f32 %v834, %v811
        %v2354 = vmul.f32 %v834, %v812
        %v2355 = vmul.f32 %v834, %v813
        %v2356 = vmul.f32 %v834, %v814
        %v2357 = vmul.f32 %v834, %v815
        %v2358 = vmul.f32 %v834, %v816
        %v2359 = vmul.f32 %v834, %v817
        %v2360 = vmul.f32 %v834, %v818
        %v2361 = vmul.f32 %v834, %v819
        %v2362 = vmul.f32 %v834, %v820
        %v2363 = vmul.f32 %v834, %v821
        %v2364 = vmul.f32 %v834, %v822
        %v2365 = vmul.f32 %v834, %v823
        %v2366 = vmul.f32 %v834, %v824
        %v2367 = vmul.f32 %v834, %v825
        %v2368 = vmul.f32 %v834, %v826
        %v2369 = vmul.f32 %v834, %v827
        %v2370 = vmul.f32 %v834, %v828
        %v2371 = vmul.f32 %v834, %v829
        %v2372 = vmul.f32 %v834, %v830
        %v2373 = vmul.f32 %v834, %v831
        %v2374 = vmul.f32 %v834, %v832
        %v2375 = vadd.f32 %v1863, %v2119
        %v2376 = vadd.f32 %v1864, %v2120
        %v2377 = vadd.f32 %v1865, %v2121
        %v2378 = vadd.f32 %v1866, %v2122
        %v2379 = vadd.f32 %v1867, %v2123
        %v2380 = vadd.f32 %v1868, %v2124
        %v2381 = vadd.f32 %v1869, %v2125
        %v2382 = vadd.f32 %v1870, %v2126
        %v2383 = vadd.f32 %v1871, %v2127
        %v2384 = vadd.f32 %v1872, %v2128
        %v2385 = vadd.f32 %v1873, %v2129
        %v2386 = vadd.f32 %v1874, %v2130
        %v2387 = vadd.f32 %v1875, %v2131
        %v2388 = vadd.f32 %v1876, %v2132
        %v2389 = vadd.f32 %v1877, %v2133
        %v2390 = vadd.f32 %v1878, %v2134
        %v2391 = vadd.f32 %v1879, %v2135
        %v2392 = vadd.f32 %v1880, %v2136
        %v2393 = vadd.f32 %v1881, %v2137
        %v2394 = vadd.f32 %v1882, %v2138
        %v2395 = vadd.f32 %v1883, %v2139
        %v2396 = vadd.f32 %v1884, %v2140
        %v2397 = vadd.f32 %v1885, %v2141
        %v2398 = vadd.f32 %v1886, %v2142
        %v2399 = vadd.f32 %v1887, %v2143
        %v2400 = vadd.f32 %v1888, %v2144
        %v2401 = vadd.f32 %v1889, %v2145
        %v2402 = vadd.f32 %v1890, %v2146
        %v2403 = vadd.f32 %v1891, %v2147
        %v2404 = vadd.f32 %v1892, %v2148
        %v2405 = vadd.f32 %v1893, %v2149
        %v2406 = vadd.f32 %v1894, %v2150
        %v2407 = vadd.f32 %v1895, %v2151
        %v2408 = vadd.f32 %v1896, %v2152
        %v2409 = vadd.f32 %v1897, %v2153
        %v2410 = vadd.f32 %v1898, %v2154
        %v2411 = vadd.f32 %v1899, %v2155
        %v2412 = vadd.f32 %v1900, %v2156
        %v2413 = vadd.f32 %v1901, %v2157
        %v2414 = vadd.f32 %v1902, %v2158
        %v2415 = vadd.f32 %v1903, %v2159
        %v2416 = vadd.f32 %v1904, %v2160
        %v2417 = vadd.f32 %v1905, %v2161
        %v2418 = vadd.f32 %v1906, %v2162
        %v2419 = vadd.f32 %v1907, %v2163
        %v2420 = vadd.f32 %v1908, %v2164
        %v2421 = vadd.f32 %v1909, %v2165
        %v2422 = vadd.f32 %v1910, %v2166
        %v2423 = vadd.f32 %v1911, %v2167
        %v2424 = vadd.f32 %v1912, %v2168
        %v2425 = vadd.f32 %v1913, %v2169
        %v2426 = vadd.f32 %v1914, %v2170
        %v2427 = vadd.f32 %v1915, %v2171
        %v2428 = vadd.f32 %v1916, %v2172
        %v2429 = vadd.f32 %v1917, %v2173
        %v2430 = vadd.f32 %v1918, %v2174
        %v2431 = vadd.f32 %v1919, %v2175
        %v2432 = vadd.f32 %v1920, %v2176
        %v2433 = vadd.f32 %v1921, %v2177
        %v2434 = vadd.f32 %v1922, %v2178
        %v2435 = vadd.f32 %v1923, %v2179
        %v2436 = vadd.f32 %v1924, %v2180
        %v2437 = vadd.f32 %v1925, %v2181
        %v2438 = vadd.f32 %v1926, %v2182
        %v2439 = vadd.f32 %v1927, %v2183
        %v2440 = vadd.f32 %v1928, %v2184
        %v2441 = vadd.f32 %v1929, %v2185
        %v2442 = vadd.f32 %v1930, %v2186
        %v2443 = vadd.f32 %v1931, %v2187
        %v2444 = vadd.f32 %v1932, %v2188
        %v2445 = vadd.f32 %v1933, %v2189
        %v2446 = vadd.f32 %v1934, %v2190
        %v2447 = vadd.f32 %v1935, %v2191
        %v2448 = vadd.f32 %v1936, %v2192
        %v2449 = vadd.f32 %v1937, %v2193
        %v2450 = vadd.f32 %v1938, %v2194
        %v2451 = vadd.f32 %v1939, %v2195
        %v2452 = vadd.f32 %v1940, %v2196
        %v2453 = vadd.f32 %v1941, %v2197
        %v2454 = vadd.f32 %v1942, %v2198
        %v2455 = vadd.f32 %v1943, %v2199
        %v2456 = vadd.f32 %v1944, %v2200
        %v2457 = vadd.f32 %v1945, %v2201
        %v2458 = vadd.f32 %v1946, %v2202
        %v2459 = vadd.f32 %v1947, %v2203
        %v2460 = vadd.f32 %v1948, %v2204
        %v2461 = vadd.f32 %v1949, %v2205
        %v2462 = vadd.f32 %v1950, %v2206
        %v2463 = vadd.f32 %v1951, %v2207
        %v2464 = vadd.f32 %v1952, %v2208
        %v2465 = vadd.f32 %v1953, %v2209
        %v2466 = vadd.f32 %v1954, %v2210
        %v2467 = vadd.f32 %v1955, %v2211
        %v2468 = vadd.f32 %v1956, %v2212
        %v2469 = vadd.f32 %v1957, %v2213
        %v2470 = vadd.f32 %v1958, %v2214
        %v2471 = vadd.f32 %v1959, %v2215
        %v2472 = vadd.f32 %v1960, %v2216
        %v2473 = vadd.f32 %v1961, %v2217
        %v2474 = vadd.f32 %v1962, %v2218
        %v2475 = vadd.f32 %v1963, %v2219
        %v2476 = vadd.f32 %v1964, %v2220
        %v2477 = vadd.f32 %v1965, %v2221
        %v2478 = vadd.f32 %v1966, %v2222
        %v2479 = vadd.f32 %v1967, %v2223
        %v2480 = vadd.f32 %v1968, %v2224
        %v2481 = vadd.f32 %v1969, %v2225
        %v2482 = vadd.f32 %v1970, %v2226
        %v2483 = vadd.f32 %v1971, %v2227
        %v2484 = vadd.f32 %v1972, %v2228
        %v2485 = vadd.f32 %v1973, %v2229
        %v2486 = vadd.f32 %v1974, %v2230
        %v2487 = vadd.f32 %v1975, %v2231
        %v2488 = vadd.f32 %v1976, %v2232
        %v2489 = vadd.f32 %v1977, %v2233
        %v2490 = vadd.f32 %v1978, %v2234
        %v2491 = vadd.f32 %v1979, %v2235
        %v2492 = vadd.f32 %v1980, %v2236
        %v2493 = vadd.f32 %v1981, %v2237
        %v2494 = vadd.f32 %v1982, %v2238
        %v2495 = vadd.f32 %v1983, %v2239
        %v2496 = vadd.f32 %v1984, %v2240
        %v2497 = vadd.f32 %v1985, %v2241
        %v2498 = vadd.f32 %v1986, %v2242
        %v2499 = vadd.f32 %v1987, %v2243
        %v2500 = vadd.f32 %v1988, %v2244
        %v2501 = vadd.f32 %v1989, %v2245
        %v2502 = vadd.f32 %v1990, %v2246
        %v2503 = vadd.f32 %v1991, %v2247
        %v2504 = vadd.f32 %v1992, %v2248
        %v2505 = vadd.f32 %v1993, %v2249
        %v2506 = vadd.f32 %v1994, %v2250
        %v2507 = vadd.f32 %v1995, %v2251
        %v2508 = vadd.f32 %v1996, %v2252
        %v2509 = vadd.f32 %v1997, %v2253
        %v2510 = vadd.f32 %v1998, %v2254
        %v2511 = vadd.f32 %v1999, %v2255
        %v2512 = vadd.f32 %v2000, %v2256
        %v2513 = vadd.f32 %v2001, %v2257
        %v2514 = vadd.f32 %v2002, %v2258
        %v2515 = vadd.f32 %v2003, %v2259
        %v2516 = vadd.f32 %v2004, %v2260
        %v2517 = vadd.f32 %v2005, %v2261
        %v2518 = vadd.f32 %v2006, %v2262
        %v2519 = vadd.f32 %v2007, %v2263
        %v2520 = vadd.f32 %v2008, %v2264
        %v2521 = vadd.f32 %v2009, %v2265
        %v2522 = vadd.f32 %v2010, %v2266
        %v2523 = vadd.f32 %v2011, %v2267
        %v2524 = vadd.f32 %v2012, %v2268
        %v2525 = vadd.f32 %v2013, %v2269
        %v2526 = vadd.f32 %v2014, %v2270
        %v2527 = vadd.f32 %v2015, %v2271
        %v2528 = vadd.f32 %v2016, %v2272
        %v2529 = vadd.f32 %v2017, %v2273
        %v2530 = vadd.f32 %v2018, %v2274
        %v2531 = vadd.f32 %v2019, %v2275
        %v2532 = vadd.f32 %v2020, %v2276
        %v2533 = vadd.f32 %v2021, %v2277
        %v2534 = vadd.f32 %v2022, %v2278
        %v2535 = vadd.f32 %v2023, %v2279
        %v2536 = vadd.f32 %v2024, %v2280
        %v2537 = vadd.f32 %v2025, %v2281
        %v2538 = vadd.f32 %v2026, %v2282
        %v2539 = vadd.f32 %v2027, %v2283
        %v2540 = vadd.f32 %v2028, %v2284
        %v2541 = vadd.f32 %v2029, %v2285
        %v2542 = vadd.f32 %v2030, %v2286
        %v2543 = vadd.f32 %v2031, %v2287
        %v2544 = vadd.f32 %v2032, %v2288
        %v2545 = vadd.f32 %v2033, %v2289
        %v2546 = vadd.f32 %v2034, %v2290
        %v2547 = vadd.f32 %v2035, %v2291
        %v2548 = vadd.f32 %v2036, %v2292
        %v2549 = vadd.f32 %v2037, %v2293
        %v2550 = vadd.f32 %v2038, %v2294
        %v2551 = vadd.f32 %v2039, %v2295
        %v2552 = vadd.f32 %v2040, %v2296
        %v2553 = vadd.f32 %v2041, %v2297
        %v2554 = vadd.f32 %v2042, %v2298
        %v2555 = vadd.f32 %v2043, %v2299
        %v2556 = vadd.f32 %v2044, %v2300
        %v2557 = vadd.f32 %v2045, %v2301
        %v2558 = vadd.f32 %v2046, %v2302
        %v2559 = vadd.f32 %v2047, %v2303
        %v2560 = vadd.f32 %v2048, %v2304
        %v2561 = vadd.f32 %v2049, %v2305
        %v2562 = vadd.f32 %v2050, %v2306
        %v2563 = vadd.f32 %v2051, %v2307
        %v2564 = vadd.f32 %v2052, %v2308
        %v2565 = vadd.f32 %v2053, %v2309
        %v2566 = vadd.f32 %v2054, %v2310
        %v2567 = vadd.f32 %v2055, %v2311
        %v2568 = vadd.f32 %v2056, %v2312
        %v2569 = vadd.f32 %v2057, %v2313
        %v2570 = vadd.f32 %v2058, %v2314
        %v2571 = vadd.f32 %v2059, %v2315
        %v2572 = vadd.f32 %v2060, %v2316
        %v2573 = vadd.f32 %v2061, %v2317
        %v2574 = vadd.f32 %v2062, %v2318
        %v2575 = vadd.f32 %v2063, %v2319
        %v2576 = vadd.f32 %v2064, %v2320
        %v2577 = vadd.f32 %v2065, %v2321
        %v2578 = vadd.f32 %v2066, %v2322
        %v2579 = vadd.f32 %v2067, %v2323
        %v2580 = vadd.f32 %v2068, %v2324
        %v2581 = vadd.f32 %v2069, %v2325
        %v2582 = vadd.f32 %v2070, %v2326
        %v2583 = vadd.f32 %v2071, %v2327
        %v2584 = vadd.f32 %v2072, %v2328
        %v2585 = vadd.f32 %v2073, %v2329
        %v2586 = vadd.f32 %v2074, %v2330
        %v2587 = vadd.f32 %v2075, %v2331
        %v2588 = vadd.f32 %v2076, %v2332
        %v2589 = vadd.f32 %v2077, %v2333
        %v2590 = vadd.f32 %v2078, %v2334
        %v2591 = vadd.f32 %v2079, %v2335
        %v2592 = vadd.f32 %v2080, %v2336
        %v2593 = vadd.f32 %v2081, %v2337
        %v2594 = vadd.f32 %v2082, %v2338
        %v2595 = vadd.f32 %v2083, %v2339
        %v2596 = vadd.f32 %v2084, %v2340
        %v2597 = vadd.f32 %v2085, %v2341
        %v2598 = vadd.f32 %v2086, %v2342
        %v2599 = vadd.f32 %v2087, %v2343
        %v2600 = vadd.f32 %v2088, %v2344
        %v2601 = vadd.f32 %v2089, %v2345
        %v2602 = vadd.f32 %v2090, %v2346
        %v2603 = vadd.f32 %v2091, %v2347
        %v2604 = vadd.f32 %v2092, %v2348
        %v2605 = vadd.f32 %v2093, %v2349
        %v2606 = vadd.f32 %v2094, %v2350
        %v2607 = vadd.f32 %v2095, %v2351
        %v2608 = vadd.f32 %v2096, %v2352
        %v2609 = vadd.f32 %v2097, %v2353
        %v2610 = vadd.f32 %v2098, %v2354
        %v2611 = vadd.f32 %v2099, %v2355
        %v2612 = vadd.f32 %v2100, %v2356
        %v2613 = vadd.f32 %v2101, %v2357
        %v2614 = vadd.f32 %v2102, %v2358
        %v2615 = vadd.f32 %v2103, %v2359
        %v2616 = vadd.f32 %v2104, %v2360
        %v2617 = vadd.f32 %v2105, %v2361
        %v2618 = vadd.f32 %v2106, %v2362
        %v2619 = vadd.f32 %v2107, %v2363
        %v2620 = vadd.f32 %v2108, %v2364
        %v2621 = vadd.f32 %v2109, %v2365
        %v2622 = vadd.f32 %v2110, %v2366
        %v2623 = vadd.f32 %v2111, %v2367
        %v2624 = vadd.f32 %v2112, %v2368
        %v2625 = vadd.f32 %v2113, %v2369
        %v2626 = vadd.f32 %v2114, %v2370
        %v2627 = vadd.f32 %v2115, %v2371
        %v2628 = vadd.f32 %v2116, %v2372
        %v2629 = vadd.f32 %v2117, %v2373
        %v2630 = vadd.f32 %v2118, %v2374
        %2631 = vst [vmem:[%s316] sm:$0xff] %v2375
        %2632 = vst [vmem:[%s316 + $0x8] sm:$0xff] %v2376
        %2633 = vst [vmem:[%s316 + $0x10] sm:$0xff] %v2377
        %2634 = vst [vmem:[%s316 + $0x18] sm:$0xff] %v2378
        %2635 = vst [vmem:[%s316 + $0x20] sm:$0xff] %v2379
        %2636 = vst [vmem:[%s316 + $0x28] sm:$0xff] %v2380
        %2637 = vst [vmem:[%s316 + $0x30] sm:$0xff] %v2381
        %2638 = vst [vmem:[%s316 + $0x38] sm:$0xff] %v2382
        %2639 = vst [vmem:[%s316 + $0x40] sm:$0xff] %v2383
        %2640 = vst [vmem:[%s316 + $0x48] sm:$0xff] %v2384
        %2641 = vst [vmem:[%s316 + $0x50] sm:$0xff] %v2385
        %2642 = vst [vmem:[%s316 + $0x58] sm:$0xff] %v2386
        %2643 = vst [vmem:[%s316 + $0x60] sm:$0xff] %v2387
        %2644 = vst [vmem:[%s316 + $0x68] sm:$0xff] %v2388
        %2645 = vst [vmem:[%s316 + $0x70] sm:$0xff] %v2389
        %2646 = vst [vmem:[%s316 + $0x78] sm:$0xff] %v2390
        %2647 = vst [vmem:[%s316 + $0x80] sm:$0xff] %v2391
        %2648 = vst [vmem:[%s316 + $0x88] sm:$0xff] %v2392
        %2649 = vst [vmem:[%s316 + $0x90] sm:$0xff] %v2393
        %2650 = vst [vmem:[%s316 + $0x98] sm:$0xff] %v2394
        %2651 = vst [vmem:[%s316 + $0xa0] sm:$0xff] %v2395
        %2652 = vst [vmem:[%s316 + $0xa8] sm:$0xff] %v2396
        %2653 = vst [vmem:[%s316 + $0xb0] sm:$0xff] %v2397
        %2654 = vst [vmem:[%s316 + $0xb8] sm:$0xff] %v2398
        %2655 = vst [vmem:[%s316 + $0xc0] sm:$0xff] %v2399
        %2656 = vst [vmem:[%s316 + $0xc8] sm:$0xff] %v2400
        %2657 = vst [vmem:[%s316 + $0xd0] sm:$0xff] %v2401
        %2658 = vst [vmem:[%s316 + $0xd8] sm:$0xff] %v2402
        %2659 = vst [vmem:[%s316 + $0xe0] sm:$0xff] %v2403
        %2660 = vst [vmem:[%s316 + $0xe8] sm:$0xff] %v2404
        %2661 = vst [vmem:[%s316 + $0xf0] sm:$0xff] %v2405
        %2662 = vst [vmem:[%s316 + $0xf8] sm:$0xff] %v2406
        %2663 = vst [vmem:[%s316 + $0x100] sm:$0xff] %v2407
        %2664 = vst [vmem:[%s316 + $0x108] sm:$0xff] %v2408
        %2665 = vst [vmem:[%s316 + $0x110] sm:$0xff] %v2409
        %2666 = vst [vmem:[%s316 + $0x118] sm:$0xff] %v2410
        %2667 = vst [vmem:[%s316 + $0x120] sm:$0xff] %v2411
        %2668 = vst [vmem:[%s316 + $0x128] sm:$0xff] %v2412
        %2669 = vst [vmem:[%s316 + $0x130] sm:$0xff] %v2413
        %2670 = vst [vmem:[%s316 + $0x138] sm:$0xff] %v2414
        %2671 = vst [vmem:[%s316 + $0x140] sm:$0xff] %v2415
        %2672 = vst [vmem:[%s316 + $0x148] sm:$0xff] %v2416
        %2673 = vst [vmem:[%s316 + $0x150] sm:$0xff] %v2417
        %2674 = vst [vmem:[%s316 + $0x158] sm:$0xff] %v2418
        %2675 = vst [vmem:[%s316 + $0x160] sm:$0xff] %v2419
        %2676 = vst [vmem:[%s316 + $0x168] sm:$0xff] %v2420
        %2677 = vst [vmem:[%s316 + $0x170] sm:$0xff] %v2421
        %2678 = vst [vmem:[%s316 + $0x178] sm:$0xff] %v2422
        %2679 = vst [vmem:[%s316 + $0x180] sm:$0xff] %v2423
        %2680 = vst [vmem:[%s316 + $0x188] sm:$0xff] %v2424
        %2681 = vst [vmem:[%s316 + $0x190] sm:$0xff] %v2425
        %2682 = vst [vmem:[%s316 + $0x198] sm:$0xff] %v2426
        %2683 = vst [vmem:[%s316 + $0x1a0] sm:$0xff] %v2427
        %2684 = vst [vmem:[%s316 + $0x1a8] sm:$0xff] %v2428
        %2685 = vst [vmem:[%s316 + $0x1b0] sm:$0xff] %v2429
        %2686 = vst [vmem:[%s316 + $0x1b8] sm:$0xff] %v2430
        %2687 = vst [vmem:[%s316 + $0x1c0] sm:$0xff] %v2431
        %2688 = vst [vmem:[%s316 + $0x1c8] sm:$0xff] %v2432
        %2689 = vst [vmem:[%s316 + $0x1d0] sm:$0xff] %v2433
        %2690 = vst [vmem:[%s316 + $0x1d8] sm:$0xff] %v2434
        %2691 = vst [vmem:[%s316 + $0x1e0] sm:$0xff] %v2435
        %2692 = vst [vmem:[%s316 + $0x1e8] sm:$0xff] %v2436
        %2693 = vst [vmem:[%s316 + $0x1f0] sm:$0xff] %v2437
        %2694 = vst [vmem:[%s316 + $0x1f8] sm:$0xff] %v2438
        %2695 = vst [vmem:[%s316 + $0x200] sm:$0xff] %v2439
        %2696 = vst [vmem:[%s316 + $0x208] sm:$0xff] %v2440
        %2697 = vst [vmem:[%s316 + $0x210] sm:$0xff] %v2441
        %2698 = vst [vmem:[%s316 + $0x218] sm:$0xff] %v2442
        %2699 = vst [vmem:[%s316 + $0x220] sm:$0xff] %v2443
        %2700 = vst [vmem:[%s316 + $0x228] sm:$0xff] %v2444
        %2701 = vst [vmem:[%s316 + $0x230] sm:$0xff] %v2445
        %2702 = vst [vmem:[%s316 + $0x238] sm:$0xff] %v2446
        %2703 = vst [vmem:[%s316 + $0x240] sm:$0xff] %v2447
        %2704 = vst [vmem:[%s316 + $0x248] sm:$0xff] %v2448
        %2705 = vst [vmem:[%s316 + $0x250] sm:$0xff] %v2449
        %2706 = vst [vmem:[%s316 + $0x258] sm:$0xff] %v2450
        %2707 = vst [vmem:[%s316 + $0x260] sm:$0xff] %v2451
        %2708 = vst [vmem:[%s316 + $0x268] sm:$0xff] %v2452
        %2709 = vst [vmem:[%s316 + $0x270] sm:$0xff] %v2453
        %2710 = vst [vmem:[%s316 + $0x278] sm:$0xff] %v2454
        %2711 = vst [vmem:[%s316 + $0x280] sm:$0xff] %v2455
        %2712 = vst [vmem:[%s316 + $0x288] sm:$0xff] %v2456
        %2713 = vst [vmem:[%s316 + $0x290] sm:$0xff] %v2457
        %2714 = vst [vmem:[%s316 + $0x298] sm:$0xff] %v2458
        %2715 = vst [vmem:[%s316 + $0x2a0] sm:$0xff] %v2459
        %2716 = vst [vmem:[%s316 + $0x2a8] sm:$0xff] %v2460
        %2717 = vst [vmem:[%s316 + $0x2b0] sm:$0xff] %v2461
        %2718 = vst [vmem:[%s316 + $0x2b8] sm:$0xff] %v2462
        %2719 = vst [vmem:[%s316 + $0x2c0] sm:$0xff] %v2463
        %2720 = vst [vmem:[%s316 + $0x2c8] sm:$0xff] %v2464
        %2721 = vst [vmem:[%s316 + $0x2d0] sm:$0xff] %v2465
        %2722 = vst [vmem:[%s316 + $0x2d8] sm:$0xff] %v2466
        %2723 = vst [vmem:[%s316 + $0x2e0] sm:$0xff] %v2467
        %2724 = vst [vmem:[%s316 + $0x2e8] sm:$0xff] %v2468
        %2725 = vst [vmem:[%s316 + $0x2f0] sm:$0xff] %v2469
        %2726 = vst [vmem:[%s316 + $0x2f8] sm:$0xff] %v2470
        %2727 = vst [vmem:[%s316 + $0x300] sm:$0xff] %v2471
        %2728 = vst [vmem:[%s316 + $0x308] sm:$0xff] %v2472
        %2729 = vst [vmem:[%s316 + $0x310] sm:$0xff] %v2473
        %2730 = vst [vmem:[%s316 + $0x318] sm:$0xff] %v2474
        %2731 = vst [vmem:[%s316 + $0x320] sm:$0xff] %v2475
        %2732 = vst [vmem:[%s316 + $0x328] sm:$0xff] %v2476
        %2733 = vst [vmem:[%s316 + $0x330] sm:$0xff] %v2477
        %2734 = vst [vmem:[%s316 + $0x338] sm:$0xff] %v2478
        %2735 = vst [vmem:[%s316 + $0x340] sm:$0xff] %v2479
        %2736 = vst [vmem:[%s316 + $0x348] sm:$0xff] %v2480
        %2737 = vst [vmem:[%s316 + $0x350] sm:$0xff] %v2481
        %2738 = vst [vmem:[%s316 + $0x358] sm:$0xff] %v2482
        %2739 = vst [vmem:[%s316 + $0x360] sm:$0xff] %v2483
        %2740 = vst [vmem:[%s316 + $0x368] sm:$0xff] %v2484
        %2741 = vst [vmem:[%s316 + $0x370] sm:$0xff] %v2485
        %2742 = vst [vmem:[%s316 + $0x378] sm:$0xff] %v2486
        %2743 = vst [vmem:[%s316 + $0x380] sm:$0xff] %v2487
        %2744 = vst [vmem:[%s316 + $0x388] sm:$0xff] %v2488
        %2745 = vst [vmem:[%s316 + $0x390] sm:$0xff] %v2489
        %2746 = vst [vmem:[%s316 + $0x398] sm:$0xff] %v2490
        %2747 = vst [vmem:[%s316 + $0x3a0] sm:$0xff] %v2491
        %2748 = vst [vmem:[%s316 + $0x3a8] sm:$0xff] %v2492
        %2749 = vst [vmem:[%s316 + $0x3b0] sm:$0xff] %v2493
        %2750 = vst [vmem:[%s316 + $0x3b8] sm:$0xff] %v2494
        %2751 = vst [vmem:[%s316 + $0x3c0] sm:$0xff] %v2495
        %2752 = vst [vmem:[%s316 + $0x3c8] sm:$0xff] %v2496
        %2753 = vst [vmem:[%s316 + $0x3d0] sm:$0xff] %v2497
        %2754 = vst [vmem:[%s316 + $0x3d8] sm:$0xff] %v2498
        %2755 = vst [vmem:[%s316 + $0x3e0] sm:$0xff] %v2499
        %2756 = vst [vmem:[%s316 + $0x3e8] sm:$0xff] %v2500
        %2757 = vst [vmem:[%s316 + $0x3f0] sm:$0xff] %v2501
        %2758 = vst [vmem:[%s316 + $0x3f8] sm:$0xff] %v2502
        %2759 = vst [vmem:[%s316 + $0x400] sm:$0xff] %v2503
        %2760 = vst [vmem:[%s316 + $0x408] sm:$0xff] %v2504
        %2761 = vst [vmem:[%s316 + $0x410] sm:$0xff] %v2505
        %2762 = vst [vmem:[%s316 + $0x418] sm:$0xff] %v2506
        %2763 = vst [vmem:[%s316 + $0x420] sm:$0xff] %v2507
        %2764 = vst [vmem:[%s316 + $0x428] sm:$0xff] %v2508
        %2765 = vst [vmem:[%s316 + $0x430] sm:$0xff] %v2509
        %2766 = vst [vmem:[%s316 + $0x438] sm:$0xff] %v2510
        %2767 = vst [vmem:[%s316 + $0x440] sm:$0xff] %v2511
        %2768 = vst [vmem:[%s316 + $0x448] sm:$0xff] %v2512
        %2769 = vst [vmem:[%s316 + $0x450] sm:$0xff] %v2513
        %2770 = vst [vmem:[%s316 + $0x458] sm:$0xff] %v2514
        %2771 = vst [vmem:[%s316 + $0x460] sm:$0xff] %v2515
        %2772 = vst [vmem:[%s316 + $0x468] sm:$0xff] %v2516
        %2773 = vst [vmem:[%s316 + $0x470] sm:$0xff] %v2517
        %2774 = vst [vmem:[%s316 + $0x478] sm:$0xff] %v2518
        %2775 = vst [vmem:[%s316 + $0x480] sm:$0xff] %v2519
        %2776 = vst [vmem:[%s316 + $0x488] sm:$0xff] %v2520
        %2777 = vst [vmem:[%s316 + $0x490] sm:$0xff] %v2521
        %2778 = vst [vmem:[%s316 + $0x498] sm:$0xff] %v2522
        %2779 = vst [vmem:[%s316 + $0x4a0] sm:$0xff] %v2523
        %2780 = vst [vmem:[%s316 + $0x4a8] sm:$0xff] %v2524
        %2781 = vst [vmem:[%s316 + $0x4b0] sm:$0xff] %v2525
        %2782 = vst [vmem:[%s316 + $0x4b8] sm:$0xff] %v2526
        %2783 = vst [vmem:[%s316 + $0x4c0] sm:$0xff] %v2527
        %2784 = vst [vmem:[%s316 + $0x4c8] sm:$0xff] %v2528
        %2785 = vst [vmem:[%s316 + $0x4d0] sm:$0xff] %v2529
        %2786 = vst [vmem:[%s316 + $0x4d8] sm:$0xff] %v2530
        %2787 = vst [vmem:[%s316 + $0x4e0] sm:$0xff] %v2531
        %2788 = vst [vmem:[%s316 + $0x4e8] sm:$0xff] %v2532
        %2789 = vst [vmem:[%s316 + $0x4f0] sm:$0xff] %v2533
        %2790 = vst [vmem:[%s316 + $0x4f8] sm:$0xff] %v2534
        %2791 = vst [vmem:[%s316 + $0x500] sm:$0xff] %v2535
        %2792 = vst [vmem:[%s316 + $0x508] sm:$0xff] %v2536
        %2793 = vst [vmem:[%s316 + $0x510] sm:$0xff] %v2537
        %2794 = vst [vmem:[%s316 + $0x518] sm:$0xff] %v2538
        %2795 = vst [vmem:[%s316 + $0x520] sm:$0xff] %v2539
        %2796 = vst [vmem:[%s316 + $0x528] sm:$0xff] %v2540
        %2797 = vst [vmem:[%s316 + $0x530] sm:$0xff] %v2541
        %2798 = vst [vmem:[%s316 + $0x538] sm:$0xff] %v2542
        %2799 = vst [vmem:[%s316 + $0x540] sm:$0xff] %v2543
        %2800 = vst [vmem:[%s316 + $0x548] sm:$0xff] %v2544
        %2801 = vst [vmem:[%s316 + $0x550] sm:$0xff] %v2545
        %2802 = vst [vmem:[%s316 + $0x558] sm:$0xff] %v2546
        %2803 = vst [vmem:[%s316 + $0x560] sm:$0xff] %v2547
        %2804 = vst [vmem:[%s316 + $0x568] sm:$0xff] %v2548
        %2805 = vst [vmem:[%s316 + $0x570] sm:$0xff] %v2549
        %2806 = vst [vmem:[%s316 + $0x578] sm:$0xff] %v2550
        %2807 = vst [vmem:[%s316 + $0x580] sm:$0xff] %v2551
        %2808 = vst [vmem:[%s316 + $0x588] sm:$0xff] %v2552
        %2809 = vst [vmem:[%s316 + $0x590] sm:$0xff] %v2553
        %2810 = vst [vmem:[%s316 + $0x598] sm:$0xff] %v2554
        %2811 = vst [vmem:[%s316 + $0x5a0] sm:$0xff] %v2555
        %2812 = vst [vmem:[%s316 + $0x5a8] sm:$0xff] %v2556
        %2813 = vst [vmem:[%s316 + $0x5b0] sm:$0xff] %v2557
        %2814 = vst [vmem:[%s316 + $0x5b8] sm:$0xff] %v2558
        %2815 = vst [vmem:[%s316 + $0x5c0] sm:$0xff] %v2559
        %2816 = vst [vmem:[%s316 + $0x5c8] sm:$0xff] %v2560
        %2817 = vst [vmem:[%s316 + $0x5d0] sm:$0xff] %v2561
        %2818 = vst [vmem:[%s316 + $0x5d8] sm:$0xff] %v2562
        %2819 = vst [vmem:[%s316 + $0x5e0] sm:$0xff] %v2563
        %2820 = vst [vmem:[%s316 + $0x5e8] sm:$0xff] %v2564
        %2821 = vst [vmem:[%s316 + $0x5f0] sm:$0xff] %v2565
        %2822 = vst [vmem:[%s316 + $0x5f8] sm:$0xff] %v2566
        %2823 = vst [vmem:[%s316 + $0x600] sm:$0xff] %v2567
        %2824 = vst [vmem:[%s316 + $0x608] sm:$0xff] %v2568
        %2825 = vst [vmem:[%s316 + $0x610] sm:$0xff] %v2569
        %2826 = vst [vmem:[%s316 + $0x618] sm:$0xff] %v2570
        %2827 = vst [vmem:[%s316 + $0x620] sm:$0xff] %v2571
        %2828 = vst [vmem:[%s316 + $0x628] sm:$0xff] %v2572
        %2829 = vst [vmem:[%s316 + $0x630] sm:$0xff] %v2573
        %2830 = vst [vmem:[%s316 + $0x638] sm:$0xff] %v2574
        %2831 = vst [vmem:[%s316 + $0x640] sm:$0xff] %v2575
        %2832 = vst [vmem:[%s316 + $0x648] sm:$0xff] %v2576
        %2833 = vst [vmem:[%s316 + $0x650] sm:$0xff] %v2577
        %2834 = vst [vmem:[%s316 + $0x658] sm:$0xff] %v2578
        %2835 = vst [vmem:[%s316 + $0x660] sm:$0xff] %v2579
        %2836 = vst [vmem:[%s316 + $0x668] sm:$0xff] %v2580
        %2837 = vst [vmem:[%s316 + $0x670] sm:$0xff] %v2581
        %2838 = vst [vmem:[%s316 + $0x678] sm:$0xff] %v2582
        %2839 = vst [vmem:[%s316 + $0x680] sm:$0xff] %v2583
        %2840 = vst [vmem:[%s316 + $0x688] sm:$0xff] %v2584
        %2841 = vst [vmem:[%s316 + $0x690] sm:$0xff] %v2585
        %2842 = vst [vmem:[%s316 + $0x698] sm:$0xff] %v2586
        %2843 = vst [vmem:[%s316 + $0x6a0] sm:$0xff] %v2587
        %2844 = vst [vmem:[%s316 + $0x6a8] sm:$0xff] %v2588
        %2845 = vst [vmem:[%s316 + $0x6b0] sm:$0xff] %v2589
        %2846 = vst [vmem:[%s316 + $0x6b8] sm:$0xff] %v2590
        %2847 = vst [vmem:[%s316 + $0x6c0] sm:$0xff] %v2591
        %2848 = vst [vmem:[%s316 + $0x6c8] sm:$0xff] %v2592
        %2849 = vst [vmem:[%s316 + $0x6d0] sm:$0xff] %v2593
        %2850 = vst [vmem:[%s316 + $0x6d8] sm:$0xff] %v2594
        %2851 = vst [vmem:[%s316 + $0x6e0] sm:$0xff] %v2595
        %2852 = vst [vmem:[%s316 + $0x6e8] sm:$0xff] %v2596
        %2853 = vst [vmem:[%s316 + $0x6f0] sm:$0xff] %v2597
        %2854 = vst [vmem:[%s316 + $0x6f8] sm:$0xff] %v2598
        %2855 = vst [vmem:[%s316 + $0x700] sm:$0xff] %v2599
        %2856 = vst [vmem:[%s316 + $0x708] sm:$0xff] %v2600
        %2857 = vst [vmem:[%s316 + $0x710] sm:$0xff] %v2601
        %2858 = vst [vmem:[%s316 + $0x718] sm:$0xff] %v2602
        %2859 = vst [vmem:[%s316 + $0x720] sm:$0xff] %v2603
        %2860 = vst [vmem:[%s316 + $0x728] sm:$0xff] %v2604
        %2861 = vst [vmem:[%s316 + $0x730] sm:$0xff] %v2605
        %2862 = vst [vmem:[%s316 + $0x738] sm:$0xff] %v2606
        %2863 = vst [vmem:[%s316 + $0x740] sm:$0xff] %v2607
        %2864 = vst [vmem:[%s316 + $0x748] sm:$0xff] %v2608
        %2865 = vst [vmem:[%s316 + $0x750] sm:$0xff] %v2609
        %2866 = vst [vmem:[%s316 + $0x758] sm:$0xff] %v2610
        %2867 = vst [vmem:[%s316 + $0x760] sm:$0xff] %v2611
        %2868 = vst [vmem:[%s316 + $0x768] sm:$0xff] %v2612
        %2869 = vst [vmem:[%s316 + $0x770] sm:$0xff] %v2613
        %2870 = vst [vmem:[%s316 + $0x778] sm:$0xff] %v2614
        %2871 = vst [vmem:[%s316 + $0x780] sm:$0xff] %v2615
        %2872 = vst [vmem:[%s316 + $0x788] sm:$0xff] %v2616
        %2873 = vst [vmem:[%s316 + $0x790] sm:$0xff] %v2617
        %2874 = vst [vmem:[%s316 + $0x798] sm:$0xff] %v2618
        %2875 = vst [vmem:[%s316 + $0x7a0] sm:$0xff] %v2619
        %2876 = vst [vmem:[%s316 + $0x7a8] sm:$0xff] %v2620
        %2877 = vst [vmem:[%s316 + $0x7b0] sm:$0xff] %v2621
        %2878 = vst [vmem:[%s316 + $0x7b8] sm:$0xff] %v2622
        %2879 = vst [vmem:[%s316 + $0x7c0] sm:$0xff] %v2623
        %2880 = vst [vmem:[%s316 + $0x7c8] sm:$0xff] %v2624
        %2881 = vst [vmem:[%s316 + $0x7d0] sm:$0xff] %v2625
        %2882 = vst [vmem:[%s316 + $0x7d8] sm:$0xff] %v2626
        %2883 = vst [vmem:[%s316 + $0x7e0] sm:$0xff] %v2627
        %2884 = vst [vmem:[%s316 + $0x7e8] sm:$0xff] %v2628
        %2885 = vst [vmem:[%s316 + $0x7f0] sm:$0xff] %v2629
        %2886 = vst [vmem:[%s316 + $0x7f8] sm:$0xff] %v2630
        %s2887 = sand.u32 %s132, 1
        %s2888 = scalar_lea.sflag [#allocation4], %s2887
        %s2889 = sand.u32 %s132, 1
        %s2890 = smul.addr %s2889, 2048
        %s2891 = scalar_lea.vmem [#allocation10], %s2890
        %s2892 = sand.u32 %s158, 1
        %s2893 = scalar_lea.sflag [#allocation12], %s2892
        %s2894 = sand.u32 %s158, 1
        %s2895 = smul.addr %s2894, 2048
        %s2896 = scalar_lea.vmem [#allocation11], %s2895
        // Predicated region
        $region53: #{tpu_custom_call.1} parent=35 // pred_check
          %p2897 = pneg %p142
        $region54: #{tpu_custom_call.1} parent=35 // pred_check_branch
          %2899 = sbr.rel (%p2897) target = $region56
        $region55: #{tpu_custom_call.1} parent=35 // pred_region
          %s2900 = smul.u32 256, %s30
          %2902 = vsyncadd %s2888, 0
          %s2903 = smul.addr %s2900, 8
          %s2904 = scalar_lea.hbm %s4, %s2903
          %s2905 = sshll.u32 %s2891, 4
          %s2906 = int_to_ptr.vmem [resolvable:$true] %s2905
          %s2907 = sshll.u32 %s2904, 4
          %s2908 = int_to_ptr.hbm [resolvable:$true] %s2907
          %2913 = dma.vmem_to_hbm [thread:$0]  %s2906, 32768, %s2908, %s2888, 128, 128, 8
        $region56: #{tpu_custom_call.1} parent=35 // pred_fallthru
          _
        // Predicated region
        $region57: #{tpu_custom_call.1} parent=35 // pred_check
          %p2914 = pneg %p168
        $region58: #{tpu_custom_call.1} parent=35 // pred_check_branch
          %2916 = sbr.rel (%p2914) target = $region60
        $region59: #{tpu_custom_call.1} parent=35 // pred_region
          %s2917 = smul.u32 256, %s30
          %2919 = vsyncadd %s2893, 0
          %s2920 = smul.addr %s2917, 8
          %s2921 = scalar_lea.hbm %s5, %s2920
          %s2922 = sshll.u32 %s2896, 4
          %s2923 = int_to_ptr.vmem [resolvable:$true] %s2922
          %s2924 = sshll.u32 %s2921, 4
          %s2925 = int_to_ptr.hbm [resolvable:$true] %s2924
          %2930 = dma.vmem_to_hbm [thread:$0]  %s2923, 32768, %s2925, %s2893, 128, 128, 8
        $region60: #{tpu_custom_call.1} parent=35 // pred_fallthru
          _
      $region36: #{tpu_custom_call.1} parent=5 // pred_fallthru
        _
      %p2931 = scmp.le.s32.totalorder 2, %s25
      // Predicated region
      $region61: #{tpu_custom_call.1} parent=5 // pred_check
        %p2932 = pneg %p2931
      $region62: #{tpu_custom_call.1} parent=5 // pred_check_branch
        %2934 = sbr.rel (%p2932) target = $region64
      $region63: #{tpu_custom_call.1} parent=5 // pred_region
        %s2935 = ssub.s32 %s25, 2
        // Predicated region
        $region65: #{tpu_custom_call.1} parent=63 // pred_check
          %p2936 = pneg %p148
        $region66: #{tpu_custom_call.1} parent=63 // pred_check_branch
          %2938 = sbr.rel (%p2936) target = $region68
        $region67: #{tpu_custom_call.1} parent=63 // pred_region
          %s2939 = sand.u32 %s133, 1
          %s2940 = scalar_lea.sflag [#allocation4], %s2939
          %s2941 = sand.u32 %s133, 1
          %s2942 = smul.addr %s2941, 2048
          %s2943 = scalar_lea.vmem [#allocation10], %s2942
          %2945 = dma.done %s2940, 32768
        $region68: #{tpu_custom_call.1} parent=63 // pred_fallthru
          _
        // Predicated region
        $region69: #{tpu_custom_call.1} parent=63 // pred_check
          %p2946 = pneg %p174
        $region70: #{tpu_custom_call.1} parent=63 // pred_check_branch
          %2948 = sbr.rel (%p2946) target = $region72
        $region71: #{tpu_custom_call.1} parent=63 // pred_region
          %s2949 = sand.u32 %s159, 1
          %s2950 = scalar_lea.sflag [#allocation12], %s2949
          %s2951 = sand.u32 %s159, 1
          %s2952 = smul.addr %s2951, 2048
          %s2953 = scalar_lea.vmem [#allocation11], %s2952
          %2955 = dma.done %s2950, 32768
        $region72: #{tpu_custom_call.1} parent=63 // pred_fallthru
          _
      $region64: #{tpu_custom_call.1} parent=5 // pred_fallthru
        _
    $region6: #{tpu_custom_call.1} parent=1 // loop_footer
      %s29 = sadd.s32 1, %s25
    $region7: #{tpu_custom_call.1} parent=1 // loop_footer_branch
      %24 = sbr.rel target = $region3
    $region8: #{tpu_custom_call.1} parent=1 // loop_exit
      _
    %2956 = vsyncpa [#allocation3], 1
    %s2957 = scalar_lea.sflag [#allocation3], 1
    %2958 = vsyncpa %s2957, 1
    %2959 = vsyncpa [#allocation6], 1
    %s2960 = scalar_lea.sflag [#allocation6], 1
    %2961 = vsyncpa %s2960, 1
    %2962 = vsyncpa [#allocation9], 1
    %2963 = vsyncpa [#allocation4], 1
    %s2964 = scalar_lea.sflag [#allocation4], 1
    %2965 = vsyncpa %s2964, 1
    %2966 = vsyncpa [#allocation12], 1
    %s2967 = scalar_lea.sflag [#allocation12], 1
    %2968 = vsyncpa %s2967, 1

</llo_original>
